<compile_context>
chip_gen: v7x
topology: tpu7x:2x2x1
jax: 0.10.0
libtpu: 0.0.40
codegen_flags: <defaults>
</compile_context>

<pallas_src>
import functools

import jax
import jax.numpy as jnp
from jax.experimental import pallas as pl
from jax.experimental.pallas import tpu as pltpu

_BN_EPS = 1e-5


# ---------------------------------------------------------------------------
# Fused Pallas kernel for the whole downsample unit
# ---------------------------------------------------------------------------

def _downsample_unit_kernel(xm_ref, xh_ref, w_pw1_ref, b_pw1_ref,
                            w_ldw_ref, w_rdw_ref, w_fin_ref, b_fin_ref,
                            o_ref, *, ht, wo, c, cout):
    """One (batch, row-tile) step of the fused ShuffleNetV2 downsample unit.

    Column-folded layout: channel dim 2c holds channels of even input columns
    in [0:c] and of odd input columns in [c:2c], so every 3x3/stride-2 column
    tap is a lane-aligned slice (plus one structurally-zero shifted column).

    xm_ref : (1, 2*ht, wo, 2c)  input rows [2*ht*t, 2*ht*(t+1))           (bf16)
    xh_ref : (1, 1,    wo, 2c)  top halo row 2*ht*t - 1 (clamped at t=0)  (bf16)
    """
    t = pl.program_id(1)
    c2 = 2 * c

    xm = xm_ref[0]                                    # (2*ht, wo, 2c)
    xh = xh_ref[0]                                    # (1, wo, 2c)
    # Row above the image (t == 0): both branches must see zeros there
    # (left: zero-pad of x; right: the depthwise conv zero-pads its input r1).
    xh = jnp.where(t > 0, xh, jnp.zeros_like(xh))

    # ---- right branch pw1 (+BN+ReLU), computed ONCE per window ---------------
    # Block-diagonal (2c,2c) weight keeps the result in the folded layout and
    # gives K=N=2c matmul shapes (good for v6e/v7x; on v5e two c-wide matmuls
    # on the even/odd halves would avoid the extra 128x128 MXU tiles).
    w_pw1 = w_pw1_ref[...]                            # (2c, 2c) bf16
    b_pw1 = b_pw1_ref[...]                            # (1, 2c)  f32
    r1m = jnp.dot(xm.reshape(2 * ht * wo, c2), w_pw1,
                  preferred_element_type=jnp.float32)
    r1m = jnp.maximum(r1m + b_pw1, 0.0).astype(jnp.bfloat16).reshape(2 * ht, wo, c2)
    r1h = jnp.dot(xh.reshape(wo, c2), w_pw1, preferred_element_type=jnp.float32)
    r1h = jnp.maximum(r1h + b_pw1, 0.0)
    r1h = jnp.where(t > 0, r1h, jnp.zeros_like(r1h))  # dw zero-pad above the image
    r1h = r1h.astype(jnp.bfloat16).reshape(1, wo, c2)

    # ---- row slabs for the 3 vertical taps -----------------------------------
    # window row 2*rho + ki == input row 2*(row_tile_start + rho) - 1 + ki
    pairs = xm.reshape(ht, 2, wo, c2)                 # [:,0] even rows, [:,1] odd
    r1p = r1m.reshape(ht, 2, wo, c2)
    if ht > 1:
        x_slab0 = jnp.concatenate([xh, pairs[:ht - 1, 1]], axis=0)
        r_slab0 = jnp.concatenate([r1h, r1p[:ht - 1, 1]], axis=0)
    else:
        x_slab0, r_slab0 = xh, r1h
    x_slabs = (x_slab0, pairs[:, 0], pairs[:, 1])     # ki = 0, 1, 2
    r_slabs = (r_slab0, r1p[:, 0], r1p[:, 1])

    w_ldw = w_ldw_ref[...]                            # (9, c) f32, BN folded
    w_rdw = w_rdw_ref[...]                            # (9, c) f32, BN folded
    zcol = jnp.zeros((ht, 1, c), jnp.bfloat16)        # left-pad column (kj=0, col 0)

    acc_l = jnp.zeros((ht, wo, c), jnp.float32)       # left  dw3x3(x)
    acc_r = jnp.zeros((ht, wo, c), jnp.float32)       # right dw3x3(r1)
    for ki in range(3):
        xs, rs = x_slabs[ki], r_slabs[ki]
        # kj = 0 -> previous odd column (shift right by one, zero at col 0);
        # kj = 1 -> even half; kj = 2 -> odd half (lane-aligned slices).
        x_taps = (jnp.concatenate([zcol, xs[:, :wo - 1, c:]], axis=1),
                  xs[..., :c], xs[..., c:])
        r_taps = (jnp.concatenate([zcol, rs[:, :wo - 1, c:]], axis=1),
                  rs[..., :c], rs[..., c:])
        for kj in range(3):
            k = 3 * ki + kj
            acc_l = acc_l + x_taps[kj] * w_ldw[k].reshape(1, 1, c)
            acc_r = acc_r + r_taps[kj] * w_rdw[k].reshape(1, 1, c)

    # ---- fused final 1x1 convs (+BN+ReLU) -------------------------------------
    # Left branch occupies rows [0:c] of w_fin, right rows [c:2c]; concat +
    # channel shuffle are pre-folded into interleaved output columns, and the
    # dw(+BN) biases are pre-folded into b_fin -> single K=2c matmul, one
    # lane-dense store.
    acc = jnp.concatenate([acc_l.astype(jnp.bfloat16), acc_r.astype(jnp.bfloat16)],
                          axis=-1).reshape(ht * wo, c2)
    y = jnp.dot(acc, w_fin_ref[...], preferred_element_type=jnp.float32)
    y = jnp.maximum(y + b_fin_ref[...], 0.0)
    o_ref[0] = y.reshape(ht, wo, cout).astype(o_ref.dtype)


def _pick_ht(Ho, Wo, C):
    """Largest-enough row tile: ht | Ho, M = ht*Wo >= 256 if possible, VMEM-capped."""
    divs = [d for d in range(1, Ho + 1) if Ho % d == 0]
    target = max(1, -(-256 // Wo))
    ht = next((d for d in divs if d >= target), divs[-1])

    def step_bytes(d):  # bf16 window (+dbl buf) + bf16 r1 + f32 temps, rough
        return (2 * d + 1) * Wo * 2 * C * 12

    while step_bytes(ht) > 8 * (1 << 20) and divs.index(ht) > 0:
        ht = divs[divs.index(ht) - 1]
    return ht


def shufflenet_v2_downsample_unit_nhwc(params, x_nhwc):
    """ShuffleNetV2 downsample unit forward, NHWC in / NHWC out (no extra transposes)."""
    B, H, W, C = x_nhwc.shape
    assert H % 2 == 0 and W % 2 == 0, "spatial dims must be even"
    Ho, Wo = H // 2, W // 2
    Cout = params['w_fin'].shape[1]
    ht = _pick_ht(Ho, Wo, C)
    T = Ho // ht

    # Fold column parity into channels (free, row-major-compatible reshape) and
    # cast activations to bf16 (halves DMA + matmul operand width).  No padding
    # and no 9-tap tensor are ever materialised in HBM.
    xf = x_nhwc.astype(jnp.bfloat16).reshape(B, H, Wo, 2 * C)

    kernel = functools.partial(_downsample_unit_kernel, ht=ht, wo=Wo, c=C, cout=Cout)

    def main_map(b, t):
        return (b, t, 0, 0)

    def halo_map(b, t):
        # row just above the tile; clamped at t == 0 (its contribution is zeroed
        # inside the kernel).
        return (b, jnp.maximum(2 * ht * t - 1, 0), 0, 0)

    def const_map(b, t):
        return (0, 0)

    out = pl.pallas_call(
        kernel,
        out_shape=jax.ShapeDtypeStruct((B, Ho, Wo, Cout), jnp.float32),
        grid=(B, T),
        in_specs=[
            pl.BlockSpec((1, 2 * ht, Wo, 2 * C), main_map),     # main row window
            pl.BlockSpec((1, 1, Wo, 2 * C), halo_map),          # one-row top halo
            pl.BlockSpec((2 * C, 2 * C), const_map),            # block-diag pw1 (bf16)
            pl.BlockSpec((1, 2 * C), const_map),                # pw1 bias (f32)
            pl.BlockSpec((9, C), const_map),                    # left dw weights
            pl.BlockSpec((9, C), const_map),                    # right dw weights
            pl.BlockSpec((2 * C, Cout), const_map),             # fused final weights (bf16)
            pl.BlockSpec((1, Cout), const_map),                 # fused final bias (f32)
        ],
        out_specs=pl.BlockSpec((1, ht, Wo, Cout), lambda b, t: (b, t, 0, 0)),
        compiler_params=pltpu.CompilerParams(
            dimension_semantics=("parallel", "parallel"),
            vmem_limit_bytes=32 * 1024 * 1024),
    )(xf, xf, params['w_pw1'], params['b_pw1'], params['w_ldw'], params['w_rdw'],
      params['w_fin'], params['b_fin'])
    return out


def shufflenet_v2_downsample_unit(params, x_nchw):
    """NCHW in / NCHW out wrapper (matches the PyTorch module interface)."""
    x = jnp.transpose(x_nchw, (0, 2, 3, 1)).astype(jnp.float32)
    y = shufflenet_v2_downsample_unit_nhwc(params, x)
    return jnp.transpose(y, (0, 3, 1, 2))


# ---------------------------------------------------------------------------
# Parameter construction (raw params + kernel params with everything folded)
# ---------------------------------------------------------------------------

def init_downsample_params(key, in_channels, out_channels):
    C = in_channels
    half = out_channels // 2
    keys = iter(jax.random.split(key, 32))
    nk = lambda: next(keys)

    def rnd(shape, scale):
        return scale * jax.random.normal(nk(), shape, jnp.float32)

    def bn_params(c):
        gamma = 1.0 + 0.1 * rnd((c,), 1.0)
        beta = rnd((c,), 0.05)
        return gamma, beta

    def conv1x1(cin, c_out):
        return rnd((cin, c_out), 1.0) / jnp.sqrt(cin), rnd((c_out,), 0.05)

    def dwconv(c):
        return rnd((3, 3, c), 1.0) / 3.0, rnd((c,), 0.05)

    raw = {}
    raw['ldw_w'], raw['ldw_b'] = dwconv(C);          raw['ldw_bn'] = bn_params(C)
    raw['lpw_w'], raw['lpw_b'] = conv1x1(C, half);   raw['lpw_bn'] = bn_params(half)
    raw['rpw1_w'], raw['rpw1_b'] = conv1x1(C, C);    raw['rpw1_bn'] = bn_params(C)
    raw['rdw_w'], raw['rdw_b'] = dwconv(C);          raw['rdw_bn'] = bn_params(C)
    raw['rpw2_w'], raw['rpw2_b'] = conv1x1(C, half); raw['rpw2_bn'] = bn_params(half)

    def scale(gamma):  # eval-mode BN of a fresh module: running_mean=0, running_var=1
        return gamma / jnp.sqrt(1.0 + _BN_EPS)

    # right pw1: BN scale folded; block-diagonal weight acts on the column-folded
    # layout (even/odd input columns share the same 1x1 weights).
    s1 = scale(raw['rpw1_bn'][0])
    w1 = raw['rpw1_w'] * s1[None, :]
    b1 = raw['rpw1_bn'][1] + s1 * raw['rpw1_b']
    w_pw1 = jnp.zeros((2 * C, 2 * C), jnp.float32)
    w_pw1 = w_pw1.at[:C, :C].set(w1).at[C:, C:].set(w1)
    b_pw1 = jnp.concatenate([b1, b1]).reshape(1, 2 * C)

    # depthwise convs: BN scale folded into the 9 taps; their (linear) biases are
    # folded further down into the fused final bias.
    s_ld = scale(raw['ldw_bn'][0])
    w_ldw = raw['ldw_w'].reshape(9, C) * s_ld[None, :]
    b_ldw = raw['ldw_bn'][1] + s_ld * raw['ldw_b']
    s_rd = scale(raw['rdw_bn'][0])
    w_rdw = raw['rdw_w'].reshape(9, C) * s_rd[None, :]
    b_rdw = raw['rdw_bn'][1] + s_rd * raw['rdw_b']

    # final 1x1 convs: BN folded; concat + channel shuffle (groups=2) folded into
    # an even/odd interleave of the output columns; both branches stacked into a
    # single (2C, Cout) weight.
    s_lp = scale(raw['lpw_bn'][0])
    wl = raw['lpw_w'] * s_lp[None, :]
    bl = raw['lpw_bn'][1] + s_lp * raw['lpw_b']
    s_rp = scale(raw['rpw2_bn'][0])
    wr = raw['rpw2_w'] * s_rp[None, :]
    br = raw['rpw2_bn'][1] + s_rp * raw['rpw2_b']

    w_fl = jnp.zeros((C, out_channels), jnp.float32).at[:, 0::2].set(wl)
    w_fr = jnp.zeros((C, out_channels), jnp.float32).at[:, 1::2].set(wr)
    w_fin = jnp.concatenate([w_fl, w_fr], axis=0)
    b_base = jnp.zeros((out_channels,), jnp.float32).at[0::2].set(bl).at[1::2].set(br)
    b_fin = (b_base + b_ldw @ w_fl + b_rdw @ w_fr).reshape(1, out_channels)

    kparams = dict(w_pw1=w_pw1.astype(jnp.bfloat16), b_pw1=b_pw1,
                   w_ldw=w_ldw, w_rdw=w_rdw,
                   w_fin=w_fin.astype(jnp.bfloat16), b_fin=b_fin)
    return kparams, raw


# ---------------------------------------------------------------------------
# Pure-JAX reference (independent of the kernel's foldings), for validation
# ---------------------------------------------------------------------------

def reference_downsample_unit(raw, x_nchw):
    x = jnp.transpose(x_nchw, (0, 2, 3, 1)).astype(jnp.float32)

    def bn(y, p):
        gamma, beta = p
        return y * (gamma / jnp.sqrt(1.0 + _BN_EPS)) + beta

    def dw3x3_s2(y, w, b):
        c = y.shape[-1]
        out = jax.lax.conv_general_dilated(
            y, w.reshape(3, 3, 1, c), window_strides=(2, 2),
            padding=((1, 1), (1, 1)),
            dimension_numbers=('NHWC', 'HWIO', 'NHWC'),
            feature_group_count=c)
        return out + b

    def pw(y, w, b):
        return jnp.einsum('nhwc,cd->nhwd', y, w) + b

    left = bn(dw3x3_s2(x, raw['ldw_w'], raw['ldw_b']), raw['ldw_bn'])
    left = jax.nn.relu(bn(pw(left, raw['lpw_w'], raw['lpw_b']), raw['lpw_bn']))
    right = jax.nn.relu(bn(pw(x, raw['rpw1_w'], raw['rpw1_b']), raw['rpw1_bn']))
    right = bn(dw3x3_s2(right, raw['rdw_w'], raw['rdw_b']), raw['rdw_bn'])
    right = jax.nn.relu(bn(pw(right, raw['rpw2_w'], raw['rpw2_b']), raw['rpw2_bn']))

    y = jnp.concatenate([left, right], axis=-1)
    B, Ho, Wo, Ct = y.shape
    y = y.reshape(B, Ho, Wo, 2, Ct // 2).transpose(0, 1, 2, 4, 3).reshape(B, Ho, Wo, Ct)
    return jnp.transpose(y, (0, 3, 1, 2))


# ---------------------------------------------------------------------------

if __name__ == "__main__":
    key = jax.random.PRNGKey(0)
    pkey, xkey = jax.random.split(key)

    # Small, lane-aligned ShuffleNetV2-style widths (multiples of 128 -> unmasked
    # stores; Wo multiple of 8 -> free reshapes; ht*Wo = 256 fills the MXU rows).
    in_channels, out_channels = 128, 256
    B, H, W = 2, 32, 32

    params, raw = init_downsample_params(pkey, in_channels, out_channels)
    x = jax.random.normal(xkey, (B, in_channels, H, W), jnp.float32)

    fwd = jax.jit(shufflenet_v2_downsample_unit)
    y = fwd(params, x)
    jax.block_until_ready(y)

    assert y.shape == (B, out_channels, H // 2, W // 2), y.shape
    assert bool(jnp.all(jnp.isfinite(y)))

    # Validate against an independent pure-JAX reference of the PyTorch module.
    # (bf16 matmul operands in the kernel -> slightly looser tolerance than f32.)
    y_ref = jax.jit(reference_downsample_unit)(raw, x)
    jax.block_until_ready(y_ref)
    max_err = float(jnp.max(jnp.abs(y - y_ref)))
    assert max_err < 1e-1, f"max abs err {max_err}"

    print("KERNEL_OK")
</pallas_src>

<mosaic_0001>
module attributes {stable_mosaic.version = 11 : i64} {
  func.func @_downsample_unit_kernel(%arg0: i32, %arg1: i32, %arg2: memref<1x32x16x256xbf16, #tpu.memory_space<vmem>>, %arg3: memref<1x1x16x256xbf16, #tpu.memory_space<vmem>>, %arg4: memref<256x256xbf16, #tpu.memory_space<vmem>>, %arg5: memref<1x256xf32, #tpu.memory_space<vmem>>, %arg6: memref<9x128xf32, #tpu.memory_space<vmem>>, %arg7: memref<9x128xf32, #tpu.memory_space<vmem>>, %arg8: memref<256x256xbf16, #tpu.memory_space<vmem>>, %arg9: memref<1x256xf32, #tpu.memory_space<vmem>>, %arg10: memref<1x16x16x256xf32, #tpu.memory_space<vmem>>) attributes {dimension_semantics = [#tpu.dimension_semantics<parallel>, #tpu.dimension_semantics<parallel>], iteration_bounds = array<i64: 2, 1>, scalar_prefetch = 0 : i64, scratch_operands = 0 : i64, tpu.core_type = #tpu.core_type<tc>, window_params = [{transform_indices = @transform_0, window_bounds = array<i64: 1, 32, 16, 256>}, {transform_indices = @transform_1, window_bounds = array<i64: 1, 1, 16, 256>}, {pipeline_mode = #tpu.pipeline_mode<synchronous>, transform_indices = @transform_2, window_bounds = array<i64: 256, 256>}, {pipeline_mode = #tpu.pipeline_mode<synchronous>, transform_indices = @transform_3, window_bounds = array<i64: 1, 256>}, {pipeline_mode = #tpu.pipeline_mode<synchronous>, transform_indices = @transform_4, window_bounds = array<i64: 9, 128>}, {pipeline_mode = #tpu.pipeline_mode<synchronous>, transform_indices = @transform_5, window_bounds = array<i64: 9, 128>}, {pipeline_mode = #tpu.pipeline_mode<synchronous>, transform_indices = @transform_6, window_bounds = array<i64: 256, 256>}, {pipeline_mode = #tpu.pipeline_mode<synchronous>, transform_indices = @transform_7, window_bounds = array<i64: 1, 256>}, {transform_indices = @transform_8, window_bounds = array<i64: 1, 16, 16, 256>}]} {
    %c0 = arith.constant 0 : index
    %c0_0 = arith.constant 0 : index
    %c0_1 = arith.constant 0 : index
    %c0_2 = arith.constant 0 : index
    %0 = vector.load %arg2[%c0, %c0_0, %c0_1, %c0_2] : memref<1x32x16x256xbf16, #tpu.memory_space<vmem>>, vector<1x32x16x256xbf16>
    %1 = vector.shape_cast %0 : vector<1x32x16x256xbf16> to vector<32x16x256xbf16>
    %c0_3 = arith.constant 0 : index
    %c0_4 = arith.constant 0 : index
    %c0_5 = arith.constant 0 : index
    %c0_6 = arith.constant 0 : index
    %2 = vector.load %arg3[%c0_3, %c0_4, %c0_5, %c0_6] : memref<1x1x16x256xbf16, #tpu.memory_space<vmem>>, vector<1x1x16x256xbf16>
    %3 = vector.shape_cast %2 : vector<1x1x16x256xbf16> to vector<1x16x256xbf16>
    %c0_i32 = arith.constant 0 : i32
    %4 = arith.cmpi sgt, %arg1, %c0_i32 : i32
    %cst = arith.constant 0.000000e+00 : bf16
    %5 = vector.broadcast %cst : bf16 to vector<1x16x256xbf16>
    %6 = arith.select %4, %3, %5 : vector<1x16x256xbf16>
    %c0_7 = arith.constant 0 : index
    %c0_8 = arith.constant 0 : index
    %7 = vector.load %arg4[%c0_7, %c0_8] : memref<256x256xbf16, #tpu.memory_space<vmem>>, vector<256x256xbf16>
    %c0_9 = arith.constant 0 : index
    %c0_10 = arith.constant 0 : index
    %8 = vector.load %arg5[%c0_9, %c0_10] : memref<1x256xf32, #tpu.memory_space<vmem>>, vector<1x256xf32>
    %9 = vector.shape_cast %1 : vector<32x16x256xbf16> to vector<512x256xbf16>
    %cst_11 = arith.constant dense<0.000000e+00> : vector<512x256xf32>
    %10 = tpu.matmul %9, %7, %cst_11 {dimension_numbers = #tpu.dot_dimension_numbers<[1], [0], [0], [1], [0, 0, 1, 1], [], []>} : vector<512x256xbf16>, vector<256x256xbf16>, vector<512x256xf32> -> vector<512x256xf32>
    %11 = vector.broadcast %8 : vector<1x256xf32> to vector<512x256xf32>
    %12 = arith.addf %10, %11 : vector<512x256xf32>
    %cst_12 = arith.constant 0.000000e+00 : f32
    %13 = vector.broadcast %cst_12 : f32 to vector<512x256xf32>
    %14 = arith.maximumf %12, %13 : vector<512x256xf32>
    %15 = arith.truncf %14 : vector<512x256xf32> to vector<512x256xbf16>
    %16 = vector.shape_cast %15 : vector<512x256xbf16> to vector<32x16x256xbf16>
    %17 = vector.shape_cast %6 : vector<1x16x256xbf16> to vector<16x256xbf16>
    %cst_13 = arith.constant dense<0.000000e+00> : vector<16x256xf32>
    %18 = tpu.matmul %17, %7, %cst_13 {dimension_numbers = #tpu.dot_dimension_numbers<[1], [0], [0], [1], [0, 0, 1, 1], [], []>} : vector<16x256xbf16>, vector<256x256xbf16>, vector<16x256xf32> -> vector<16x256xf32>
    %19 = vector.broadcast %8 : vector<1x256xf32> to vector<16x256xf32>
    %20 = arith.addf %18, %19 : vector<16x256xf32>
    %cst_14 = arith.constant 0.000000e+00 : f32
    %21 = vector.broadcast %cst_14 : f32 to vector<16x256xf32>
    %22 = arith.maximumf %20, %21 : vector<16x256xf32>
    %c0_i32_15 = arith.constant 0 : i32
    %23 = arith.cmpi sgt, %arg1, %c0_i32_15 : i32
    %cst_16 = arith.constant 0.000000e+00 : f32
    %24 = vector.broadcast %cst_16 : f32 to vector<16x256xf32>
    %25 = arith.select %23, %22, %24 : vector<16x256xf32>
    %26 = arith.truncf %25 : vector<16x256xf32> to vector<16x256xbf16>
    %27 = vector.shape_cast %26 : vector<16x256xbf16> to vector<1x16x256xbf16>
    %28 = vector.shape_cast %1 : vector<32x16x256xbf16> to vector<16x2x16x256xbf16>
    %29 = vector.shape_cast %16 : vector<32x16x256xbf16> to vector<16x2x16x256xbf16>
    %30 = vector.extract_strided_slice %28 {offsets = [0, 1, 0, 0], sizes = [15, 1, 16, 256], strides = [1, 1, 1, 1]} : vector<16x2x16x256xbf16> to vector<15x1x16x256xbf16>
    %31 = vector.shape_cast %30 : vector<15x1x16x256xbf16> to vector<15x16x256xbf16>
    %32 = tpu.concatenate %6, %31 in 0 : vector<1x16x256xbf16>, vector<15x16x256xbf16> -> vector<16x16x256xbf16>
    %33 = vector.extract_strided_slice %29 {offsets = [0, 1, 0, 0], sizes = [15, 1, 16, 256], strides = [1, 1, 1, 1]} : vector<16x2x16x256xbf16> to vector<15x1x16x256xbf16>
    %34 = vector.shape_cast %33 : vector<15x1x16x256xbf16> to vector<15x16x256xbf16>
    %35 = tpu.concatenate %27, %34 in 0 : vector<1x16x256xbf16>, vector<15x16x256xbf16> -> vector<16x16x256xbf16>
    %36 = vector.extract_strided_slice %28 {offsets = [0, 0, 0, 0], sizes = [16, 1, 16, 256], strides = [1, 1, 1, 1]} : vector<16x2x16x256xbf16> to vector<16x1x16x256xbf16>
    %37 = vector.shape_cast %36 : vector<16x1x16x256xbf16> to vector<16x16x256xbf16>
    %38 = vector.extract_strided_slice %28 {offsets = [0, 1, 0, 0], sizes = [16, 1, 16, 256], strides = [1, 1, 1, 1]} : vector<16x2x16x256xbf16> to vector<16x1x16x256xbf16>
    %39 = vector.shape_cast %38 : vector<16x1x16x256xbf16> to vector<16x16x256xbf16>
    %40 = vector.extract_strided_slice %29 {offsets = [0, 0, 0, 0], sizes = [16, 1, 16, 256], strides = [1, 1, 1, 1]} : vector<16x2x16x256xbf16> to vector<16x1x16x256xbf16>
    %41 = vector.shape_cast %40 : vector<16x1x16x256xbf16> to vector<16x16x256xbf16>
    %42 = vector.extract_strided_slice %29 {offsets = [0, 1, 0, 0], sizes = [16, 1, 16, 256], strides = [1, 1, 1, 1]} : vector<16x2x16x256xbf16> to vector<16x1x16x256xbf16>
    %43 = vector.shape_cast %42 : vector<16x1x16x256xbf16> to vector<16x16x256xbf16>
    %c0_17 = arith.constant 0 : index
    %c0_18 = arith.constant 0 : index
    %44 = vector.load %arg6[%c0_17, %c0_18] : memref<9x128xf32, #tpu.memory_space<vmem>>, vector<9x128xf32>
    %c0_19 = arith.constant 0 : index
    %c0_20 = arith.constant 0 : index
    %45 = vector.load %arg7[%c0_19, %c0_20] : memref<9x128xf32, #tpu.memory_space<vmem>>, vector<9x128xf32>
    %cst_21 = arith.constant 0.000000e+00 : bf16
    %46 = vector.broadcast %cst_21 : bf16 to vector<16x1x128xbf16>
    %cst_22 = arith.constant 0.000000e+00 : f32
    %47 = vector.broadcast %cst_22 : f32 to vector<16x16x128xf32>
    %cst_23 = arith.constant 0.000000e+00 : f32
    %48 = vector.broadcast %cst_23 : f32 to vector<16x16x128xf32>
    %49 = vector.extract_strided_slice %32 {offsets = [0, 0, 128], sizes = [16, 15, 128], strides = [1, 1, 1]} : vector<16x16x256xbf16> to vector<16x15x128xbf16>
    %50 = tpu.concatenate %46, %49 in 1 : vector<16x1x128xbf16>, vector<16x15x128xbf16> -> vector<16x16x128xbf16>
    %51 = vector.extract_strided_slice %32 {offsets = [0, 0, 0], sizes = [16, 16, 128], strides = [1, 1, 1]} : vector<16x16x256xbf16> to vector<16x16x128xbf16>
    %52 = vector.extract_strided_slice %32 {offsets = [0, 0, 128], sizes = [16, 16, 128], strides = [1, 1, 1]} : vector<16x16x256xbf16> to vector<16x16x128xbf16>
    %53 = vector.extract_strided_slice %35 {offsets = [0, 0, 128], sizes = [16, 15, 128], strides = [1, 1, 1]} : vector<16x16x256xbf16> to vector<16x15x128xbf16>
    %54 = tpu.concatenate %46, %53 in 1 : vector<16x1x128xbf16>, vector<16x15x128xbf16> -> vector<16x16x128xbf16>
    %55 = vector.extract_strided_slice %35 {offsets = [0, 0, 0], sizes = [16, 16, 128], strides = [1, 1, 1]} : vector<16x16x256xbf16> to vector<16x16x128xbf16>
    %56 = vector.extract_strided_slice %35 {offsets = [0, 0, 128], sizes = [16, 16, 128], strides = [1, 1, 1]} : vector<16x16x256xbf16> to vector<16x16x128xbf16>
    %57 = vector.extract_strided_slice %44 {offsets = [0, 0], sizes = [1, 128], strides = [1, 1]} : vector<9x128xf32> to vector<1x128xf32>
    %58 = vector.shape_cast %57 : vector<1x128xf32> to vector<128xf32>
    %59 = vector.shape_cast %58 : vector<128xf32> to vector<1x1x128xf32>
    %60 = arith.extf %50 : vector<16x16x128xbf16> to vector<16x16x128xf32>
    %61 = vector.broadcast %59 : vector<1x1x128xf32> to vector<16x16x128xf32>
    %62 = arith.mulf %60, %61 : vector<16x16x128xf32>
    %63 = arith.addf %47, %62 : vector<16x16x128xf32>
    %64 = vector.extract_strided_slice %45 {offsets = [0, 0], sizes = [1, 128], strides = [1, 1]} : vector<9x128xf32> to vector<1x128xf32>
    %65 = vector.shape_cast %64 : vector<1x128xf32> to vector<128xf32>
    %66 = vector.shape_cast %65 : vector<128xf32> to vector<1x1x128xf32>
    %67 = arith.extf %54 : vector<16x16x128xbf16> to vector<16x16x128xf32>
    %68 = vector.broadcast %66 : vector<1x1x128xf32> to vector<16x16x128xf32>
    %69 = arith.mulf %67, %68 : vector<16x16x128xf32>
    %70 = arith.addf %48, %69 : vector<16x16x128xf32>
    %71 = vector.extract_strided_slice %44 {offsets = [1, 0], sizes = [1, 128], strides = [1, 1]} : vector<9x128xf32> to vector<1x128xf32>
    %72 = vector.shape_cast %71 : vector<1x128xf32> to vector<128xf32>
    %73 = vector.shape_cast %72 : vector<128xf32> to vector<1x1x128xf32>
    %74 = arith.extf %51 : vector<16x16x128xbf16> to vector<16x16x128xf32>
    %75 = vector.broadcast %73 : vector<1x1x128xf32> to vector<16x16x128xf32>
    %76 = arith.mulf %74, %75 : vector<16x16x128xf32>
    %77 = arith.addf %63, %76 : vector<16x16x128xf32>
    %78 = vector.extract_strided_slice %45 {offsets = [1, 0], sizes = [1, 128], strides = [1, 1]} : vector<9x128xf32> to vector<1x128xf32>
    %79 = vector.shape_cast %78 : vector<1x128xf32> to vector<128xf32>
    %80 = vector.shape_cast %79 : vector<128xf32> to vector<1x1x128xf32>
    %81 = arith.extf %55 : vector<16x16x128xbf16> to vector<16x16x128xf32>
    %82 = vector.broadcast %80 : vector<1x1x128xf32> to vector<16x16x128xf32>
    %83 = arith.mulf %81, %82 : vector<16x16x128xf32>
    %84 = arith.addf %70, %83 : vector<16x16x128xf32>
    %85 = vector.extract_strided_slice %44 {offsets = [2, 0], sizes = [1, 128], strides = [1, 1]} : vector<9x128xf32> to vector<1x128xf32>
    %86 = vector.shape_cast %85 : vector<1x128xf32> to vector<128xf32>
    %87 = vector.shape_cast %86 : vector<128xf32> to vector<1x1x128xf32>
    %88 = arith.extf %52 : vector<16x16x128xbf16> to vector<16x16x128xf32>
    %89 = vector.broadcast %87 : vector<1x1x128xf32> to vector<16x16x128xf32>
    %90 = arith.mulf %88, %89 : vector<16x16x128xf32>
    %91 = arith.addf %77, %90 : vector<16x16x128xf32>
    %92 = vector.extract_strided_slice %45 {offsets = [2, 0], sizes = [1, 128], strides = [1, 1]} : vector<9x128xf32> to vector<1x128xf32>
    %93 = vector.shape_cast %92 : vector<1x128xf32> to vector<128xf32>
    %94 = vector.shape_cast %93 : vector<128xf32> to vector<1x1x128xf32>
    %95 = arith.extf %56 : vector<16x16x128xbf16> to vector<16x16x128xf32>
    %96 = vector.broadcast %94 : vector<1x1x128xf32> to vector<16x16x128xf32>
    %97 = arith.mulf %95, %96 : vector<16x16x128xf32>
    %98 = arith.addf %84, %97 : vector<16x16x128xf32>
    %99 = vector.extract_strided_slice %37 {offsets = [0, 0, 128], sizes = [16, 15, 128], strides = [1, 1, 1]} : vector<16x16x256xbf16> to vector<16x15x128xbf16>
    %100 = tpu.concatenate %46, %99 in 1 : vector<16x1x128xbf16>, vector<16x15x128xbf16> -> vector<16x16x128xbf16>
    %101 = vector.extract_strided_slice %37 {offsets = [0, 0, 0], sizes = [16, 16, 128], strides = [1, 1, 1]} : vector<16x16x256xbf16> to vector<16x16x128xbf16>
    %102 = vector.extract_strided_slice %37 {offsets = [0, 0, 128], sizes = [16, 16, 128], strides = [1, 1, 1]} : vector<16x16x256xbf16> to vector<16x16x128xbf16>
    %103 = vector.extract_strided_slice %41 {offsets = [0, 0, 128], sizes = [16, 15, 128], strides = [1, 1, 1]} : vector<16x16x256xbf16> to vector<16x15x128xbf16>
    %104 = tpu.concatenate %46, %103 in 1 : vector<16x1x128xbf16>, vector<16x15x128xbf16> -> vector<16x16x128xbf16>
    %105 = vector.extract_strided_slice %41 {offsets = [0, 0, 0], sizes = [16, 16, 128], strides = [1, 1, 1]} : vector<16x16x256xbf16> to vector<16x16x128xbf16>
    %106 = vector.extract_strided_slice %41 {offsets = [0, 0, 128], sizes = [16, 16, 128], strides = [1, 1, 1]} : vector<16x16x256xbf16> to vector<16x16x128xbf16>
    %107 = vector.extract_strided_slice %44 {offsets = [3, 0], sizes = [1, 128], strides = [1, 1]} : vector<9x128xf32> to vector<1x128xf32>
    %108 = vector.shape_cast %107 : vector<1x128xf32> to vector<128xf32>
    %109 = vector.shape_cast %108 : vector<128xf32> to vector<1x1x128xf32>
    %110 = arith.extf %100 : vector<16x16x128xbf16> to vector<16x16x128xf32>
    %111 = vector.broadcast %109 : vector<1x1x128xf32> to vector<16x16x128xf32>
    %112 = arith.mulf %110, %111 : vector<16x16x128xf32>
    %113 = arith.addf %91, %112 : vector<16x16x128xf32>
    %114 = vector.extract_strided_slice %45 {offsets = [3, 0], sizes = [1, 128], strides = [1, 1]} : vector<9x128xf32> to vector<1x128xf32>
    %115 = vector.shape_cast %114 : vector<1x128xf32> to vector<128xf32>
    %116 = vector.shape_cast %115 : vector<128xf32> to vector<1x1x128xf32>
    %117 = arith.extf %104 : vector<16x16x128xbf16> to vector<16x16x128xf32>
    %118 = vector.broadcast %116 : vector<1x1x128xf32> to vector<16x16x128xf32>
    %119 = arith.mulf %117, %118 : vector<16x16x128xf32>
    %120 = arith.addf %98, %119 : vector<16x16x128xf32>
    %121 = vector.extract_strided_slice %44 {offsets = [4, 0], sizes = [1, 128], strides = [1, 1]} : vector<9x128xf32> to vector<1x128xf32>
    %122 = vector.shape_cast %121 : vector<1x128xf32> to vector<128xf32>
    %123 = vector.shape_cast %122 : vector<128xf32> to vector<1x1x128xf32>
    %124 = arith.extf %101 : vector<16x16x128xbf16> to vector<16x16x128xf32>
    %125 = vector.broadcast %123 : vector<1x1x128xf32> to vector<16x16x128xf32>
    %126 = arith.mulf %124, %125 : vector<16x16x128xf32>
    %127 = arith.addf %113, %126 : vector<16x16x128xf32>
    %128 = vector.extract_strided_slice %45 {offsets = [4, 0], sizes = [1, 128], strides = [1, 1]} : vector<9x128xf32> to vector<1x128xf32>
    %129 = vector.shape_cast %128 : vector<1x128xf32> to vector<128xf32>
    %130 = vector.shape_cast %129 : vector<128xf32> to vector<1x1x128xf32>
    %131 = arith.extf %105 : vector<16x16x128xbf16> to vector<16x16x128xf32>
    %132 = vector.broadcast %130 : vector<1x1x128xf32> to vector<16x16x128xf32>
    %133 = arith.mulf %131, %132 : vector<16x16x128xf32>
    %134 = arith.addf %120, %133 : vector<16x16x128xf32>
    %135 = vector.extract_strided_slice %44 {offsets = [5, 0], sizes = [1, 128], strides = [1, 1]} : vector<9x128xf32> to vector<1x128xf32>
    %136 = vector.shape_cast %135 : vector<1x128xf32> to vector<128xf32>
    %137 = vector.shape_cast %136 : vector<128xf32> to vector<1x1x128xf32>
    %138 = arith.extf %102 : vector<16x16x128xbf16> to vector<16x16x128xf32>
    %139 = vector.broadcast %137 : vector<1x1x128xf32> to vector<16x16x128xf32>
    %140 = arith.mulf %138, %139 : vector<16x16x128xf32>
    %141 = arith.addf %127, %140 : vector<16x16x128xf32>
    %142 = vector.extract_strided_slice %45 {offsets = [5, 0], sizes = [1, 128], strides = [1, 1]} : vector<9x128xf32> to vector<1x128xf32>
    %143 = vector.shape_cast %142 : vector<1x128xf32> to vector<128xf32>
    %144 = vector.shape_cast %143 : vector<128xf32> to vector<1x1x128xf32>
    %145 = arith.extf %106 : vector<16x16x128xbf16> to vector<16x16x128xf32>
    %146 = vector.broadcast %144 : vector<1x1x128xf32> to vector<16x16x128xf32>
    %147 = arith.mulf %145, %146 : vector<16x16x128xf32>
    %148 = arith.addf %134, %147 : vector<16x16x128xf32>
    %149 = vector.extract_strided_slice %39 {offsets = [0, 0, 128], sizes = [16, 15, 128], strides = [1, 1, 1]} : vector<16x16x256xbf16> to vector<16x15x128xbf16>
    %150 = tpu.concatenate %46, %149 in 1 : vector<16x1x128xbf16>, vector<16x15x128xbf16> -> vector<16x16x128xbf16>
    %151 = vector.extract_strided_slice %39 {offsets = [0, 0, 0], sizes = [16, 16, 128], strides = [1, 1, 1]} : vector<16x16x256xbf16> to vector<16x16x128xbf16>
    %152 = vector.extract_strided_slice %39 {offsets = [0, 0, 128], sizes = [16, 16, 128], strides = [1, 1, 1]} : vector<16x16x256xbf16> to vector<16x16x128xbf16>
    %153 = vector.extract_strided_slice %43 {offsets = [0, 0, 128], sizes = [16, 15, 128], strides = [1, 1, 1]} : vector<16x16x256xbf16> to vector<16x15x128xbf16>
    %154 = tpu.concatenate %46, %153 in 1 : vector<16x1x128xbf16>, vector<16x15x128xbf16> -> vector<16x16x128xbf16>
    %155 = vector.extract_strided_slice %43 {offsets = [0, 0, 0], sizes = [16, 16, 128], strides = [1, 1, 1]} : vector<16x16x256xbf16> to vector<16x16x128xbf16>
    %156 = vector.extract_strided_slice %43 {offsets = [0, 0, 128], sizes = [16, 16, 128], strides = [1, 1, 1]} : vector<16x16x256xbf16> to vector<16x16x128xbf16>
    %157 = vector.extract_strided_slice %44 {offsets = [6, 0], sizes = [1, 128], strides = [1, 1]} : vector<9x128xf32> to vector<1x128xf32>
    %158 = vector.shape_cast %157 : vector<1x128xf32> to vector<128xf32>
    %159 = vector.shape_cast %158 : vector<128xf32> to vector<1x1x128xf32>
    %160 = arith.extf %150 : vector<16x16x128xbf16> to vector<16x16x128xf32>
    %161 = vector.broadcast %159 : vector<1x1x128xf32> to vector<16x16x128xf32>
    %162 = arith.mulf %160, %161 : vector<16x16x128xf32>
    %163 = arith.addf %141, %162 : vector<16x16x128xf32>
    %164 = vector.extract_strided_slice %45 {offsets = [6, 0], sizes = [1, 128], strides = [1, 1]} : vector<9x128xf32> to vector<1x128xf32>
    %165 = vector.shape_cast %164 : vector<1x128xf32> to vector<128xf32>
    %166 = vector.shape_cast %165 : vector<128xf32> to vector<1x1x128xf32>
    %167 = arith.extf %154 : vector<16x16x128xbf16> to vector<16x16x128xf32>
    %168 = vector.broadcast %166 : vector<1x1x128xf32> to vector<16x16x128xf32>
    %169 = arith.mulf %167, %168 : vector<16x16x128xf32>
    %170 = arith.addf %148, %169 : vector<16x16x128xf32>
    %171 = vector.extract_strided_slice %44 {offsets = [7, 0], sizes = [1, 128], strides = [1, 1]} : vector<9x128xf32> to vector<1x128xf32>
    %172 = vector.shape_cast %171 : vector<1x128xf32> to vector<128xf32>
    %173 = vector.shape_cast %172 : vector<128xf32> to vector<1x1x128xf32>
    %174 = arith.extf %151 : vector<16x16x128xbf16> to vector<16x16x128xf32>
    %175 = vector.broadcast %173 : vector<1x1x128xf32> to vector<16x16x128xf32>
    %176 = arith.mulf %174, %175 : vector<16x16x128xf32>
    %177 = arith.addf %163, %176 : vector<16x16x128xf32>
    %178 = vector.extract_strided_slice %45 {offsets = [7, 0], sizes = [1, 128], strides = [1, 1]} : vector<9x128xf32> to vector<1x128xf32>
    %179 = vector.shape_cast %178 : vector<1x128xf32> to vector<128xf32>
    %180 = vector.shape_cast %179 : vector<128xf32> to vector<1x1x128xf32>
    %181 = arith.extf %155 : vector<16x16x128xbf16> to vector<16x16x128xf32>
    %182 = vector.broadcast %180 : vector<1x1x128xf32> to vector<16x16x128xf32>
    %183 = arith.mulf %181, %182 : vector<16x16x128xf32>
    %184 = arith.addf %170, %183 : vector<16x16x128xf32>
    %185 = vector.extract_strided_slice %44 {offsets = [8, 0], sizes = [1, 128], strides = [1, 1]} : vector<9x128xf32> to vector<1x128xf32>
    %186 = vector.shape_cast %185 : vector<1x128xf32> to vector<128xf32>
    %187 = vector.shape_cast %186 : vector<128xf32> to vector<1x1x128xf32>
    %188 = arith.extf %152 : vector<16x16x128xbf16> to vector<16x16x128xf32>
    %189 = vector.broadcast %187 : vector<1x1x128xf32> to vector<16x16x128xf32>
    %190 = arith.mulf %188, %189 : vector<16x16x128xf32>
    %191 = arith.addf %177, %190 : vector<16x16x128xf32>
    %192 = vector.extract_strided_slice %45 {offsets = [8, 0], sizes = [1, 128], strides = [1, 1]} : vector<9x128xf32> to vector<1x128xf32>
    %193 = vector.shape_cast %192 : vector<1x128xf32> to vector<128xf32>
    %194 = vector.shape_cast %193 : vector<128xf32> to vector<1x1x128xf32>
    %195 = arith.extf %156 : vector<16x16x128xbf16> to vector<16x16x128xf32>
    %196 = vector.broadcast %194 : vector<1x1x128xf32> to vector<16x16x128xf32>
    %197 = arith.mulf %195, %196 : vector<16x16x128xf32>
    %198 = arith.addf %184, %197 : vector<16x16x128xf32>
    %199 = arith.truncf %191 : vector<16x16x128xf32> to vector<16x16x128xbf16>
    %200 = arith.truncf %198 : vector<16x16x128xf32> to vector<16x16x128xbf16>
    %201 = tpu.concatenate %199, %200 in 2 : vector<16x16x128xbf16>, vector<16x16x128xbf16> -> vector<16x16x256xbf16>
    %202 = vector.shape_cast %201 : vector<16x16x256xbf16> to vector<256x256xbf16>
    %c0_24 = arith.constant 0 : index
    %c0_25 = arith.constant 0 : index
    %203 = vector.load %arg8[%c0_24, %c0_25] : memref<256x256xbf16, #tpu.memory_space<vmem>>, vector<256x256xbf16>
    %cst_26 = arith.constant dense<0.000000e+00> : vector<256x256xf32>
    %204 = tpu.matmul %202, %203, %cst_26 {dimension_numbers = #tpu.dot_dimension_numbers<[1], [0], [0], [1], [0, 0, 1, 1], [], []>} : vector<256x256xbf16>, vector<256x256xbf16>, vector<256x256xf32> -> vector<256x256xf32>
    %c0_27 = arith.constant 0 : index
    %c0_28 = arith.constant 0 : index
    %205 = vector.load %arg9[%c0_27, %c0_28] : memref<1x256xf32, #tpu.memory_space<vmem>>, vector<1x256xf32>
    %206 = vector.broadcast %205 : vector<1x256xf32> to vector<256x256xf32>
    %207 = arith.addf %204, %206 : vector<256x256xf32>
    %cst_29 = arith.constant 0.000000e+00 : f32
    %208 = vector.broadcast %cst_29 : f32 to vector<256x256xf32>
    %209 = arith.maximumf %207, %208 : vector<256x256xf32>
    %210 = vector.shape_cast %209 : vector<256x256xf32> to vector<16x16x256xf32>
    %c0_30 = arith.constant 0 : index
    %c0_31 = arith.constant 0 : index
    %c0_32 = arith.constant 0 : index
    %c0_33 = arith.constant 0 : index
    %211 = vector.load %arg10[%c0_30, %c0_31, %c0_32, %c0_33] : memref<1x16x16x256xf32, #tpu.memory_space<vmem>>, vector<1x16x16x256xf32>
    %212 = vector.shape_cast %211 : vector<1x16x16x256xf32> to vector<16x16x256xf32>
    %213 = vector.shape_cast %210 : vector<16x16x256xf32> to vector<1x16x16x256xf32>
    tpu.vector_store %arg10[%c0_30, %c0_31, %c0_32, %c0_33], %213 {strides = array<i32>} : memref<1x16x16x256xf32, #tpu.memory_space<vmem>>, vector<1x16x16x256xf32>,
    return
  }
  func.func @transform_0(%arg0: i32, %arg1: i32) -> (i32, i32, i32, i32) {
    %c0_i32 = arith.constant 0 : i32
    %c0_i32_0 = arith.constant 0 : i32
    %c0_i32_1 = arith.constant 0 : i32
    return %arg0, %arg1, %c0_i32, %c0_i32_0 : i32, i32, i32, i32
  }
  func.func @transform_1(%arg0: i32, %arg1: i32) -> (i32, i32, i32, i32) {
    %c32_i32 = arith.constant 32 : i32
    %0 = arith.muli %c32_i32, %arg1 : i32
    %c1_i32 = arith.constant 1 : i32
    %1 = arith.subi %0, %c1_i32 : i32
    %c0_i32 = arith.constant 0 : i32
    %2 = arith.maxsi %1, %c0_i32 : i32
    %c0_i32_0 = arith.constant 0 : i32
    %c0_i32_1 = arith.constant 0 : i32
    %c0_i32_2 = arith.constant 0 : i32
    return %arg0, %2, %c0_i32_0, %c0_i32_1 : i32, i32, i32, i32
  }
  func.func @transform_2(%arg0: i32, %arg1: i32) -> (i32, i32) {
    %c0_i32 = arith.constant 0 : i32
    %c0_i32_0 = arith.constant 0 : i32
    %c0_i32_1 = arith.constant 0 : i32
    return %c0_i32, %c0_i32_0 : i32, i32
  }
  func.func @transform_3(%arg0: i32, %arg1: i32) -> (i32, i32) {
    %c0_i32 = arith.constant 0 : i32
    %c0_i32_0 = arith.constant 0 : i32
    %c0_i32_1 = arith.constant 0 : i32
    return %c0_i32, %c0_i32_0 : i32, i32
  }
  func.func @transform_4(%arg0: i32, %arg1: i32) -> (i32, i32) {
    %c0_i32 = arith.constant 0 : i32
    %c0_i32_0 = arith.constant 0 : i32
    %c0_i32_1 = arith.constant 0 : i32
    return %c0_i32, %c0_i32_0 : i32, i32
  }
  func.func @transform_5(%arg0: i32, %arg1: i32) -> (i32, i32) {
    %c0_i32 = arith.constant 0 : i32
    %c0_i32_0 = arith.constant 0 : i32
    %c0_i32_1 = arith.constant 0 : i32
    return %c0_i32, %c0_i32_0 : i32, i32
  }
  func.func @transform_6(%arg0: i32, %arg1: i32) -> (i32, i32) {
    %c0_i32 = arith.constant 0 : i32
    %c0_i32_0 = arith.constant 0 : i32
    %c0_i32_1 = arith.constant 0 : i32
    return %c0_i32, %c0_i32_0 : i32, i32
  }
  func.func @transform_7(%arg0: i32, %arg1: i32) -> (i32, i32) {
    %c0_i32 = arith.constant 0 : i32
    %c0_i32_0 = arith.constant 0 : i32
    %c0_i32_1 = arith.constant 0 : i32
    return %c0_i32, %c0_i32_0 : i32, i32
  }
  func.func @transform_8(%arg0: i32, %arg1: i32) -> (i32, i32, i32, i32) {
    %c0_i32 = arith.constant 0 : i32
    %c0_i32_0 = arith.constant 0 : i32
    %c0_i32_1 = arith.constant 0 : i32
    return %arg0, %arg1, %c0_i32, %c0_i32_0 : i32, i32, i32, i32
  }
}

</mosaic_0001>

<llo_original>
// kernel: shufflenet_v2_downsample_unit.1
$region0: #{shufflenet_v2_downsample_unit.1}
  #allocation0 [shape = 'u32[]', space=smem, size = 0x4, offset = 0x4, fixed_abs, tag = 'smem constant byte address 0x4 - core index']
  #allocation1 [shape = 'u32[144,128]{1,0:T(1,128)}', space=vmem, size = 0x12000, scoped, tag = 'internal scratch']
  %s0 = inlined_call_operand.vmem [shape: bf16[2,32,16,256], index: 0, kind: input, shape index: {}, may-alias: {0,1}]
  %s1 = inlined_call_operand.vmem [shape: bf16[2,32,16,256], index: 1, kind: input, shape index: {}, may-alias: {0,1}]
  %s2 = inlined_call_operand.vmem [shape: bf16[256,256], index: 2, kind: input, shape index: {}]
  %s3 = inlined_call_operand.vmem [shape: f32[1,256], index: 3, kind: input, shape index: {}]
  %s4 = inlined_call_operand.vmem [shape: f32[9,128], index: 4, kind: input, shape index: {}]
  %s5 = inlined_call_operand.vmem [shape: f32[9,128], index: 5, kind: input, shape index: {}]
  %s6 = inlined_call_operand.vmem [shape: bf16[256,256], index: 6, kind: input, shape index: {}]
  %s7 = inlined_call_operand.vmem [shape: f32[1,256], index: 7, kind: input, shape index: {}]
  %s8 = inlined_call_operand.hbm [shape: f32[2,16,16,256], index: 8, kind: output, shape index: {}]
  %s9 = sld [smem:[#allocation0]]
  $region65: #{shufflenet_v2_downsample_unit.1} parent=0
    _
  %s11 = ssub.s32 1, %s9
  %s12 = scalar_select 0, %s11, %s9
  $region1: #{shufflenet_v2_downsample_unit.1} parent=0
    #allocation2 [shape = 'u8[524288]{0}', space=vmem, size = 0x80000, scoped, tag = 'output window, operand 0']
    #allocation3 [shape = 's32[2]{0}', space=sflag, size = 0x8, scoped, tag = 'scoped memory for shufflenet_v2_downsample_unit.1']
    %13 = vsyncpa [#allocation3], 0
    %s14 = scalar_lea.sflag [#allocation3], 1
    %15 = vsyncpa %s14, 0
    loop: start=0, step=1, limit=4
    $region2: #{shufflenet_v2_downsample_unit.1} parent=1 // loop_pre_header
      _
    $region3: #{shufflenet_v2_downsample_unit.1} parent=1 // loop_header
      %s17 = sphi 0, %s21
      %p18 = scmp.ge.s32.totalorder %s17, 4
      %s24 = sphi 0, %s36
      %s25 = sphi 0, %s32
      %s26 = sphi 0, %s24
      %s27 = sphi 0, %s25
      %s28 = sphi 0, %s26
      %s29 = sphi 0, %s27
      %s41 = sphi 0, %s43
      %s44 = sphi 0, %s41
      %s45 = sphi 0, %s44
      %s61 = sphi 0, %s45
      %s77 = sphi 0, %s79
      %s80 = sphi 0, %s77
      %s81 = sphi 0, %s80
      %s97 = sphi 0, %s81
      %s101 = sphi 0, %s101
      %s103 = sphi 0, %s101
      %s104 = sphi 0, %s103
      %s118 = sphi 0, %s104
      %s122 = sphi 0, %s122
      %s124 = sphi 0, %s122
      %s125 = sphi 0, %s124
      %s139 = sphi 0, %s125
      %s143 = sphi 0, %s143
      %s145 = sphi 0, %s143
      %s146 = sphi 0, %s145
      %s160 = sphi 0, %s146
      %s164 = sphi 0, %s164
      %s166 = sphi 0, %s164
      %s167 = sphi 0, %s166
      %s181 = sphi 0, %s167
      %s185 = sphi 0, %s185
      %s187 = sphi 0, %s185
      %s188 = sphi 0, %s187
      %s202 = sphi 0, %s188
      %s206 = sphi 0, %s206
      %s208 = sphi 0, %s206
      %s209 = sphi 0, %s208
      %s223 = sphi 0, %s209
      %s231 = sphi 0, %s233
      %s234 = sphi 0, %s231
      %s235 = sphi 0, %s234
      %s251 = sphi 0, %s235
    $region4: #{shufflenet_v2_downsample_unit.1} parent=1 // loop_header_branch
      %20 = sbr.rel (%p18) target = $region8
    $region5: #{shufflenet_v2_downsample_unit.1} parent=1 // loop_body
      %s22 = ssub.s32 %s17, 1
      %s23 = ssub.s32 %s17, 2
      %s30 = sadd.s32 1, %s25
      %p31 = scmp.ge.s32.totalorder %s30, 1
      %s32 = scalar_select %p31, 0, %s30
      %s33 = sadd.s32 1, %s24
      %s34 = scalar_select %p31, %s33, %s24
      %p35 = scmp.ge.s32.totalorder %s34, 2
      %s36 = scalar_select %p35, 0, %s34
      %s37 = ssub.s32 %s24, %s36
      %s38 = ssub.s32 %s25, %s32
      %s39 = sor.u32 %s37, %s38
      %p40 = scmp.eq.s32.totalorder %s39, 0
      %s42 = sadd.s32 %s41, 1
      %s43 = scalar_select %p40, %s41, %s42
      %p46 = pneg %p40
      %p47 = scmp.eq.s32.totalorder %s17, 1
      %p48 = por %p46, %p47
      %p49 = scmp.ne.s32.totalorder %s41, %s44
      %p50 = scmp.eq.s32.totalorder %s17, 0
      %p51 = por %p49, %p50
      %p52 = scmp.ne.s32.totalorder %s41, %s44
      %p53 = scmp.eq.s32.totalorder %s22, 1
      %p54 = por %p52, %p53
      %p55 = scmp.ne.s32.totalorder %s44, %s45
      %p56 = scmp.eq.s32.totalorder %s22, 0
      %p57 = por %p55, %p56
      %p58 = scmp.ne.s32.totalorder %s44, %s45
      %p59 = scmp.eq.s32.totalorder %s23, 1
      %p60 = por %p58, %p59
      %p62 = scmp.ne.s32.totalorder %s45, %s61
      %p63 = scmp.eq.s32.totalorder %s23, 0
      %p64 = por %p62, %p63
      %s65 = smul.u32 %s25, 32
      %s66 = ssub.s32 %s65, 1
      %p67 = scmp.gt.s32.totalorder %s66, 0
      %s68 = scalar_select %p67, %s66, 0
      %s69 = smul.u32 %s32, 32
      %s70 = ssub.s32 %s69, 1
      %p71 = scmp.gt.s32.totalorder %s70, 0
      %s72 = scalar_select %p71, %s70, 0
      %s73 = ssub.s32 %s24, %s36
      %s74 = ssub.s32 %s68, %s72
      %s75 = sor.u32 %s73, %s74
      %p76 = scmp.eq.s32.totalorder %s75, 0
      %s78 = sadd.s32 %s77, 1
      %s79 = scalar_select %p76, %s77, %s78
      %p82 = pneg %p76
      %p83 = scmp.eq.s32.totalorder %s17, 1
      %p84 = por %p82, %p83
      %p85 = scmp.ne.s32.totalorder %s77, %s80
      %p86 = scmp.eq.s32.totalorder %s17, 0
      %p87 = por %p85, %p86
      %p88 = scmp.ne.s32.totalorder %s77, %s80
      %p89 = scmp.eq.s32.totalorder %s22, 1
      %p90 = por %p88, %p89
      %p91 = scmp.ne.s32.totalorder %s80, %s81
      %p92 = scmp.eq.s32.totalorder %s22, 0
      %p93 = por %p91, %p92
      %p94 = scmp.ne.s32.totalorder %s80, %s81
      %p95 = scmp.eq.s32.totalorder %s23, 1
      %p96 = por %p94, %p95
      %p98 = scmp.ne.s32.totalorder %s81, %s97
      %p99 = scmp.eq.s32.totalorder %s23, 0
      %p100 = por %p98, %p99
      %s102 = sadd.s32 %s101, 1
      %p105 = scmp.eq.s32.totalorder %s17, 1
      %p106 = scmp.ne.s32.totalorder %s101, %s103
      %p107 = scmp.eq.s32.totalorder %s17, 0
      %p108 = por %p106, %p107
      %p109 = scmp.ne.s32.totalorder %s101, %s103
      %p110 = scmp.eq.s32.totalorder %s22, 1
      %p111 = por %p109, %p110
      %p112 = scmp.ne.s32.totalorder %s103, %s104
      %p113 = scmp.eq.s32.totalorder %s22, 0
      %p114 = por %p112, %p113
      %p115 = scmp.ne.s32.totalorder %s103, %s104
      %p116 = scmp.eq.s32.totalorder %s23, 1
      %p117 = por %p115, %p116
      %p119 = scmp.ne.s32.totalorder %s104, %s118
      %p120 = scmp.eq.s32.totalorder %s23, 0
      %p121 = por %p119, %p120
      %s123 = sadd.s32 %s122, 1
      %p126 = scmp.eq.s32.totalorder %s17, 1
      %p127 = scmp.ne.s32.totalorder %s122, %s124
      %p128 = scmp.eq.s32.totalorder %s17, 0
      %p129 = por %p127, %p128
      %p130 = scmp.ne.s32.totalorder %s122, %s124
      %p131 = scmp.eq.s32.totalorder %s22, 1
      %p132 = por %p130, %p131
      %p133 = scmp.ne.s32.totalorder %s124, %s125
      %p134 = scmp.eq.s32.totalorder %s22, 0
      %p135 = por %p133, %p134
      %p136 = scmp.ne.s32.totalorder %s124, %s125
      %p137 = scmp.eq.s32.totalorder %s23, 1
      %p138 = por %p136, %p137
      %p140 = scmp.ne.s32.totalorder %s125, %s139
      %p141 = scmp.eq.s32.totalorder %s23, 0
      %p142 = por %p140, %p141
      %s144 = sadd.s32 %s143, 1
      %p147 = scmp.eq.s32.totalorder %s17, 1
      %p148 = scmp.ne.s32.totalorder %s143, %s145
      %p149 = scmp.eq.s32.totalorder %s17, 0
      %p150 = por %p148, %p149
      %p151 = scmp.ne.s32.totalorder %s143, %s145
      %p152 = scmp.eq.s32.totalorder %s22, 1
      %p153 = por %p151, %p152
      %p154 = scmp.ne.s32.totalorder %s145, %s146
      %p155 = scmp.eq.s32.totalorder %s22, 0
      %p156 = por %p154, %p155
      %p157 = scmp.ne.s32.totalorder %s145, %s146
      %p158 = scmp.eq.s32.totalorder %s23, 1
      %p159 = por %p157, %p158
      %p161 = scmp.ne.s32.totalorder %s146, %s160
      %p162 = scmp.eq.s32.totalorder %s23, 0
      %p163 = por %p161, %p162
      %s165 = sadd.s32 %s164, 1
      %p168 = scmp.eq.s32.totalorder %s17, 1
      %p169 = scmp.ne.s32.totalorder %s164, %s166
      %p170 = scmp.eq.s32.totalorder %s17, 0
      %p171 = por %p169, %p170
      %p172 = scmp.ne.s32.totalorder %s164, %s166
      %p173 = scmp.eq.s32.totalorder %s22, 1
      %p174 = por %p172, %p173
      %p175 = scmp.ne.s32.totalorder %s166, %s167
      %p176 = scmp.eq.s32.totalorder %s22, 0
      %p177 = por %p175, %p176
      %p178 = scmp.ne.s32.totalorder %s166, %s167
      %p179 = scmp.eq.s32.totalorder %s23, 1
      %p180 = por %p178, %p179
      %p182 = scmp.ne.s32.totalorder %s167, %s181
      %p183 = scmp.eq.s32.totalorder %s23, 0
      %p184 = por %p182, %p183
      %s186 = sadd.s32 %s185, 1
      %p189 = scmp.eq.s32.totalorder %s17, 1
      %p190 = scmp.ne.s32.totalorder %s185, %s187
      %p191 = scmp.eq.s32.totalorder %s17, 0
      %p192 = por %p190, %p191
      %p193 = scmp.ne.s32.totalorder %s185, %s187
      %p194 = scmp.eq.s32.totalorder %s22, 1
      %p195 = por %p193, %p194
      %p196 = scmp.ne.s32.totalorder %s187, %s188
      %p197 = scmp.eq.s32.totalorder %s22, 0
      %p198 = por %p196, %p197
      %p199 = scmp.ne.s32.totalorder %s187, %s188
      %p200 = scmp.eq.s32.totalorder %s23, 1
      %p201 = por %p199, %p200
      %p203 = scmp.ne.s32.totalorder %s188, %s202
      %p204 = scmp.eq.s32.totalorder %s23, 0
      %p205 = por %p203, %p204
      %s207 = sadd.s32 %s206, 1
      %p210 = scmp.eq.s32.totalorder %s17, 1
      %p211 = scmp.ne.s32.totalorder %s206, %s208
      %p212 = scmp.eq.s32.totalorder %s17, 0
      %p213 = por %p211, %p212
      %p214 = scmp.ne.s32.totalorder %s206, %s208
      %p215 = scmp.eq.s32.totalorder %s22, 1
      %p216 = por %p214, %p215
      %p217 = scmp.ne.s32.totalorder %s208, %s209
      %p218 = scmp.eq.s32.totalorder %s22, 0
      %p219 = por %p217, %p218
      %p220 = scmp.ne.s32.totalorder %s208, %s209
      %p221 = scmp.eq.s32.totalorder %s23, 1
      %p222 = por %p220, %p221
      %p224 = scmp.ne.s32.totalorder %s209, %s223
      %p225 = scmp.eq.s32.totalorder %s23, 0
      %p226 = por %p224, %p225
      %s227 = ssub.s32 %s24, %s36
      %s228 = ssub.s32 %s25, %s32
      %s229 = sor.u32 %s227, %s228
      %p230 = scmp.eq.s32.totalorder %s229, 0
      %s232 = sadd.s32 %s231, 1
      %s233 = scalar_select %p230, %s231, %s232
      %p236 = pneg %p230
      %p237 = scmp.eq.s32.totalorder %s17, 1
      %p238 = por %p236, %p237
      %p239 = scmp.ne.s32.totalorder %s231, %s234
      %p240 = scmp.eq.s32.totalorder %s17, 0
      %p241 = por %p239, %p240
      %p242 = scmp.ne.s32.totalorder %s231, %s234
      %p243 = scmp.eq.s32.totalorder %s22, 1
      %p244 = por %p242, %p243
      %p245 = scmp.ne.s32.totalorder %s234, %s235
      %p246 = scmp.eq.s32.totalorder %s22, 0
      %p247 = por %p245, %p246
      %p248 = scmp.ne.s32.totalorder %s234, %s235
      %p249 = scmp.eq.s32.totalorder %s23, 1
      %p250 = por %p248, %p249
      %p252 = scmp.ne.s32.totalorder %s235, %s251
      %p253 = scmp.eq.s32.totalorder %s23, 0
      %p254 = por %p252, %p253
      %p255 = scmp.le.s32.totalorder 1, %s17
      %p256 = scmp.lt.s32.totalorder %s17, 3
      %p257 = pnand %p255, %p256
      %p258 = pneg %p257
      // Predicated region
      $region9: #{shufflenet_v2_downsample_unit.1} parent=5 // pred_check
        _
      $region10: #{shufflenet_v2_downsample_unit.1} parent=5 // pred_check_branch
        %260 = sbr.rel (%p257) target = $region12
      $region11: #{shufflenet_v2_downsample_unit.1} parent=5 // pred_region
        %s261 = ssub.s32 %s17, 1
        // Predicated region
        $region13: #{shufflenet_v2_downsample_unit.1} parent=11 // pred_check
          %p262 = pneg %p114
        $region14: #{shufflenet_v2_downsample_unit.1} parent=11 // pred_check_branch
          %264 = sbr.rel (%p262) target = $region16
        $region15: #{shufflenet_v2_downsample_unit.1} parent=11 // pred_region
          _
        $region16: #{shufflenet_v2_downsample_unit.1} parent=11 // pred_fallthru
          _
        // Predicated region
        $region17: #{shufflenet_v2_downsample_unit.1} parent=11 // pred_check
          %p265 = pneg %p135
        $region18: #{shufflenet_v2_downsample_unit.1} parent=11 // pred_check_branch
          %267 = sbr.rel (%p265) target = $region20
        $region19: #{shufflenet_v2_downsample_unit.1} parent=11 // pred_region
          _
        $region20: #{shufflenet_v2_downsample_unit.1} parent=11 // pred_fallthru
          _
        // Predicated region
        $region21: #{shufflenet_v2_downsample_unit.1} parent=11 // pred_check
          %p268 = pneg %p156
        $region22: #{shufflenet_v2_downsample_unit.1} parent=11 // pred_check_branch
          %270 = sbr.rel (%p268) target = $region24
        $region23: #{shufflenet_v2_downsample_unit.1} parent=11 // pred_region
          _
        $region24: #{shufflenet_v2_downsample_unit.1} parent=11 // pred_fallthru
          _
        // Predicated region
        $region25: #{shufflenet_v2_downsample_unit.1} parent=11 // pred_check
          %p271 = pneg %p177
        $region26: #{shufflenet_v2_downsample_unit.1} parent=11 // pred_check_branch
          %273 = sbr.rel (%p271) target = $region28
        $region27: #{shufflenet_v2_downsample_unit.1} parent=11 // pred_region
          _
        $region28: #{shufflenet_v2_downsample_unit.1} parent=11 // pred_fallthru
          _
        // Predicated region
        $region29: #{shufflenet_v2_downsample_unit.1} parent=11 // pred_check
          %p274 = pneg %p198
        $region30: #{shufflenet_v2_downsample_unit.1} parent=11 // pred_check_branch
          %276 = sbr.rel (%p274) target = $region32
        $region31: #{shufflenet_v2_downsample_unit.1} parent=11 // pred_region
          _
        $region32: #{shufflenet_v2_downsample_unit.1} parent=11 // pred_fallthru
          _
        // Predicated region
        $region33: #{shufflenet_v2_downsample_unit.1} parent=11 // pred_check
          %p277 = pneg %p219
        $region34: #{shufflenet_v2_downsample_unit.1} parent=11 // pred_check_branch
          %279 = sbr.rel (%p277) target = $region36
        $region35: #{shufflenet_v2_downsample_unit.1} parent=11 // pred_region
          _
        $region36: #{shufflenet_v2_downsample_unit.1} parent=11 // pred_fallthru
          _
      $region12: #{shufflenet_v2_downsample_unit.1} parent=5 // pred_fallthru
        _
      %p280 = scmp.lt.s32.totalorder %s17, 2
      // Predicated region
      $region37: #{shufflenet_v2_downsample_unit.1} parent=5 // pred_check
        %p281 = pneg %p280
      $region38: #{shufflenet_v2_downsample_unit.1} parent=5 // pred_check_branch
        %283 = sbr.rel (%p281) target = $region40
      $region39: #{shufflenet_v2_downsample_unit.1} parent=5 // pred_region
        // Predicated region
        $region41: #{shufflenet_v2_downsample_unit.1} parent=39 // pred_check
          %p284 = pneg %p51
        $region42: #{shufflenet_v2_downsample_unit.1} parent=39 // pred_check_branch
          %286 = sbr.rel (%p284) target = $region44
        $region43: #{shufflenet_v2_downsample_unit.1} parent=39 // pred_region
          %s287 = smul.u32 32, %s25
          %p288 = scmp.lt.s32.totalorder %s24, 1
          %s289 = scalar_select %p288, %s24, 1
          %p290 = scmp.lt.s32.totalorder %s287, 31
          %s291 = scalar_select %p290, %s287, 31
          %s292 = smul.addr %s291, 4
          %s293 = smul.addr %s289, 128
          %s294 = sadd.s32 %s292, %s293
          %s295 = smul.addr %s294, 4
          %s296 = scalar_lea.vmem %s0, %s295
          %s297 = smul.u32 32, %s25
        $region44: #{shufflenet_v2_downsample_unit.1} parent=39 // pred_fallthru
          _
        // Predicated region
        $region45: #{shufflenet_v2_downsample_unit.1} parent=39 // pred_check
          %p298 = pneg %p87
        $region46: #{shufflenet_v2_downsample_unit.1} parent=39 // pred_check_branch
          %300 = sbr.rel (%p298) target = $region48
        $region47: #{shufflenet_v2_downsample_unit.1} parent=39 // pred_region
          %s301 = smul.u32 %s25, 32
          %s302 = ssub.s32 %s301, 1
          %p303 = scmp.gt.s32.totalorder %s302, 0
          %s304 = scalar_select %p303, %s302, 0
          %p305 = scmp.lt.s32.totalorder %s24, 1
          %s306 = scalar_select %p305, %s24, 1
          %p307 = scmp.lt.s32.totalorder %s304, 31
          %s308 = scalar_select %p307, %s304, 31
          %s309 = smul.addr %s308, 4
          %s310 = smul.addr %s306, 128
          %s311 = sadd.s32 %s309, %s310
          %s312 = smul.addr %s311, 4
          %s313 = scalar_lea.vmem %s1, %s312
          %s314 = smul.u32 %s25, 32
          %s315 = ssub.s32 %s314, 1
          %p316 = scmp.gt.s32.totalorder %s315, 0
          %s317 = scalar_select %p316, %s315, 0
        $region48: #{shufflenet_v2_downsample_unit.1} parent=39 // pred_fallthru
          _
      $region40: #{shufflenet_v2_downsample_unit.1} parent=5 // pred_fallthru
        _
      %p318 = scmp.le.s32.totalorder 1, %s17
      %p319 = scmp.lt.s32.totalorder %s17, 3
      %p320 = pnand %p318, %p319
      %p321 = pneg %p320
      // Predicated region
      $region49: #{shufflenet_v2_downsample_unit.1} parent=5 // pred_check
        _
      $region50: #{shufflenet_v2_downsample_unit.1} parent=5 // pred_check_branch
        %323 = sbr.rel (%p320) target = $region52
      $region51: #{shufflenet_v2_downsample_unit.1} parent=5 // pred_region
        %s324 = ssub.s32 %s17, 1
        %s325 = smul.u32 32, %s27
        %p326 = scmp.lt.s32.totalorder %s26, 1
        %s327 = scalar_select %p326, %s26, 1
        %p328 = scmp.lt.s32.totalorder %s325, 31
        %s329 = scalar_select %p328, %s325, 31
        %s330 = smul.addr %s329, 4
        %s331 = smul.addr %s327, 128
        %s332 = sadd.s32 %s330, %s331
        %s333 = smul.addr %s332, 4
        %s334 = scalar_lea.vmem %s0, %s333
        %p335 = pneg %p57
        %p336 = pneg %p54
        %s337 = smul.u32 %s27, 32
        %s338 = ssub.s32 %s337, 1
        %p339 = scmp.gt.s32.totalorder %s338, 0
        %s340 = scalar_select %p339, %s338, 0
        %p341 = scmp.lt.s32.totalorder %s26, 1
        %s342 = scalar_select %p341, %s26, 1
        %p343 = scmp.lt.s32.totalorder %s340, 31
        %s344 = scalar_select %p343, %s340, 31
        %s345 = smul.addr %s344, 4
        %s346 = smul.addr %s342, 128
        %s347 = sadd.s32 %s345, %s346
        %s348 = smul.addr %s347, 4
        %s349 = scalar_lea.vmem %s1, %s348
        %p350 = pneg %p93
        %p351 = pneg %p90
        %p352 = pneg %p114
        %p353 = pneg %p111
        %p354 = pneg %p135
        %p355 = pneg %p132
        %p356 = pneg %p156
        %p357 = pneg %p153
        %p358 = pneg %p177
        %p359 = pneg %p174
        %p360 = pneg %p198
        %p361 = pneg %p195
        %p362 = pneg %p219
        %p363 = pneg %p216
        %p364 = pneg %p247
        %p365 = pneg %p244
        %s366 = sand.u32 %s234, 1
        %s367 = scalar_lea.sflag [#allocation3], %s366
        %s368 = sand.u32 %s234, 1
        %s369 = smul.addr %s368, 512
        %s370 = scalar_lea.vmem [#allocation2], %s369
        %s371 = smul.u32 32, %s27
        %p372 = scmp.lt.s32.totalorder %s26, 1
        %s373 = scalar_select %p372, %s26, 1
        %p374 = scmp.lt.s32.totalorder %s371, 31
        %s375 = scalar_select %p374, %s371, 31
        %s376 = smul.addr %s375, 4
        %s377 = smul.addr %s373, 128
        %s378 = sadd.s32 %s376, %s377
        %s379 = smul.addr %s378, 4
        %s380 = scalar_lea.vmem %s0, %s379
        %s381 = smul.u32 32, %s27
        %s382 = smul.u32 %s27, 32
        %s383 = ssub.s32 %s382, 1
        %p384 = scmp.gt.s32.totalorder %s383, 0
        %s385 = scalar_select %p384, %s383, 0
        %p386 = scmp.lt.s32.totalorder %s26, 1
        %s387 = scalar_select %p386, %s26, 1
        %p388 = scmp.lt.s32.totalorder %s385, 31
        %s389 = scalar_select %p388, %s385, 31
        %s390 = smul.addr %s389, 4
        %s391 = smul.addr %s387, 128
        %s392 = sadd.s32 %s390, %s391
        %s393 = smul.addr %s392, 4
        %s394 = scalar_lea.vmem %s1, %s393
        %s395 = smul.u32 %s27, 32
        %s396 = ssub.s32 %s395, 1
        %p397 = scmp.gt.s32.totalorder %s396, 0
        %s398 = scalar_select %p397, %s396, 0
        %s399 = smul.u32 16, %s27
        %v401 = vld [vmem:[%s380] sm:$0xff]
        %v402 = vld [vmem:[%s380 + $0x8] sm:$0xff]
        %v403 = vld [vmem:[%s380 + $0x10] sm:$0xff]
        %v404 = vld [vmem:[%s380 + $0x18] sm:$0xff]
        %v405 = vld [vmem:[%s380 + $0x20] sm:$0xff]
        %v406 = vld [vmem:[%s380 + $0x28] sm:$0xff]
        %v407 = vld [vmem:[%s380 + $0x30] sm:$0xff]
        %v408 = vld [vmem:[%s380 + $0x38] sm:$0xff]
        %v409 = vld [vmem:[%s380 + $0x40] sm:$0xff]
        %v410 = vld [vmem:[%s380 + $0x48] sm:$0xff]
        %v411 = vld [vmem:[%s380 + $0x50] sm:$0xff]
        %v412 = vld [vmem:[%s380 + $0x58] sm:$0xff]
        %v413 = vld [vmem:[%s380 + $0x60] sm:$0xff]
        %v414 = vld [vmem:[%s380 + $0x68] sm:$0xff]
        %v415 = vld [vmem:[%s380 + $0x70] sm:$0xff]
        %v416 = vld [vmem:[%s380 + $0x78] sm:$0xff]
        %v417 = vld [vmem:[%s380 + $0x80] sm:$0xff]
        %v418 = vld [vmem:[%s380 + $0x88] sm:$0xff]
        %v419 = vld [vmem:[%s380 + $0x90] sm:$0xff]
        %v420 = vld [vmem:[%s380 + $0x98] sm:$0xff]
        %v421 = vld [vmem:[%s380 + $0xa0] sm:$0xff]
        %v422 = vld [vmem:[%s380 + $0xa8] sm:$0xff]
        %v423 = vld [vmem:[%s380 + $0xb0] sm:$0xff]
        %v424 = vld [vmem:[%s380 + $0xb8] sm:$0xff]
        %v425 = vld [vmem:[%s380 + $0xc0] sm:$0xff]
        %v426 = vld [vmem:[%s380 + $0xc8] sm:$0xff]
        %v427 = vld [vmem:[%s380 + $0xd0] sm:$0xff]
        %v428 = vld [vmem:[%s380 + $0xd8] sm:$0xff]
        %v429 = vld [vmem:[%s380 + $0xe0] sm:$0xff]
        %v430 = vld [vmem:[%s380 + $0xe8] sm:$0xff]
        %v431 = vld [vmem:[%s380 + $0xf0] sm:$0xff]
        %v432 = vld [vmem:[%s380 + $0xf8] sm:$0xff]
        %v433 = vld [vmem:[%s380 + $0x100] sm:$0xff]
        %v434 = vld [vmem:[%s380 + $0x108] sm:$0xff]
        %v435 = vld [vmem:[%s380 + $0x110] sm:$0xff]
        %v436 = vld [vmem:[%s380 + $0x118] sm:$0xff]
        %v437 = vld [vmem:[%s380 + $0x120] sm:$0xff]
        %v438 = vld [vmem:[%s380 + $0x128] sm:$0xff]
        %v439 = vld [vmem:[%s380 + $0x130] sm:$0xff]
        %v440 = vld [vmem:[%s380 + $0x138] sm:$0xff]
        %v441 = vld [vmem:[%s380 + $0x140] sm:$0xff]
        %v442 = vld [vmem:[%s380 + $0x148] sm:$0xff]
        %v443 = vld [vmem:[%s380 + $0x150] sm:$0xff]
        %v444 = vld [vmem:[%s380 + $0x158] sm:$0xff]
        %v445 = vld [vmem:[%s380 + $0x160] sm:$0xff]
        %v446 = vld [vmem:[%s380 + $0x168] sm:$0xff]
        %v447 = vld [vmem:[%s380 + $0x170] sm:$0xff]
        %v448 = vld [vmem:[%s380 + $0x178] sm:$0xff]
        %v449 = vld [vmem:[%s380 + $0x180] sm:$0xff]
        %v450 = vld [vmem:[%s380 + $0x188] sm:$0xff]
        %v451 = vld [vmem:[%s380 + $0x190] sm:$0xff]
        %v452 = vld [vmem:[%s380 + $0x198] sm:$0xff]
        %v453 = vld [vmem:[%s380 + $0x1a0] sm:$0xff]
        %v454 = vld [vmem:[%s380 + $0x1a8] sm:$0xff]
        %v455 = vld [vmem:[%s380 + $0x1b0] sm:$0xff]
        %v456 = vld [vmem:[%s380 + $0x1b8] sm:$0xff]
        %v457 = vld [vmem:[%s380 + $0x1c0] sm:$0xff]
        %v458 = vld [vmem:[%s380 + $0x1c8] sm:$0xff]
        %v459 = vld [vmem:[%s380 + $0x1d0] sm:$0xff]
        %v460 = vld [vmem:[%s380 + $0x1d8] sm:$0xff]
        %v461 = vld [vmem:[%s380 + $0x1e0] sm:$0xff]
        %v462 = vld [vmem:[%s380 + $0x1e8] sm:$0xff]
        %v463 = vld [vmem:[%s380 + $0x1f0] sm:$0xff]
        %v464 = vld [vmem:[%s380 + $0x1f8] sm:$0xff]
        %v465 = vld [vmem:[%s394] sm:$0xff]
        %v466 = vld [vmem:[%s394 + $0x8] sm:$0xff]
        %p467 = scmp.gt.s32.totalorder %s27, 0
        %s468 = scalar_select %p467, 1, 0
        %v469 = vstv %s468
        %vm470 = vcmp.eq.s32.totalorder %v469, 1
        %v471 = vsel %vm470, %v465, 0
        %v472 = vsel %vm470, %v466, 0
        %v473 = vld [vmem:[%s2] sm:$0xff]
        %v474 = vld [vmem:[%s2 + $0x8] sm:$0xff]
        %v475 = vld [vmem:[%s2 + $0x10] sm:$0xff]
        %v476 = vld [vmem:[%s2 + $0x18] sm:$0xff]
        %v477 = vld [vmem:[%s2 + $0x20] sm:$0xff]
        %v478 = vld [vmem:[%s2 + $0x28] sm:$0xff]
        %v479 = vld [vmem:[%s2 + $0x30] sm:$0xff]
        %v480 = vld [vmem:[%s2 + $0x38] sm:$0xff]
        %v481 = vld [vmem:[%s2 + $0x40] sm:$0xff]
        %v482 = vld [vmem:[%s2 + $0x48] sm:$0xff]
        %v483 = vld [vmem:[%s2 + $0x50] sm:$0xff]
        %v484 = vld [vmem:[%s2 + $0x58] sm:$0xff]
        %v485 = vld [vmem:[%s2 + $0x60] sm:$0xff]
        %v486 = vld [vmem:[%s2 + $0x68] sm:$0xff]
        %v487 = vld [vmem:[%s2 + $0x70] sm:$0xff]
        %v488 = vld [vmem:[%s2 + $0x78] sm:$0xff]
        %v489 = vld [vmem:[%s2 + $0x80] sm:$0xff]
        %v490 = vld [vmem:[%s2 + $0x88] sm:$0xff]
        %v491 = vld [vmem:[%s2 + $0x90] sm:$0xff]
        %v492 = vld [vmem:[%s2 + $0x98] sm:$0xff]
        %v493 = vld [vmem:[%s2 + $0xa0] sm:$0xff]
        %v494 = vld [vmem:[%s2 + $0xa8] sm:$0xff]
        %v495 = vld [vmem:[%s2 + $0xb0] sm:$0xff]
        %v496 = vld [vmem:[%s2 + $0xb8] sm:$0xff]
        %v497 = vld [vmem:[%s2 + $0xc0] sm:$0xff]
        %v498 = vld [vmem:[%s2 + $0xc8] sm:$0xff]
        %v499 = vld [vmem:[%s2 + $0xd0] sm:$0xff]
        %v500 = vld [vmem:[%s2 + $0xd8] sm:$0xff]
        %v501 = vld [vmem:[%s2 + $0xe0] sm:$0xff]
        %v502 = vld [vmem:[%s2 + $0xe8] sm:$0xff]
        %v503 = vld [vmem:[%s2 + $0xf0] sm:$0xff]
        %v504 = vld [vmem:[%s2 + $0xf8] sm:$0xff]
        %v505 = vld [vmem:[%s3] sm:$0x3]
        %v507 = vlaneseq
        %v508 = vshrl.u32 %v507, 7
        %v509 = vsub.s32 0, %v508
        %v510 = vrot.slane %v505, %v509
        %v511 = vlaneseq
        %v512 = vshrl.u32 %v511, 7
        %v513 = vsub.s32 1, %v512
        %v514 = vrot.slane %v505, %v513
        %v581 = vunpack.c.l.b16 %v401
        %v582 = vunpack.c.h.b16 %v401
        %v583 = vunpack.c.l.b16 %v402
        %v584 = vunpack.c.h.b16 %v402
        %v585 = vunpack.c.l.b16 %v403
        %v586 = vunpack.c.h.b16 %v403
        %v587 = vunpack.c.l.b16 %v404
        %v588 = vunpack.c.h.b16 %v404
        %v589 = vunpack.c.l.b16 %v405
        %v590 = vunpack.c.h.b16 %v405
        %v591 = vunpack.c.l.b16 %v406
        %v592 = vunpack.c.h.b16 %v406
        %v593 = vunpack.c.l.b16 %v407
        %v594 = vunpack.c.h.b16 %v407
        %v595 = vunpack.c.l.b16 %v408
        %v596 = vunpack.c.h.b16 %v408
        %v597 = vunpack.c.l.b16 %v409
        %v598 = vunpack.c.h.b16 %v409
        %v599 = vunpack.c.l.b16 %v410
        %v600 = vunpack.c.h.b16 %v410
        %v601 = vunpack.c.l.b16 %v411
        %v602 = vunpack.c.h.b16 %v411
        %v603 = vunpack.c.l.b16 %v412
        %v604 = vunpack.c.h.b16 %v412
        %v605 = vunpack.c.l.b16 %v413
        %v606 = vunpack.c.h.b16 %v413
        %v607 = vunpack.c.l.b16 %v414
        %v608 = vunpack.c.h.b16 %v414
        %v609 = vunpack.c.l.b16 %v415
        %v610 = vunpack.c.h.b16 %v415
        %v611 = vunpack.c.l.b16 %v416
        %v612 = vunpack.c.h.b16 %v416
        %v613 = vunpack.c.l.b16 %v417
        %v614 = vunpack.c.h.b16 %v417
        %v615 = vunpack.c.l.b16 %v418
        %v616 = vunpack.c.h.b16 %v418
        %v617 = vunpack.c.l.b16 %v419
        %v618 = vunpack.c.h.b16 %v419
        %v619 = vunpack.c.l.b16 %v420
        %v620 = vunpack.c.h.b16 %v420
        %v621 = vunpack.c.l.b16 %v421
        %v622 = vunpack.c.h.b16 %v421
        %v623 = vunpack.c.l.b16 %v422
        %v624 = vunpack.c.h.b16 %v422
        %v625 = vunpack.c.l.b16 %v423
        %v626 = vunpack.c.h.b16 %v423
        %v627 = vunpack.c.l.b16 %v424
        %v628 = vunpack.c.h.b16 %v424
        %v629 = vunpack.c.l.b16 %v425
        %v630 = vunpack.c.h.b16 %v425
        %v631 = vunpack.c.l.b16 %v426
        %v632 = vunpack.c.h.b16 %v426
        %v633 = vunpack.c.l.b16 %v427
        %v634 = vunpack.c.h.b16 %v427
        %v635 = vunpack.c.l.b16 %v428
        %v636 = vunpack.c.h.b16 %v428
        %v637 = vunpack.c.l.b16 %v429
        %v638 = vunpack.c.h.b16 %v429
        %v639 = vunpack.c.l.b16 %v430
        %v640 = vunpack.c.h.b16 %v430
        %v641 = vunpack.c.l.b16 %v431
        %v642 = vunpack.c.h.b16 %v431
        %v643 = vunpack.c.l.b16 %v432
        %v644 = vunpack.c.h.b16 %v432
        %v645 = vunpack.c.l.b16 %v433
        %v646 = vunpack.c.h.b16 %v433
        %v647 = vunpack.c.l.b16 %v434
        %v648 = vunpack.c.h.b16 %v434
        %v649 = vunpack.c.l.b16 %v435
        %v650 = vunpack.c.h.b16 %v435
        %v651 = vunpack.c.l.b16 %v436
        %v652 = vunpack.c.h.b16 %v436
        %v653 = vunpack.c.l.b16 %v437
        %v654 = vunpack.c.h.b16 %v437
        %v655 = vunpack.c.l.b16 %v438
        %v656 = vunpack.c.h.b16 %v438
        %v657 = vunpack.c.l.b16 %v439
        %v658 = vunpack.c.h.b16 %v439
        %v659 = vunpack.c.l.b16 %v440
        %v660 = vunpack.c.h.b16 %v440
        %v661 = vunpack.c.l.b16 %v441
        %v662 = vunpack.c.h.b16 %v441
        %v663 = vunpack.c.l.b16 %v442
        %v664 = vunpack.c.h.b16 %v442
        %v665 = vunpack.c.l.b16 %v443
        %v666 = vunpack.c.h.b16 %v443
        %v667 = vunpack.c.l.b16 %v444
        %v668 = vunpack.c.h.b16 %v444
        %v669 = vunpack.c.l.b16 %v445
        %v670 = vunpack.c.h.b16 %v445
        %v671 = vunpack.c.l.b16 %v446
        %v672 = vunpack.c.h.b16 %v446
        %v673 = vunpack.c.l.b16 %v447
        %v674 = vunpack.c.h.b16 %v447
        %v675 = vunpack.c.l.b16 %v448
        %v676 = vunpack.c.h.b16 %v448
        %v677 = vunpack.c.l.b16 %v449
        %v678 = vunpack.c.h.b16 %v449
        %v679 = vunpack.c.l.b16 %v450
        %v680 = vunpack.c.h.b16 %v450
        %v681 = vunpack.c.l.b16 %v451
        %v682 = vunpack.c.h.b16 %v451
        %v683 = vunpack.c.l.b16 %v452
        %v684 = vunpack.c.h.b16 %v452
        %v685 = vunpack.c.l.b16 %v453
        %v686 = vunpack.c.h.b16 %v453
        %v687 = vunpack.c.l.b16 %v454
        %v688 = vunpack.c.h.b16 %v454
        %v689 = vunpack.c.l.b16 %v455
        %v690 = vunpack.c.h.b16 %v455
        %v691 = vunpack.c.l.b16 %v456
        %v692 = vunpack.c.h.b16 %v456
        %v693 = vunpack.c.l.b16 %v457
        %v694 = vunpack.c.h.b16 %v457
        %v695 = vunpack.c.l.b16 %v458
        %v696 = vunpack.c.h.b16 %v458
        %v697 = vunpack.c.l.b16 %v459
        %v698 = vunpack.c.h.b16 %v459
        %v699 = vunpack.c.l.b16 %v460
        %v700 = vunpack.c.h.b16 %v460
        %v701 = vunpack.c.l.b16 %v461
        %v702 = vunpack.c.h.b16 %v461
        %v703 = vunpack.c.l.b16 %v462
        %v704 = vunpack.c.h.b16 %v462
        %v705 = vunpack.c.l.b16 %v463
        %v706 = vunpack.c.h.b16 %v463
        %v707 = vunpack.c.l.b16 %v464
        %v708 = vunpack.c.h.b16 %v464
        %v709 = vpack.c.b16 %v583, %v581
        %v710 = vpack.c.b16 %v584, %v582
        %v711 = vpack.c.b16 %v587, %v585
        %v712 = vpack.c.b16 %v588, %v586
        %v713 = vpack.c.b16 %v591, %v589
        %v714 = vpack.c.b16 %v592, %v590
        %v715 = vpack.c.b16 %v595, %v593
        %v716 = vpack.c.b16 %v596, %v594
        %v717 = vpack.c.b16 %v599, %v597
        %v718 = vpack.c.b16 %v600, %v598
        %v719 = vpack.c.b16 %v603, %v601
        %v720 = vpack.c.b16 %v604, %v602
        %v721 = vpack.c.b16 %v607, %v605
        %v722 = vpack.c.b16 %v608, %v606
        %v723 = vpack.c.b16 %v611, %v609
        %v724 = vpack.c.b16 %v612, %v610
        %v725 = vpack.c.b16 %v615, %v613
        %v726 = vpack.c.b16 %v616, %v614
        %v727 = vpack.c.b16 %v619, %v617
        %v728 = vpack.c.b16 %v620, %v618
        %v729 = vpack.c.b16 %v623, %v621
        %v730 = vpack.c.b16 %v624, %v622
        %v731 = vpack.c.b16 %v627, %v625
        %v732 = vpack.c.b16 %v628, %v626
        %v733 = vpack.c.b16 %v631, %v629
        %v734 = vpack.c.b16 %v632, %v630
        %v735 = vpack.c.b16 %v635, %v633
        %v736 = vpack.c.b16 %v636, %v634
        %v737 = vpack.c.b16 %v639, %v637
        %v738 = vpack.c.b16 %v640, %v638
        %v739 = vpack.c.b16 %v643, %v641
        %v740 = vpack.c.b16 %v644, %v642
        %v741 = vpack.c.b16 %v647, %v645
        %v742 = vpack.c.b16 %v648, %v646
        %v743 = vpack.c.b16 %v651, %v649
        %v744 = vpack.c.b16 %v652, %v650
        %v745 = vpack.c.b16 %v655, %v653
        %v746 = vpack.c.b16 %v656, %v654
        %v747 = vpack.c.b16 %v659, %v657
        %v748 = vpack.c.b16 %v660, %v658
        %v749 = vpack.c.b16 %v663, %v661
        %v750 = vpack.c.b16 %v664, %v662
        %v751 = vpack.c.b16 %v667, %v665
        %v752 = vpack.c.b16 %v668, %v666
        %v753 = vpack.c.b16 %v671, %v669
        %v754 = vpack.c.b16 %v672, %v670
        %v755 = vpack.c.b16 %v675, %v673
        %v756 = vpack.c.b16 %v676, %v674
        %v757 = vpack.c.b16 %v679, %v677
        %v758 = vpack.c.b16 %v680, %v678
        %v759 = vpack.c.b16 %v683, %v681
        %v760 = vpack.c.b16 %v684, %v682
        %v761 = vpack.c.b16 %v687, %v685
        %v762 = vpack.c.b16 %v688, %v686
        %v763 = vpack.c.b16 %v691, %v689
        %v764 = vpack.c.b16 %v692, %v690
        %v765 = vpack.c.b16 %v695, %v693
        %v766 = vpack.c.b16 %v696, %v694
        %v767 = vpack.c.b16 %v699, %v697
        %v768 = vpack.c.b16 %v700, %v698
        %v769 = vpack.c.b16 %v703, %v701
        %v770 = vpack.c.b16 %v704, %v702
        %v771 = vpack.c.b16 %v707, %v705
        %v772 = vpack.c.b16 %v708, %v706
        %v869 = vunpack.c.l.b16 %v473
        %v870 = vunpack.c.h.b16 %v473
        %v871 = vunpack.c.l.b16 %v474
        %v872 = vunpack.c.h.b16 %v474
        %v873 = vunpack.c.l.b16 %v475
        %v874 = vunpack.c.h.b16 %v475
        %v875 = vunpack.c.l.b16 %v476
        %v876 = vunpack.c.h.b16 %v476
        %v877 = vunpack.c.l.b16 %v477
        %v878 = vunpack.c.h.b16 %v477
        %v879 = vunpack.c.l.b16 %v478
        %v880 = vunpack.c.h.b16 %v478
        %v881 = vunpack.c.l.b16 %v479
        %v882 = vunpack.c.h.b16 %v479
        %v883 = vunpack.c.l.b16 %v480
        %v884 = vunpack.c.h.b16 %v480
        %v885 = vunpack.c.l.b16 %v481
        %v886 = vunpack.c.h.b16 %v481
        %v887 = vunpack.c.l.b16 %v482
        %v888 = vunpack.c.h.b16 %v482
        %v889 = vunpack.c.l.b16 %v483
        %v890 = vunpack.c.h.b16 %v483
        %v891 = vunpack.c.l.b16 %v484
        %v892 = vunpack.c.h.b16 %v484
        %v893 = vunpack.c.l.b16 %v485
        %v894 = vunpack.c.h.b16 %v485
        %v895 = vunpack.c.l.b16 %v486
        %v896 = vunpack.c.h.b16 %v486
        %v897 = vunpack.c.l.b16 %v487
        %v898 = vunpack.c.h.b16 %v487
        %v899 = vunpack.c.l.b16 %v488
        %v900 = vunpack.c.h.b16 %v488
        %v901 = vunpack.c.l.b16 %v489
        %v902 = vunpack.c.h.b16 %v489
        %v903 = vunpack.c.l.b16 %v490
        %v904 = vunpack.c.h.b16 %v490
        %v905 = vunpack.c.l.b16 %v491
        %v906 = vunpack.c.h.b16 %v491
        %v907 = vunpack.c.l.b16 %v492
        %v908 = vunpack.c.h.b16 %v492
        %v909 = vunpack.c.l.b16 %v493
        %v910 = vunpack.c.h.b16 %v493
        %v911 = vunpack.c.l.b16 %v494
        %v912 = vunpack.c.h.b16 %v494
        %v913 = vunpack.c.l.b16 %v495
        %v914 = vunpack.c.h.b16 %v495
        %v915 = vunpack.c.l.b16 %v496
        %v916 = vunpack.c.h.b16 %v496
        %v917 = vunpack.c.l.b16 %v497
        %v918 = vunpack.c.h.b16 %v497
        %v919 = vunpack.c.l.b16 %v498
        %v920 = vunpack.c.h.b16 %v498
        %v921 = vunpack.c.l.b16 %v499
        %v922 = vunpack.c.h.b16 %v499
        %v923 = vunpack.c.l.b16 %v500
        %v924 = vunpack.c.h.b16 %v500
        %v925 = vunpack.c.l.b16 %v501
        %v926 = vunpack.c.h.b16 %v501
        %v927 = vunpack.c.l.b16 %v502
        %v928 = vunpack.c.h.b16 %v502
        %v929 = vunpack.c.l.b16 %v503
        %v930 = vunpack.c.h.b16 %v503
        %v931 = vunpack.c.l.b16 %v504
        %v932 = vunpack.c.h.b16 %v504
        %v933 = vpack.c.b16 %v871, %v869
        %v934 = vpack.c.b16 %v872, %v870
        %v935 = vpack.c.b16 %v875, %v873
        %v936 = vpack.c.b16 %v876, %v874
        %v937 = vpack.c.b16 %v879, %v877
        %v938 = vpack.c.b16 %v880, %v878
        %v939 = vpack.c.b16 %v883, %v881
        %v940 = vpack.c.b16 %v884, %v882
        %v941 = vpack.c.b16 %v887, %v885
        %v942 = vpack.c.b16 %v888, %v886
        %v943 = vpack.c.b16 %v891, %v889
        %v944 = vpack.c.b16 %v892, %v890
        %v945 = vpack.c.b16 %v895, %v893
        %v946 = vpack.c.b16 %v896, %v894
        %v947 = vpack.c.b16 %v899, %v897
        %v948 = vpack.c.b16 %v900, %v898
        %v949 = vpack.c.b16 %v903, %v901
        %v950 = vpack.c.b16 %v904, %v902
        %v951 = vpack.c.b16 %v907, %v905
        %v952 = vpack.c.b16 %v908, %v906
        %v953 = vpack.c.b16 %v911, %v909
        %v954 = vpack.c.b16 %v912, %v910
        %v955 = vpack.c.b16 %v915, %v913
        %v956 = vpack.c.b16 %v916, %v914
        %v957 = vpack.c.b16 %v919, %v917
        %v958 = vpack.c.b16 %v920, %v918
        %v959 = vpack.c.b16 %v923, %v921
        %v960 = vpack.c.b16 %v924, %v922
        %v961 = vpack.c.b16 %v927, %v925
        %v962 = vpack.c.b16 %v928, %v926
        %v963 = vpack.c.b16 %v931, %v929
        %v964 = vpack.c.b16 %v932, %v930
        %997 = vmatprep.subr.bf16.mxu0 %v934
        %998 = vmatpush1.bf16.msra.mxu0 %v933
        %999 = vmatprep.subr.bf16.mxu0 %v936
        %1000 = vmatpush1.bf16.msra.mxu0 %v935
        %1001 = vmatprep.subr.bf16.mxu0 %v938
        %1002 = vmatpush1.bf16.msra.mxu0 %v937
        %1003 = vmatprep.subr.bf16.mxu0 %v940
        %1004 = vmatpush1.bf16.msra.mxu0 %v939
        %1005 = vmatprep.subr.bf16.mxu0 %v942
        %1006 = vmatpush1.bf16.msra.mxu0 %v941
        %1007 = vmatprep.subr.bf16.mxu0 %v944
        %1008 = vmatpush1.bf16.msra.mxu0 %v943
        %1009 = vmatprep.subr.bf16.mxu0 %v946
        %1010 = vmatpush1.bf16.msra.mxu0 %v945
        %1011 = vmatprep.subr.bf16.mxu0 %v948
        %1012 = vmatpush1.bf16.msra.mxu0 %v947
        %1013 = vmatprep.subr.bf16.mxu0 %v950
        %1014 = vmatpush1.bf16.msra.mxu0 %v949
        %1015 = vmatprep.subr.bf16.mxu0 %v952
        %1016 = vmatpush1.bf16.msra.mxu0 %v951
        %1017 = vmatprep.subr.bf16.mxu0 %v954
        %1018 = vmatpush1.bf16.msra.mxu0 %v953
        %1019 = vmatprep.subr.bf16.mxu0 %v956
        %1020 = vmatpush1.bf16.msra.mxu0 %v955
        %1021 = vmatprep.subr.bf16.mxu0 %v958
        %1022 = vmatpush1.bf16.msra.mxu0 %v957
        %1023 = vmatprep.subr.bf16.mxu0 %v960
        %1024 = vmatpush1.bf16.msra.mxu0 %v959
        %1025 = vmatprep.subr.bf16.mxu0 %v962
        %1026 = vmatpush1.bf16.msra.mxu0 %v961
        %1027 = vmatprep.subr.bf16.mxu0 %v964
        %1028 = vmatpush1.bf16.msra.mxu0 %v963
        %1029 = vmatprep.mubr.bf16.mxu0 %v710
        %1030 = vmatmul.mubr.bf16.gmra.mrb[0].mxu0 %v709
        %v1031 = vpop.f32.mrb[0].mxu0
        %v1032 = vadd.f32 %v510, %v1031
        %v1033 = vpop.f32.mrb[0].mxu0
        %v1034 = vadd.f32 %v514, %v1033
        %v1035 = vpop.f32.mrb[0].mxu0
        %v1036 = vadd.f32 %v510, %v1035
        %v1037 = vpop.f32.mrb[0].mxu0
        %v1038 = vadd.f32 %v514, %v1037
        %1039 = vmatprep.mubr.bf16.mxu0 %v712
        %1040 = vmatmul.mubr.bf16.gmra.mrb[0].mxu0 %v711
        %v1041 = vpop.f32.mrb[0].mxu0
        %v1042 = vadd.f32 %v510, %v1041
        %v1043 = vpop.f32.mrb[0].mxu0
        %v1044 = vadd.f32 %v514, %v1043
        %v1045 = vpop.f32.mrb[0].mxu0
        %v1046 = vadd.f32 %v510, %v1045
        %v1047 = vpop.f32.mrb[0].mxu0
        %v1048 = vadd.f32 %v514, %v1047
        %1049 = vmatprep.mubr.bf16.mxu0 %v714
        %1050 = vmatmul.mubr.bf16.gmra.mrb[0].mxu0 %v713
        %v1051 = vpop.f32.mrb[0].mxu0
        %v1052 = vadd.f32 %v510, %v1051
        %v1053 = vpop.f32.mrb[0].mxu0
        %v1054 = vadd.f32 %v514, %v1053
        %v1055 = vpop.f32.mrb[0].mxu0
        %v1056 = vadd.f32 %v510, %v1055
        %v1057 = vpop.f32.mrb[0].mxu0
        %v1058 = vadd.f32 %v514, %v1057
        %1059 = vmatprep.mubr.bf16.mxu0 %v716
        %1060 = vmatmul.mubr.bf16.gmra.mrb[0].mxu0 %v715
        %v1061 = vpop.f32.mrb[0].mxu0
        %v1062 = vadd.f32 %v510, %v1061
        %v1063 = vpop.f32.mrb[0].mxu0
        %v1064 = vadd.f32 %v514, %v1063
        %v1065 = vpop.f32.mrb[0].mxu0
        %v1066 = vadd.f32 %v510, %v1065
        %v1067 = vpop.f32.mrb[0].mxu0
        %v1068 = vadd.f32 %v514, %v1067
        %1069 = vmatprep.mubr.bf16.mxu0 %v718
        %1070 = vmatmul.mubr.bf16.gmra.mrb[0].mxu0 %v717
        %v1071 = vpop.f32.mrb[0].mxu0
        %v1072 = vadd.f32 %v510, %v1071
        %v1073 = vpop.f32.mrb[0].mxu0
        %v1074 = vadd.f32 %v514, %v1073
        %v1075 = vpop.f32.mrb[0].mxu0
        %v1076 = vadd.f32 %v510, %v1075
        %v1077 = vpop.f32.mrb[0].mxu0
        %v1078 = vadd.f32 %v514, %v1077
        %1079 = vmatprep.mubr.bf16.mxu0 %v720
        %1080 = vmatmul.mubr.bf16.gmra.mrb[0].mxu0 %v719
        %v1081 = vpop.f32.mrb[0].mxu0
        %v1082 = vadd.f32 %v510, %v1081
        %v1083 = vpop.f32.mrb[0].mxu0
        %v1084 = vadd.f32 %v514, %v1083
        %v1085 = vpop.f32.mrb[0].mxu0
        %v1086 = vadd.f32 %v510, %v1085
        %v1087 = vpop.f32.mrb[0].mxu0
        %v1088 = vadd.f32 %v514, %v1087
        %1089 = vmatprep.mubr.bf16.mxu0 %v722
        %1090 = vmatmul.mubr.bf16.gmra.mrb[0].mxu0 %v721
        %v1091 = vpop.f32.mrb[0].mxu0
        %v1092 = vadd.f32 %v510, %v1091
        %v1093 = vpop.f32.mrb[0].mxu0
        %v1094 = vadd.f32 %v514, %v1093
        %v1095 = vpop.f32.mrb[0].mxu0
        %v1096 = vadd.f32 %v510, %v1095
        %v1097 = vpop.f32.mrb[0].mxu0
        %v1098 = vadd.f32 %v514, %v1097
        %1099 = vmatprep.mubr.bf16.mxu0 %v724
        %1100 = vmatmul.mubr.bf16.gmra.mrb[0].mxu0 %v723
        %v1101 = vpop.f32.mrb[0].mxu0
        %v1102 = vadd.f32 %v510, %v1101
        %v1103 = vpop.f32.mrb[0].mxu0
        %v1104 = vadd.f32 %v514, %v1103
        %v1105 = vpop.f32.mrb[0].mxu0
        %v1106 = vadd.f32 %v510, %v1105
        %v1107 = vpop.f32.mrb[0].mxu0
        %v1108 = vadd.f32 %v514, %v1107
        %1109 = vmatprep.mubr.bf16.mxu0 %v726
        %1110 = vmatmul.mubr.bf16.gmra.mrb[0].mxu0 %v725
        %v1111 = vpop.f32.mrb[0].mxu0
        %v1112 = vadd.f32 %v510, %v1111
        %v1113 = vpop.f32.mrb[0].mxu0
        %v1114 = vadd.f32 %v514, %v1113
        %v1115 = vpop.f32.mrb[0].mxu0
        %v1116 = vadd.f32 %v510, %v1115
        %v1117 = vpop.f32.mrb[0].mxu0
        %v1118 = vadd.f32 %v514, %v1117
        %1119 = vmatprep.mubr.bf16.mxu0 %v728
        %1120 = vmatmul.mubr.bf16.gmra.mrb[0].mxu0 %v727
        %v1121 = vpop.f32.mrb[0].mxu0
        %v1122 = vadd.f32 %v510, %v1121
        %v1123 = vpop.f32.mrb[0].mxu0
        %v1124 = vadd.f32 %v514, %v1123
        %v1125 = vpop.f32.mrb[0].mxu0
        %v1126 = vadd.f32 %v510, %v1125
        %v1127 = vpop.f32.mrb[0].mxu0
        %v1128 = vadd.f32 %v514, %v1127
        %1129 = vmatprep.mubr.bf16.mxu0 %v730
        %1130 = vmatmul.mubr.bf16.gmra.mrb[0].mxu0 %v729
        %v1131 = vpop.f32.mrb[0].mxu0
        %v1132 = vadd.f32 %v510, %v1131
        %v1133 = vpop.f32.mrb[0].mxu0
        %v1134 = vadd.f32 %v514, %v1133
        %v1135 = vpop.f32.mrb[0].mxu0
        %v1136 = vadd.f32 %v510, %v1135
        %v1137 = vpop.f32.mrb[0].mxu0
        %v1138 = vadd.f32 %v514, %v1137
        %1139 = vmatprep.mubr.bf16.mxu0 %v732
        %1140 = vmatmul.mubr.bf16.gmra.mrb[0].mxu0 %v731
        %v1141 = vpop.f32.mrb[0].mxu0
        %v1142 = vadd.f32 %v510, %v1141
        %v1143 = vpop.f32.mrb[0].mxu0
        %v1144 = vadd.f32 %v514, %v1143
        %v1145 = vpop.f32.mrb[0].mxu0
        %v1146 = vadd.f32 %v510, %v1145
        %v1147 = vpop.f32.mrb[0].mxu0
        %v1148 = vadd.f32 %v514, %v1147
        %1149 = vmatprep.mubr.bf16.mxu0 %v734
        %1150 = vmatmul.mubr.bf16.gmra.mrb[0].mxu0 %v733
        %v1151 = vpop.f32.mrb[0].mxu0
        %v1152 = vadd.f32 %v510, %v1151
        %v1153 = vpop.f32.mrb[0].mxu0
        %v1154 = vadd.f32 %v514, %v1153
        %v1155 = vpop.f32.mrb[0].mxu0
        %v1156 = vadd.f32 %v510, %v1155
        %v1157 = vpop.f32.mrb[0].mxu0
        %v1158 = vadd.f32 %v514, %v1157
        %1159 = vmatprep.mubr.bf16.mxu0 %v736
        %1160 = vmatmul.mubr.bf16.gmra.mrb[0].mxu0 %v735
        %v1161 = vpop.f32.mrb[0].mxu0
        %v1162 = vadd.f32 %v510, %v1161
        %v1163 = vpop.f32.mrb[0].mxu0
        %v1164 = vadd.f32 %v514, %v1163
        %v1165 = vpop.f32.mrb[0].mxu0
        %v1166 = vadd.f32 %v510, %v1165
        %v1167 = vpop.f32.mrb[0].mxu0
        %v1168 = vadd.f32 %v514, %v1167
        %1169 = vmatprep.mubr.bf16.mxu0 %v738
        %1170 = vmatmul.mubr.bf16.gmra.mrb[0].mxu0 %v737
        %v1171 = vpop.f32.mrb[0].mxu0
        %v1172 = vadd.f32 %v510, %v1171
        %v1173 = vpop.f32.mrb[0].mxu0
        %v1174 = vadd.f32 %v514, %v1173
        %v1175 = vpop.f32.mrb[0].mxu0
        %v1176 = vadd.f32 %v510, %v1175
        %v1177 = vpop.f32.mrb[0].mxu0
        %v1178 = vadd.f32 %v514, %v1177
        %1179 = vmatprep.mubr.bf16.mxu0 %v740
        %1180 = vmatmul.mubr.bf16.gmra.mrb[0].mxu0 %v739
        %v1181 = vpop.f32.mrb[0].mxu0
        %v1182 = vadd.f32 %v510, %v1181
        %v1183 = vpop.f32.mrb[0].mxu0
        %v1184 = vadd.f32 %v514, %v1183
        %v1185 = vpop.f32.mrb[0].mxu0
        %v1186 = vadd.f32 %v510, %v1185
        %v1187 = vpop.f32.mrb[0].mxu0
        %v1188 = vadd.f32 %v514, %v1187
        %1189 = vmatprep.mubr.bf16.mxu0 %v742
        %1190 = vmatmul.mubr.bf16.gmra.mrb[0].mxu0 %v741
        %v1191 = vpop.f32.mrb[0].mxu0
        %v1192 = vadd.f32 %v510, %v1191
        %v1193 = vpop.f32.mrb[0].mxu0
        %v1194 = vadd.f32 %v514, %v1193
        %v1195 = vpop.f32.mrb[0].mxu0
        %v1196 = vadd.f32 %v510, %v1195
        %v1197 = vpop.f32.mrb[0].mxu0
        %v1198 = vadd.f32 %v514, %v1197
        %1199 = vmatprep.mubr.bf16.mxu0 %v744
        %1200 = vmatmul.mubr.bf16.gmra.mrb[0].mxu0 %v743
        %v1201 = vpop.f32.mrb[0].mxu0
        %v1202 = vadd.f32 %v510, %v1201
        %v1203 = vpop.f32.mrb[0].mxu0
        %v1204 = vadd.f32 %v514, %v1203
        %v1205 = vpop.f32.mrb[0].mxu0
        %v1206 = vadd.f32 %v510, %v1205
        %v1207 = vpop.f32.mrb[0].mxu0
        %v1208 = vadd.f32 %v514, %v1207
        %1209 = vmatprep.mubr.bf16.mxu0 %v746
        %1210 = vmatmul.mubr.bf16.gmra.mrb[0].mxu0 %v745
        %v1211 = vpop.f32.mrb[0].mxu0
        %v1212 = vadd.f32 %v510, %v1211
        %v1213 = vpop.f32.mrb[0].mxu0
        %v1214 = vadd.f32 %v514, %v1213
        %v1215 = vpop.f32.mrb[0].mxu0
        %v1216 = vadd.f32 %v510, %v1215
        %v1217 = vpop.f32.mrb[0].mxu0
        %v1218 = vadd.f32 %v514, %v1217
        %1219 = vmatprep.mubr.bf16.mxu0 %v748
        %1220 = vmatmul.mubr.bf16.gmra.mrb[0].mxu0 %v747
        %v1221 = vpop.f32.mrb[0].mxu0
        %v1222 = vadd.f32 %v510, %v1221
        %v1223 = vpop.f32.mrb[0].mxu0
        %v1224 = vadd.f32 %v514, %v1223
        %v1225 = vpop.f32.mrb[0].mxu0
        %v1226 = vadd.f32 %v510, %v1225
        %v1227 = vpop.f32.mrb[0].mxu0
        %v1228 = vadd.f32 %v514, %v1227
        %1229 = vmatprep.mubr.bf16.mxu0 %v750
        %1230 = vmatmul.mubr.bf16.gmra.mrb[0].mxu0 %v749
        %v1231 = vpop.f32.mrb[0].mxu0
        %v1232 = vadd.f32 %v510, %v1231
        %v1233 = vpop.f32.mrb[0].mxu0
        %v1234 = vadd.f32 %v514, %v1233
        %v1235 = vpop.f32.mrb[0].mxu0
        %v1236 = vadd.f32 %v510, %v1235
        %v1237 = vpop.f32.mrb[0].mxu0
        %v1238 = vadd.f32 %v514, %v1237
        %1239 = vmatprep.mubr.bf16.mxu0 %v752
        %1240 = vmatmul.mubr.bf16.gmra.mrb[0].mxu0 %v751
        %v1241 = vpop.f32.mrb[0].mxu0
        %v1242 = vadd.f32 %v510, %v1241
        %v1243 = vpop.f32.mrb[0].mxu0
        %v1244 = vadd.f32 %v514, %v1243
        %v1245 = vpop.f32.mrb[0].mxu0
        %v1246 = vadd.f32 %v510, %v1245
        %v1247 = vpop.f32.mrb[0].mxu0
        %v1248 = vadd.f32 %v514, %v1247
        %1249 = vmatprep.mubr.bf16.mxu0 %v754
        %1250 = vmatmul.mubr.bf16.gmra.mrb[0].mxu0 %v753
        %v1251 = vpop.f32.mrb[0].mxu0
        %v1252 = vadd.f32 %v510, %v1251
        %v1253 = vpop.f32.mrb[0].mxu0
        %v1254 = vadd.f32 %v514, %v1253
        %v1255 = vpop.f32.mrb[0].mxu0
        %v1256 = vadd.f32 %v510, %v1255
        %v1257 = vpop.f32.mrb[0].mxu0
        %v1258 = vadd.f32 %v514, %v1257
        %1259 = vmatprep.mubr.bf16.mxu0 %v756
        %1260 = vmatmul.mubr.bf16.gmra.mrb[0].mxu0 %v755
        %v1261 = vpop.f32.mrb[0].mxu0
        %v1262 = vadd.f32 %v510, %v1261
        %v1263 = vpop.f32.mrb[0].mxu0
        %v1264 = vadd.f32 %v514, %v1263
        %v1265 = vpop.f32.mrb[0].mxu0
        %v1266 = vadd.f32 %v510, %v1265
        %v1267 = vpop.f32.mrb[0].mxu0
        %v1268 = vadd.f32 %v514, %v1267
        %1269 = vmatprep.mubr.bf16.mxu0 %v758
        %1270 = vmatmul.mubr.bf16.gmra.mrb[0].mxu0 %v757
        %v1271 = vpop.f32.mrb[0].mxu0
        %v1272 = vadd.f32 %v510, %v1271
        %v1273 = vpop.f32.mrb[0].mxu0
        %v1274 = vadd.f32 %v514, %v1273
        %v1275 = vpop.f32.mrb[0].mxu0
        %v1276 = vadd.f32 %v510, %v1275
        %v1277 = vpop.f32.mrb[0].mxu0
        %v1278 = vadd.f32 %v514, %v1277
        %1279 = vmatprep.mubr.bf16.mxu0 %v760
        %1280 = vmatmul.mubr.bf16.gmra.mrb[0].mxu0 %v759
        %v1281 = vpop.f32.mrb[0].mxu0
        %v1282 = vadd.f32 %v510, %v1281
        %v1283 = vpop.f32.mrb[0].mxu0
        %v1284 = vadd.f32 %v514, %v1283
        %v1285 = vpop.f32.mrb[0].mxu0
        %v1286 = vadd.f32 %v510, %v1285
        %v1287 = vpop.f32.mrb[0].mxu0
        %v1288 = vadd.f32 %v514, %v1287
        %1289 = vmatprep.mubr.bf16.mxu0 %v762
        %1290 = vmatmul.mubr.bf16.gmra.mrb[0].mxu0 %v761
        %v1291 = vpop.f32.mrb[0].mxu0
        %v1292 = vadd.f32 %v510, %v1291
        %v1293 = vpop.f32.mrb[0].mxu0
        %v1294 = vadd.f32 %v514, %v1293
        %v1295 = vpop.f32.mrb[0].mxu0
        %v1296 = vadd.f32 %v510, %v1295
        %v1297 = vpop.f32.mrb[0].mxu0
        %v1298 = vadd.f32 %v514, %v1297
        %1299 = vmatprep.mubr.bf16.mxu0 %v764
        %1300 = vmatmul.mubr.bf16.gmra.mrb[0].mxu0 %v763
        %v1301 = vpop.f32.mrb[0].mxu0
        %v1302 = vadd.f32 %v510, %v1301
        %v1303 = vpop.f32.mrb[0].mxu0
        %v1304 = vadd.f32 %v514, %v1303
        %v1305 = vpop.f32.mrb[0].mxu0
        %v1306 = vadd.f32 %v510, %v1305
        %v1307 = vpop.f32.mrb[0].mxu0
        %v1308 = vadd.f32 %v514, %v1307
        %1309 = vmatprep.mubr.bf16.mxu0 %v766
        %1310 = vmatmul.mubr.bf16.gmra.mrb[0].mxu0 %v765
        %v1311 = vpop.f32.mrb[0].mxu0
        %v1312 = vadd.f32 %v510, %v1311
        %v1313 = vpop.f32.mrb[0].mxu0
        %v1314 = vadd.f32 %v514, %v1313
        %v1315 = vpop.f32.mrb[0].mxu0
        %v1316 = vadd.f32 %v510, %v1315
        %v1317 = vpop.f32.mrb[0].mxu0
        %v1318 = vadd.f32 %v514, %v1317
        %1319 = vmatprep.mubr.bf16.mxu0 %v768
        %1320 = vmatmul.mubr.bf16.gmra.mrb[0].mxu0 %v767
        %v1321 = vpop.f32.mrb[0].mxu0
        %v1322 = vadd.f32 %v510, %v1321
        %v1323 = vpop.f32.mrb[0].mxu0
        %v1324 = vadd.f32 %v514, %v1323
        %v1325 = vpop.f32.mrb[0].mxu0
        %v1326 = vadd.f32 %v510, %v1325
        %v1327 = vpop.f32.mrb[0].mxu0
        %v1328 = vadd.f32 %v514, %v1327
        %1329 = vmatprep.mubr.bf16.mxu0 %v770
        %1330 = vmatmul.mubr.bf16.gmra.mrb[0].mxu0 %v769
        %v1331 = vpop.f32.mrb[0].mxu0
        %v1332 = vadd.f32 %v510, %v1331
        %v1333 = vpop.f32.mrb[0].mxu0
        %v1334 = vadd.f32 %v514, %v1333
        %v1335 = vpop.f32.mrb[0].mxu0
        %v1336 = vadd.f32 %v510, %v1335
        %v1337 = vpop.f32.mrb[0].mxu0
        %v1338 = vadd.f32 %v514, %v1337
        %1339 = vmatprep.mubr.bf16.mxu0 %v772
        %1340 = vmatmul.mubr.bf16.gmra.mrb[0].mxu0 %v771
        %v1341 = vpop.f32.mrb[0].mxu0
        %v1342 = vadd.f32 %v510, %v1341
        %v1343 = vpop.f32.mrb[0].mxu0
        %v1344 = vadd.f32 %v514, %v1343
        %v1345 = vpop.f32.mrb[0].mxu0
        %v1346 = vadd.f32 %v510, %v1345
        %v1347 = vpop.f32.mrb[0].mxu0
        %v1348 = vadd.f32 %v514, %v1347
        %1349 = vdwg.mxu0
        %v1350 = vmax.f32 %v1032, 0.0
        %v1351 = vmax.f32 %v1034, 0.0
        %v1352 = vmax.f32 %v1036, 0.0
        %v1353 = vmax.f32 %v1038, 0.0
        %v1354 = vmax.f32 %v1042, 0.0
        %v1355 = vmax.f32 %v1044, 0.0
        %v1356 = vmax.f32 %v1046, 0.0
        %v1357 = vmax.f32 %v1048, 0.0
        %v1358 = vmax.f32 %v1052, 0.0
        %v1359 = vmax.f32 %v1054, 0.0
        %v1360 = vmax.f32 %v1056, 0.0
        %v1361 = vmax.f32 %v1058, 0.0
        %v1362 = vmax.f32 %v1062, 0.0
        %v1363 = vmax.f32 %v1064, 0.0
        %v1364 = vmax.f32 %v1066, 0.0
        %v1365 = vmax.f32 %v1068, 0.0
        %v1366 = vmax.f32 %v1072, 0.0
        %v1367 = vmax.f32 %v1074, 0.0
        %v1368 = vmax.f32 %v1076, 0.0
        %v1369 = vmax.f32 %v1078, 0.0
        %v1370 = vmax.f32 %v1082, 0.0
        %v1371 = vmax.f32 %v1084, 0.0
        %v1372 = vmax.f32 %v1086, 0.0
        %v1373 = vmax.f32 %v1088, 0.0
        %v1374 = vmax.f32 %v1092, 0.0
        %v1375 = vmax.f32 %v1094, 0.0
        %v1376 = vmax.f32 %v1096, 0.0
        %v1377 = vmax.f32 %v1098, 0.0
        %v1378 = vmax.f32 %v1102, 0.0
        %v1379 = vmax.f32 %v1104, 0.0
        %v1380 = vmax.f32 %v1106, 0.0
        %v1381 = vmax.f32 %v1108, 0.0
        %v1382 = vmax.f32 %v1112, 0.0
        %v1383 = vmax.f32 %v1114, 0.0
        %v1384 = vmax.f32 %v1116, 0.0
        %v1385 = vmax.f32 %v1118, 0.0
        %v1386 = vmax.f32 %v1122, 0.0
        %v1387 = vmax.f32 %v1124, 0.0
        %v1388 = vmax.f32 %v1126, 0.0
        %v1389 = vmax.f32 %v1128, 0.0
        %v1390 = vmax.f32 %v1132, 0.0
        %v1391 = vmax.f32 %v1134, 0.0
        %v1392 = vmax.f32 %v1136, 0.0
        %v1393 = vmax.f32 %v1138, 0.0
        %v1394 = vmax.f32 %v1142, 0.0
        %v1395 = vmax.f32 %v1144, 0.0
        %v1396 = vmax.f32 %v1146, 0.0
        %v1397 = vmax.f32 %v1148, 0.0
        %v1398 = vmax.f32 %v1152, 0.0
        %v1399 = vmax.f32 %v1154, 0.0
        %v1400 = vmax.f32 %v1156, 0.0
        %v1401 = vmax.f32 %v1158, 0.0
        %v1402 = vmax.f32 %v1162, 0.0
        %v1403 = vmax.f32 %v1164, 0.0
        %v1404 = vmax.f32 %v1166, 0.0
        %v1405 = vmax.f32 %v1168, 0.0
        %v1406 = vmax.f32 %v1172, 0.0
        %v1407 = vmax.f32 %v1174, 0.0
        %v1408 = vmax.f32 %v1176, 0.0
        %v1409 = vmax.f32 %v1178, 0.0
        %v1410 = vmax.f32 %v1182, 0.0
        %v1411 = vmax.f32 %v1184, 0.0
        %v1412 = vmax.f32 %v1186, 0.0
        %v1413 = vmax.f32 %v1188, 0.0
        %v1414 = vmax.f32 %v1192, 0.0
        %v1415 = vmax.f32 %v1194, 0.0
        %v1416 = vmax.f32 %v1196, 0.0
        %v1417 = vmax.f32 %v1198, 0.0
        %v1418 = vmax.f32 %v1202, 0.0
        %v1419 = vmax.f32 %v1204, 0.0
        %v1420 = vmax.f32 %v1206, 0.0
        %v1421 = vmax.f32 %v1208, 0.0
        %v1422 = vmax.f32 %v1212, 0.0
        %v1423 = vmax.f32 %v1214, 0.0
        %v1424 = vmax.f32 %v1216, 0.0
        %v1425 = vmax.f32 %v1218, 0.0
        %v1426 = vmax.f32 %v1222, 0.0
        %v1427 = vmax.f32 %v1224, 0.0
        %v1428 = vmax.f32 %v1226, 0.0
        %v1429 = vmax.f32 %v1228, 0.0
        %v1430 = vmax.f32 %v1232, 0.0
        %v1431 = vmax.f32 %v1234, 0.0
        %v1432 = vmax.f32 %v1236, 0.0
        %v1433 = vmax.f32 %v1238, 0.0
        %v1434 = vmax.f32 %v1242, 0.0
        %v1435 = vmax.f32 %v1244, 0.0
        %v1436 = vmax.f32 %v1246, 0.0
        %v1437 = vmax.f32 %v1248, 0.0
        %v1438 = vmax.f32 %v1252, 0.0
        %v1439 = vmax.f32 %v1254, 0.0
        %v1440 = vmax.f32 %v1256, 0.0
        %v1441 = vmax.f32 %v1258, 0.0
        %v1442 = vmax.f32 %v1262, 0.0
        %v1443 = vmax.f32 %v1264, 0.0
        %v1444 = vmax.f32 %v1266, 0.0
        %v1445 = vmax.f32 %v1268, 0.0
        %v1446 = vmax.f32 %v1272, 0.0
        %v1447 = vmax.f32 %v1274, 0.0
        %v1448 = vmax.f32 %v1276, 0.0
        %v1449 = vmax.f32 %v1278, 0.0
        %v1450 = vmax.f32 %v1282, 0.0
        %v1451 = vmax.f32 %v1284, 0.0
        %v1452 = vmax.f32 %v1286, 0.0
        %v1453 = vmax.f32 %v1288, 0.0
        %v1454 = vmax.f32 %v1292, 0.0
        %v1455 = vmax.f32 %v1294, 0.0
        %v1456 = vmax.f32 %v1296, 0.0
        %v1457 = vmax.f32 %v1298, 0.0
        %v1458 = vmax.f32 %v1302, 0.0
        %v1459 = vmax.f32 %v1304, 0.0
        %v1460 = vmax.f32 %v1306, 0.0
        %v1461 = vmax.f32 %v1308, 0.0
        %v1462 = vmax.f32 %v1312, 0.0
        %v1463 = vmax.f32 %v1314, 0.0
        %v1464 = vmax.f32 %v1316, 0.0
        %v1465 = vmax.f32 %v1318, 0.0
        %v1466 = vmax.f32 %v1322, 0.0
        %v1467 = vmax.f32 %v1324, 0.0
        %v1468 = vmax.f32 %v1326, 0.0
        %v1469 = vmax.f32 %v1328, 0.0
        %v1470 = vmax.f32 %v1332, 0.0
        %v1471 = vmax.f32 %v1334, 0.0
        %v1472 = vmax.f32 %v1336, 0.0
        %v1473 = vmax.f32 %v1338, 0.0
        %v1474 = vmax.f32 %v1342, 0.0
        %v1475 = vmax.f32 %v1344, 0.0
        %v1476 = vmax.f32 %v1346, 0.0
        %v1477 = vmax.f32 %v1348, 0.0
        %v1478 = vpack.c.bf16 %v1352, %v1350
        %v1479 = vpack.c.bf16 %v1353, %v1351
        %v1480 = vpack.c.bf16 %v1356, %v1354
        %v1481 = vpack.c.bf16 %v1357, %v1355
        %v1482 = vpack.c.bf16 %v1360, %v1358
        %v1483 = vpack.c.bf16 %v1361, %v1359
        %v1484 = vpack.c.bf16 %v1364, %v1362
        %v1485 = vpack.c.bf16 %v1365, %v1363
        %v1486 = vpack.c.bf16 %v1368, %v1366
        %v1487 = vpack.c.bf16 %v1369, %v1367
        %v1488 = vpack.c.bf16 %v1372, %v1370
        %v1489 = vpack.c.bf16 %v1373, %v1371
        %v1490 = vpack.c.bf16 %v1376, %v1374
        %v1491 = vpack.c.bf16 %v1377, %v1375
        %v1492 = vpack.c.bf16 %v1380, %v1378
        %v1493 = vpack.c.bf16 %v1381, %v1379
        %v1494 = vpack.c.bf16 %v1384, %v1382
        %v1495 = vpack.c.bf16 %v1385, %v1383
        %v1496 = vpack.c.bf16 %v1388, %v1386
        %v1497 = vpack.c.bf16 %v1389, %v1387
        %v1498 = vpack.c.bf16 %v1392, %v1390
        %v1499 = vpack.c.bf16 %v1393, %v1391
        %v1500 = vpack.c.bf16 %v1396, %v1394
        %v1501 = vpack.c.bf16 %v1397, %v1395
        %v1502 = vpack.c.bf16 %v1400, %v1398
        %v1503 = vpack.c.bf16 %v1401, %v1399
        %v1504 = vpack.c.bf16 %v1404, %v1402
        %v1505 = vpack.c.bf16 %v1405, %v1403
        %v1506 = vpack.c.bf16 %v1408, %v1406
        %v1507 = vpack.c.bf16 %v1409, %v1407
        %v1508 = vpack.c.bf16 %v1412, %v1410
        %v1509 = vpack.c.bf16 %v1413, %v1411
        %v1510 = vpack.c.bf16 %v1416, %v1414
        %v1511 = vpack.c.bf16 %v1417, %v1415
        %v1512 = vpack.c.bf16 %v1420, %v1418
        %v1513 = vpack.c.bf16 %v1421, %v1419
        %v1514 = vpack.c.bf16 %v1424, %v1422
        %v1515 = vpack.c.bf16 %v1425, %v1423
        %v1516 = vpack.c.bf16 %v1428, %v1426
        %v1517 = vpack.c.bf16 %v1429, %v1427
        %v1518 = vpack.c.bf16 %v1432, %v1430
        %v1519 = vpack.c.bf16 %v1433, %v1431
        %v1520 = vpack.c.bf16 %v1436, %v1434
        %v1521 = vpack.c.bf16 %v1437, %v1435
        %v1522 = vpack.c.bf16 %v1440, %v1438
        %v1523 = vpack.c.bf16 %v1441, %v1439
        %v1524 = vpack.c.bf16 %v1444, %v1442
        %v1525 = vpack.c.bf16 %v1445, %v1443
        %v1526 = vpack.c.bf16 %v1448, %v1446
        %v1527 = vpack.c.bf16 %v1449, %v1447
        %v1528 = vpack.c.bf16 %v1452, %v1450
        %v1529 = vpack.c.bf16 %v1453, %v1451
        %v1530 = vpack.c.bf16 %v1456, %v1454
        %v1531 = vpack.c.bf16 %v1457, %v1455
        %v1532 = vpack.c.bf16 %v1460, %v1458
        %v1533 = vpack.c.bf16 %v1461, %v1459
        %v1534 = vpack.c.bf16 %v1464, %v1462
        %v1535 = vpack.c.bf16 %v1465, %v1463
        %v1536 = vpack.c.bf16 %v1468, %v1466
        %v1537 = vpack.c.bf16 %v1469, %v1467
        %v1538 = vpack.c.bf16 %v1472, %v1470
        %v1539 = vpack.c.bf16 %v1473, %v1471
        %v1540 = vpack.c.bf16 %v1476, %v1474
        %v1541 = vpack.c.bf16 %v1477, %v1475
        %v1544 = vunpack.c.l.b16 %v471
        %v1545 = vunpack.c.h.b16 %v471
        %v1546 = vunpack.c.l.b16 %v472
        %v1547 = vunpack.c.h.b16 %v472
        %v1548 = vpack.c.b16 %v1546, %v1544
        %v1549 = vpack.c.b16 %v1547, %v1545
        %1552 = vmatprep.subr.bf16.mxu0 %v934
        %1553 = vmatpush1.bf16.msra.mxu0 %v933
        %1554 = vmatprep.subr.bf16.mxu0 %v936
        %1555 = vmatpush1.bf16.msra.mxu0 %v935
        %1556 = vmatprep.subr.bf16.mxu0 %v938
        %1557 = vmatpush1.bf16.msra.mxu0 %v937
        %1558 = vmatprep.subr.bf16.mxu0 %v940
        %1559 = vmatpush1.bf16.msra.mxu0 %v939
        %1560 = vmatprep.subr.bf16.mxu0 %v942
        %1561 = vmatpush1.bf16.msra.mxu0 %v941
        %1562 = vmatprep.subr.bf16.mxu0 %v944
        %1563 = vmatpush1.bf16.msra.mxu0 %v943
        %1564 = vmatprep.subr.bf16.mxu0 %v946
        %1565 = vmatpush1.bf16.msra.mxu0 %v945
        %1566 = vmatprep.subr.bf16.mxu0 %v948
        %1567 = vmatpush1.bf16.msra.mxu0 %v947
        %1568 = vmatprep.subr.bf16.mxu0 %v950
        %1569 = vmatpush1.bf16.msra.mxu0 %v949
        %1570 = vmatprep.subr.bf16.mxu0 %v952
        %1571 = vmatpush1.bf16.msra.mxu0 %v951
        %1572 = vmatprep.subr.bf16.mxu0 %v954
        %1573 = vmatpush1.bf16.msra.mxu0 %v953
        %1574 = vmatprep.subr.bf16.mxu0 %v956
        %1575 = vmatpush1.bf16.msra.mxu0 %v955
        %1576 = vmatprep.subr.bf16.mxu0 %v958
        %1577 = vmatpush1.bf16.msra.mxu0 %v957
        %1578 = vmatprep.subr.bf16.mxu0 %v960
        %1579 = vmatpush1.bf16.msra.mxu0 %v959
        %1580 = vmatprep.subr.bf16.mxu0 %v962
        %1581 = vmatpush1.bf16.msra.mxu0 %v961
        %1582 = vmatprep.subr.bf16.mxu0 %v964
        %1583 = vmatpush1.bf16.msra.mxu0 %v963
        %1584 = vmatprep.mubr.bf16.mxu0 %v1549
        %1585 = vmatmul.mubr.bf16.gmra.mrb[0].mxu0 %v1548
        %v1586 = vpop.f32.mrb[0].mxu0
        %v1587 = vadd.f32 %v510, %v1586
        %v1588 = vpop.f32.mrb[0].mxu0
        %v1589 = vadd.f32 %v514, %v1588
        %v1590 = vpop.f32.mrb[0].mxu0
        %v1591 = vadd.f32 %v510, %v1590
        %v1592 = vpop.f32.mrb[0].mxu0
        %v1593 = vadd.f32 %v514, %v1592
        %1594 = vdwg.mxu0
        %v1595 = vmax.f32 %v1587, 0.0
        %v1596 = vmax.f32 %v1589, 0.0
        %v1597 = vmax.f32 %v1591, 0.0
        %v1598 = vmax.f32 %v1593, 0.0
        %v1599 = vsel %vm470, %v1595, 0.0
        %v1600 = vsel %vm470, %v1596, 0.0
        %v1601 = vsel %vm470, %v1597, 0.0
        %v1602 = vsel %vm470, %v1598, 0.0
        %v1603 = vpack.c.bf16 %v1601, %v1599
        %v1604 = vpack.c.bf16 %v1602, %v1600
        %v1605 = vld [vmem:[%s4] sm:$0xff]
        %v1606 = vld [vmem:[%s4 + $0x8] sm:$0x1]
        %v1607 = vld [vmem:[%s5] sm:$0xff]
        %v1608 = vld [vmem:[%s5 + $0x8] sm:$0x1]
        %v1610 = vshrl.u32 %v1549, 16
        %v1612 = vrot.slane %v1610, 7
        %v1613 = vshll.u32 %v1549, 16
        %v1615 = vor.u32 %v1612, %v1613
        %v1617 = vshrl.u32 %v712, 16
        %v1619 = vrot.slane %v1617, 7
        %v1620 = vshll.u32 %v712, 16
        %v1622 = vor.u32 %v1619, %v1620
        %v1624 = vshrl.u32 %v716, 16
        %v1626 = vrot.slane %v1624, 7
        %v1627 = vshll.u32 %v716, 16
        %v1629 = vor.u32 %v1626, %v1627
        %v1631 = vshrl.u32 %v720, 16
        %v1633 = vrot.slane %v1631, 7
        %v1634 = vshll.u32 %v720, 16
        %v1636 = vor.u32 %v1633, %v1634
        %v1638 = vshrl.u32 %v724, 16
        %v1640 = vrot.slane %v1638, 7
        %v1641 = vshll.u32 %v724, 16
        %v1643 = vor.u32 %v1640, %v1641
        %v1645 = vshrl.u32 %v728, 16
        %v1647 = vrot.slane %v1645, 7
        %v1648 = vshll.u32 %v728, 16
        %v1650 = vor.u32 %v1647, %v1648
        %v1652 = vshrl.u32 %v732, 16
        %v1654 = vrot.slane %v1652, 7
        %v1655 = vshll.u32 %v732, 16
        %v1657 = vor.u32 %v1654, %v1655
        %v1659 = vshrl.u32 %v736, 16
        %v1661 = vrot.slane %v1659, 7
        %v1662 = vshll.u32 %v736, 16
        %v1664 = vor.u32 %v1661, %v1662
        %v1666 = vshrl.u32 %v740, 16
        %v1668 = vrot.slane %v1666, 7
        %v1669 = vshll.u32 %v740, 16
        %v1671 = vor.u32 %v1668, %v1669
        %v1673 = vshrl.u32 %v744, 16
        %v1675 = vrot.slane %v1673, 7
        %v1676 = vshll.u32 %v744, 16
        %v1678 = vor.u32 %v1675, %v1676
        %v1680 = vshrl.u32 %v748, 16
        %v1682 = vrot.slane %v1680, 7
        %v1683 = vshll.u32 %v748, 16
        %v1685 = vor.u32 %v1682, %v1683
        %v1687 = vshrl.u32 %v752, 16
        %v1689 = vrot.slane %v1687, 7
        %v1690 = vshll.u32 %v752, 16
        %v1692 = vor.u32 %v1689, %v1690
        %v1694 = vshrl.u32 %v756, 16
        %v1696 = vrot.slane %v1694, 7
        %v1697 = vshll.u32 %v756, 16
        %v1699 = vor.u32 %v1696, %v1697
        %v1701 = vshrl.u32 %v760, 16
        %v1703 = vrot.slane %v1701, 7
        %v1704 = vshll.u32 %v760, 16
        %v1706 = vor.u32 %v1703, %v1704
        %v1708 = vshrl.u32 %v764, 16
        %v1710 = vrot.slane %v1708, 7
        %v1711 = vshll.u32 %v764, 16
        %v1713 = vor.u32 %v1710, %v1711
        %v1715 = vshrl.u32 %v768, 16
        %v1717 = vrot.slane %v1715, 7
        %v1718 = vshll.u32 %v768, 16
        %v1720 = vor.u32 %v1717, %v1718
        %vm1737 = vcmask 1040384
        %vm1738 = vsmask.f32 256
        %vm1739 = vmand %vm1737, %vm1738
        %v1740 = vsel %vm1739, 0, %v1615
        %v1741 = vsel %vm1739, 0, %v1622
        %v1742 = vsel %vm1739, 0, %v1629
        %v1743 = vsel %vm1739, 0, %v1636
        %v1744 = vsel %vm1739, 0, %v1643
        %v1745 = vsel %vm1739, 0, %v1650
        %v1746 = vsel %vm1739, 0, %v1657
        %v1747 = vsel %vm1739, 0, %v1664
        %v1748 = vsel %vm1739, 0, %v1671
        %v1749 = vsel %vm1739, 0, %v1678
        %v1750 = vsel %vm1739, 0, %v1685
        %v1751 = vsel %vm1739, 0, %v1692
        %v1752 = vsel %vm1739, 0, %v1699
        %v1753 = vsel %vm1739, 0, %v1706
        %v1754 = vsel %vm1739, 0, %v1713
        %v1755 = vsel %vm1739, 0, %v1720
        %v1757 = vshrl.u32 %v1604, 16
        %v1759 = vrot.slane %v1757, 7
        %v1760 = vshll.u32 %v1604, 16
        %v1762 = vor.u32 %v1759, %v1760
        %v1764 = vshrl.u32 %v1481, 16
        %v1766 = vrot.slane %v1764, 7
        %v1767 = vshll.u32 %v1481, 16
        %v1769 = vor.u32 %v1766, %v1767
        %v1771 = vshrl.u32 %v1485, 16
        %v1773 = vrot.slane %v1771, 7
        %v1774 = vshll.u32 %v1485, 16
        %v1776 = vor.u32 %v1773, %v1774
        %v1778 = vshrl.u32 %v1489, 16
        %v1780 = vrot.slane %v1778, 7
        %v1781 = vshll.u32 %v1489, 16
        %v1783 = vor.u32 %v1780, %v1781
        %v1785 = vshrl.u32 %v1493, 16
        %v1787 = vrot.slane %v1785, 7
        %v1788 = vshll.u32 %v1493, 16
        %v1790 = vor.u32 %v1787, %v1788
        %v1792 = vshrl.u32 %v1497, 16
        %v1794 = vrot.slane %v1792, 7
        %v1795 = vshll.u32 %v1497, 16
        %v1797 = vor.u32 %v1794, %v1795
        %v1799 = vshrl.u32 %v1501, 16
        %v1801 = vrot.slane %v1799, 7
        %v1802 = vshll.u32 %v1501, 16
        %v1804 = vor.u32 %v1801, %v1802
        %v1806 = vshrl.u32 %v1505, 16
        %v1808 = vrot.slane %v1806, 7
        %v1809 = vshll.u32 %v1505, 16
        %v1811 = vor.u32 %v1808, %v1809
        %v1813 = vshrl.u32 %v1509, 16
        %v1815 = vrot.slane %v1813, 7
        %v1816 = vshll.u32 %v1509, 16
        %v1818 = vor.u32 %v1815, %v1816
        %v1820 = vshrl.u32 %v1513, 16
        %v1822 = vrot.slane %v1820, 7
        %v1823 = vshll.u32 %v1513, 16
        %v1825 = vor.u32 %v1822, %v1823
        %v1827 = vshrl.u32 %v1517, 16
        %v1829 = vrot.slane %v1827, 7
        %v1830 = vshll.u32 %v1517, 16
        %v1832 = vor.u32 %v1829, %v1830
        %v1834 = vshrl.u32 %v1521, 16
        %v1836 = vrot.slane %v1834, 7
        %v1837 = vshll.u32 %v1521, 16
        %v1839 = vor.u32 %v1836, %v1837
        %v1841 = vshrl.u32 %v1525, 16
        %v1843 = vrot.slane %v1841, 7
        %v1844 = vshll.u32 %v1525, 16
        %v1846 = vor.u32 %v1843, %v1844
        %v1848 = vshrl.u32 %v1529, 16
        %v1850 = vrot.slane %v1848, 7
        %v1851 = vshll.u32 %v1529, 16
        %v1853 = vor.u32 %v1850, %v1851
        %v1855 = vshrl.u32 %v1533, 16
        %v1857 = vrot.slane %v1855, 7
        %v1858 = vshll.u32 %v1533, 16
        %v1860 = vor.u32 %v1857, %v1858
        %v1862 = vshrl.u32 %v1537, 16
        %v1864 = vrot.slane %v1862, 7
        %v1865 = vshll.u32 %v1537, 16
        %v1867 = vor.u32 %v1864, %v1865
        %v1884 = vsel %vm1739, 0, %v1762
        %v1885 = vsel %vm1739, 0, %v1769
        %v1886 = vsel %vm1739, 0, %v1776
        %v1887 = vsel %vm1739, 0, %v1783
        %v1888 = vsel %vm1739, 0, %v1790
        %v1889 = vsel %vm1739, 0, %v1797
        %v1890 = vsel %vm1739, 0, %v1804
        %v1891 = vsel %vm1739, 0, %v1811
        %v1892 = vsel %vm1739, 0, %v1818
        %v1893 = vsel %vm1739, 0, %v1825
        %v1894 = vsel %vm1739, 0, %v1832
        %v1895 = vsel %vm1739, 0, %v1839
        %v1896 = vsel %vm1739, 0, %v1846
        %v1897 = vsel %vm1739, 0, %v1853
        %v1898 = vsel %vm1739, 0, %v1860
        %v1899 = vsel %vm1739, 0, %v1867
        %v1900 = vunpack.c.l.bf16 %v1740
        %v1901 = vunpack.c.h.bf16 %v1740
        %v1902 = vunpack.c.l.bf16 %v1741
        %v1903 = vunpack.c.h.bf16 %v1741
        %v1904 = vunpack.c.l.bf16 %v1742
        %v1905 = vunpack.c.h.bf16 %v1742
        %v1906 = vunpack.c.l.bf16 %v1743
        %v1907 = vunpack.c.h.bf16 %v1743
        %v1908 = vunpack.c.l.bf16 %v1744
        %v1909 = vunpack.c.h.bf16 %v1744
        %v1910 = vunpack.c.l.bf16 %v1745
        %v1911 = vunpack.c.h.bf16 %v1745
        %v1912 = vunpack.c.l.bf16 %v1746
        %v1913 = vunpack.c.h.bf16 %v1746
        %v1914 = vunpack.c.l.bf16 %v1747
        %v1915 = vunpack.c.h.bf16 %v1747
        %v1916 = vunpack.c.l.bf16 %v1748
        %v1917 = vunpack.c.h.bf16 %v1748
        %v1918 = vunpack.c.l.bf16 %v1749
        %v1919 = vunpack.c.h.bf16 %v1749
        %v1920 = vunpack.c.l.bf16 %v1750
        %v1921 = vunpack.c.h.bf16 %v1750
        %v1922 = vunpack.c.l.bf16 %v1751
        %v1923 = vunpack.c.h.bf16 %v1751
        %v1924 = vunpack.c.l.bf16 %v1752
        %v1925 = vunpack.c.h.bf16 %v1752
        %v1926 = vunpack.c.l.bf16 %v1753
        %v1927 = vunpack.c.h.bf16 %v1753
        %v1928 = vunpack.c.l.bf16 %v1754
        %v1929 = vunpack.c.h.bf16 %v1754
        %v1930 = vunpack.c.l.bf16 %v1755
        %v1931 = vunpack.c.h.bf16 %v1755
        %v1932 = vlaneseq
        %v1933 = vshrl.u32 %v1932, 7
        %v1934 = vsub.s32 0, %v1933
        %v1935 = vrot.slane %v1605, %v1934
        %v1936 = vmul.f32 %v1900, %v1935
        %v1937 = vmul.f32 %v1901, %v1935
        %v1938 = vmul.f32 %v1902, %v1935
        %v1939 = vmul.f32 %v1903, %v1935
        %v1940 = vmul.f32 %v1904, %v1935
        %v1941 = vmul.f32 %v1905, %v1935
        %v1942 = vmul.f32 %v1906, %v1935
        %v1943 = vmul.f32 %v1907, %v1935
        %v1944 = vmul.f32 %v1908, %v1935
        %v1945 = vmul.f32 %v1909, %v1935
        %v1946 = vmul.f32 %v1910, %v1935
        %v1947 = vmul.f32 %v1911, %v1935
        %v1948 = vmul.f32 %v1912, %v1935
        %v1949 = vmul.f32 %v1913, %v1935
        %v1950 = vmul.f32 %v1914, %v1935
        %v1951 = vmul.f32 %v1915, %v1935
        %v1952 = vmul.f32 %v1916, %v1935
        %v1953 = vmul.f32 %v1917, %v1935
        %v1954 = vmul.f32 %v1918, %v1935
        %v1955 = vmul.f32 %v1919, %v1935
        %v1956 = vmul.f32 %v1920, %v1935
        %v1957 = vmul.f32 %v1921, %v1935
        %v1958 = vmul.f32 %v1922, %v1935
        %v1959 = vmul.f32 %v1923, %v1935
        %v1960 = vmul.f32 %v1924, %v1935
        %v1961 = vmul.f32 %v1925, %v1935
        %v1962 = vmul.f32 %v1926, %v1935
        %v1963 = vmul.f32 %v1927, %v1935
        %v1964 = vmul.f32 %v1928, %v1935
        %v1965 = vmul.f32 %v1929, %v1935
        %v1966 = vmul.f32 %v1930, %v1935
        %v1967 = vmul.f32 %v1931, %v1935
        %v1968 = vadd.f32 %v1936, 0.0
        %v1969 = vadd.f32 %v1937, 0.0
        %v1970 = vadd.f32 %v1938, 0.0
        %v1971 = vadd.f32 %v1939, 0.0
        %v1972 = vadd.f32 %v1940, 0.0
        %v1973 = vadd.f32 %v1941, 0.0
        %v1974 = vadd.f32 %v1942, 0.0
        %v1975 = vadd.f32 %v1943, 0.0
        %v1976 = vadd.f32 %v1944, 0.0
        %v1977 = vadd.f32 %v1945, 0.0
        %v1978 = vadd.f32 %v1946, 0.0
        %v1979 = vadd.f32 %v1947, 0.0
        %v1980 = vadd.f32 %v1948, 0.0
        %v1981 = vadd.f32 %v1949, 0.0
        %v1982 = vadd.f32 %v1950, 0.0
        %v1983 = vadd.f32 %v1951, 0.0
        %v1984 = vadd.f32 %v1952, 0.0
        %v1985 = vadd.f32 %v1953, 0.0
        %v1986 = vadd.f32 %v1954, 0.0
        %v1987 = vadd.f32 %v1955, 0.0
        %v1988 = vadd.f32 %v1956, 0.0
        %v1989 = vadd.f32 %v1957, 0.0
        %v1990 = vadd.f32 %v1958, 0.0
        %v1991 = vadd.f32 %v1959, 0.0
        %v1992 = vadd.f32 %v1960, 0.0
        %v1993 = vadd.f32 %v1961, 0.0
        %v1994 = vadd.f32 %v1962, 0.0
        %v1995 = vadd.f32 %v1963, 0.0
        %v1996 = vadd.f32 %v1964, 0.0
        %v1997 = vadd.f32 %v1965, 0.0
        %v1998 = vadd.f32 %v1966, 0.0
        %v1999 = vadd.f32 %v1967, 0.0
        %v2000 = vunpack.c.l.bf16 %v1884
        %v2001 = vunpack.c.h.bf16 %v1884
        %v2002 = vunpack.c.l.bf16 %v1885
        %v2003 = vunpack.c.h.bf16 %v1885
        %v2004 = vunpack.c.l.bf16 %v1886
        %v2005 = vunpack.c.h.bf16 %v1886
        %v2006 = vunpack.c.l.bf16 %v1887
        %v2007 = vunpack.c.h.bf16 %v1887
        %v2008 = vunpack.c.l.bf16 %v1888
        %v2009 = vunpack.c.h.bf16 %v1888
        %v2010 = vunpack.c.l.bf16 %v1889
        %v2011 = vunpack.c.h.bf16 %v1889
        %v2012 = vunpack.c.l.bf16 %v1890
        %v2013 = vunpack.c.h.bf16 %v1890
        %v2014 = vunpack.c.l.bf16 %v1891
        %v2015 = vunpack.c.h.bf16 %v1891
        %v2016 = vunpack.c.l.bf16 %v1892
        %v2017 = vunpack.c.h.bf16 %v1892
        %v2018 = vunpack.c.l.bf16 %v1893
        %v2019 = vunpack.c.h.bf16 %v1893
        %v2020 = vunpack.c.l.bf16 %v1894
        %v2021 = vunpack.c.h.bf16 %v1894
        %v2022 = vunpack.c.l.bf16 %v1895
        %v2023 = vunpack.c.h.bf16 %v1895
        %v2024 = vunpack.c.l.bf16 %v1896
        %v2025 = vunpack.c.h.bf16 %v1896
        %v2026 = vunpack.c.l.bf16 %v1897
        %v2027 = vunpack.c.h.bf16 %v1897
        %v2028 = vunpack.c.l.bf16 %v1898
        %v2029 = vunpack.c.h.bf16 %v1898
        %v2030 = vunpack.c.l.bf16 %v1899
        %v2031 = vunpack.c.h.bf16 %v1899
        %v2032 = vlaneseq
        %v2033 = vshrl.u32 %v2032, 7
        %v2034 = vsub.s32 0, %v2033
        %v2035 = vrot.slane %v1607, %v2034
        %v2036 = vmul.f32 %v2000, %v2035
        %v2037 = vmul.f32 %v2001, %v2035
        %v2038 = vmul.f32 %v2002, %v2035
        %v2039 = vmul.f32 %v2003, %v2035
        %v2040 = vmul.f32 %v2004, %v2035
        %v2041 = vmul.f32 %v2005, %v2035
        %v2042 = vmul.f32 %v2006, %v2035
        %v2043 = vmul.f32 %v2007, %v2035
        %v2044 = vmul.f32 %v2008, %v2035
        %v2045 = vmul.f32 %v2009, %v2035
        %v2046 = vmul.f32 %v2010, %v2035
        %v2047 = vmul.f32 %v2011, %v2035
        %v2048 = vmul.f32 %v2012, %v2035
        %v2049 = vmul.f32 %v2013, %v2035
        %v2050 = vmul.f32 %v2014, %v2035
        %v2051 = vmul.f32 %v2015, %v2035
        %v2052 = vmul.f32 %v2016, %v2035
        %v2053 = vmul.f32 %v2017, %v2035
        %v2054 = vmul.f32 %v2018, %v2035
        %v2055 = vmul.f32 %v2019, %v2035
        %v2056 = vmul.f32 %v2020, %v2035
        %v2057 = vmul.f32 %v2021, %v2035
        %v2058 = vmul.f32 %v2022, %v2035
        %v2059 = vmul.f32 %v2023, %v2035
        %v2060 = vmul.f32 %v2024, %v2035
        %v2061 = vmul.f32 %v2025, %v2035
        %v2062 = vmul.f32 %v2026, %v2035
        %v2063 = vmul.f32 %v2027, %v2035
        %v2064 = vmul.f32 %v2028, %v2035
        %v2065 = vmul.f32 %v2029, %v2035
        %v2066 = vmul.f32 %v2030, %v2035
        %v2067 = vmul.f32 %v2031, %v2035
        %v2068 = vadd.f32 %v2036, 0.0
        %v2069 = vadd.f32 %v2037, 0.0
        %v2070 = vadd.f32 %v2038, 0.0
        %v2071 = vadd.f32 %v2039, 0.0
        %v2072 = vadd.f32 %v2040, 0.0
        %v2073 = vadd.f32 %v2041, 0.0
        %v2074 = vadd.f32 %v2042, 0.0
        %v2075 = vadd.f32 %v2043, 0.0
        %v2076 = vadd.f32 %v2044, 0.0
        %v2077 = vadd.f32 %v2045, 0.0
        %v2078 = vadd.f32 %v2046, 0.0
        %v2079 = vadd.f32 %v2047, 0.0
        %v2080 = vadd.f32 %v2048, 0.0
        %v2081 = vadd.f32 %v2049, 0.0
        %v2082 = vadd.f32 %v2050, 0.0
        %v2083 = vadd.f32 %v2051, 0.0
        %v2084 = vadd.f32 %v2052, 0.0
        %v2085 = vadd.f32 %v2053, 0.0
        %v2086 = vadd.f32 %v2054, 0.0
        %v2087 = vadd.f32 %v2055, 0.0
        %v2088 = vadd.f32 %v2056, 0.0
        %v2089 = vadd.f32 %v2057, 0.0
        %v2090 = vadd.f32 %v2058, 0.0
        %v2091 = vadd.f32 %v2059, 0.0
        %v2092 = vadd.f32 %v2060, 0.0
        %v2093 = vadd.f32 %v2061, 0.0
        %v2094 = vadd.f32 %v2062, 0.0
        %v2095 = vadd.f32 %v2063, 0.0
        %v2096 = vadd.f32 %v2064, 0.0
        %v2097 = vadd.f32 %v2065, 0.0
        %v2098 = vadd.f32 %v2066, 0.0
        %v2099 = vadd.f32 %v2067, 0.0
        %v2100 = vunpack.c.l.bf16 %v471
        %v2101 = vunpack.c.l.bf16 %v472
        %v2102 = vunpack.c.l.bf16 %v403
        %v2103 = vunpack.c.l.bf16 %v404
        %v2104 = vunpack.c.l.bf16 %v407
        %v2105 = vunpack.c.l.bf16 %v408
        %v2106 = vunpack.c.l.bf16 %v411
        %v2107 = vunpack.c.l.bf16 %v412
        %v2108 = vunpack.c.l.bf16 %v415
        %v2109 = vunpack.c.l.bf16 %v416
        %v2110 = vunpack.c.l.bf16 %v419
        %v2111 = vunpack.c.l.bf16 %v420
        %v2112 = vunpack.c.l.bf16 %v423
        %v2113 = vunpack.c.l.bf16 %v424
        %v2114 = vunpack.c.l.bf16 %v427
        %v2115 = vunpack.c.l.bf16 %v428
        %v2116 = vunpack.c.l.bf16 %v431
        %v2117 = vunpack.c.l.bf16 %v432
        %v2118 = vunpack.c.l.bf16 %v435
        %v2119 = vunpack.c.l.bf16 %v436
        %v2120 = vunpack.c.l.bf16 %v439
        %v2121 = vunpack.c.l.bf16 %v440
        %v2122 = vunpack.c.l.bf16 %v443
        %v2123 = vunpack.c.l.bf16 %v444
        %v2124 = vunpack.c.l.bf16 %v447
        %v2125 = vunpack.c.l.bf16 %v448
        %v2126 = vunpack.c.l.bf16 %v451
        %v2127 = vunpack.c.l.bf16 %v452
        %v2128 = vunpack.c.l.bf16 %v455
        %v2129 = vunpack.c.l.bf16 %v456
        %v2130 = vunpack.c.l.bf16 %v459
        %v2131 = vunpack.c.l.bf16 %v460
        %v2132 = vlaneseq
        %v2133 = vshrl.u32 %v2132, 7
        %v2134 = vsub.s32 1, %v2133
        %v2135 = vrot.slane %v1605, %v2134
        %v2136 = vmul.f32 %v2100, %v2135
        %v2137 = vmul.f32 %v2101, %v2135
        %v2138 = vmul.f32 %v2102, %v2135
        %v2139 = vmul.f32 %v2103, %v2135
        %v2140 = vmul.f32 %v2104, %v2135
        %v2141 = vmul.f32 %v2105, %v2135
        %v2142 = vmul.f32 %v2106, %v2135
        %v2143 = vmul.f32 %v2107, %v2135
        %v2144 = vmul.f32 %v2108, %v2135
        %v2145 = vmul.f32 %v2109, %v2135
        %v2146 = vmul.f32 %v2110, %v2135
        %v2147 = vmul.f32 %v2111, %v2135
        %v2148 = vmul.f32 %v2112, %v2135
        %v2149 = vmul.f32 %v2113, %v2135
        %v2150 = vmul.f32 %v2114, %v2135
        %v2151 = vmul.f32 %v2115, %v2135
        %v2152 = vmul.f32 %v2116, %v2135
        %v2153 = vmul.f32 %v2117, %v2135
        %v2154 = vmul.f32 %v2118, %v2135
        %v2155 = vmul.f32 %v2119, %v2135
        %v2156 = vmul.f32 %v2120, %v2135
        %v2157 = vmul.f32 %v2121, %v2135
        %v2158 = vmul.f32 %v2122, %v2135
        %v2159 = vmul.f32 %v2123, %v2135
        %v2160 = vmul.f32 %v2124, %v2135
        %v2161 = vmul.f32 %v2125, %v2135
        %v2162 = vmul.f32 %v2126, %v2135
        %v2163 = vmul.f32 %v2127, %v2135
        %v2164 = vmul.f32 %v2128, %v2135
        %v2165 = vmul.f32 %v2129, %v2135
        %v2166 = vmul.f32 %v2130, %v2135
        %v2167 = vmul.f32 %v2131, %v2135
        %v2168 = vadd.f32 %v1968, %v2136
        %v2169 = vadd.f32 %v1969, %v2137
        %v2170 = vadd.f32 %v1970, %v2138
        %v2171 = vadd.f32 %v1971, %v2139
        %v2172 = vadd.f32 %v1972, %v2140
        %v2173 = vadd.f32 %v1973, %v2141
        %v2174 = vadd.f32 %v1974, %v2142
        %v2175 = vadd.f32 %v1975, %v2143
        %v2176 = vadd.f32 %v1976, %v2144
        %v2177 = vadd.f32 %v1977, %v2145
        %v2178 = vadd.f32 %v1978, %v2146
        %v2179 = vadd.f32 %v1979, %v2147
        %v2180 = vadd.f32 %v1980, %v2148
        %v2181 = vadd.f32 %v1981, %v2149
        %v2182 = vadd.f32 %v1982, %v2150
        %v2183 = vadd.f32 %v1983, %v2151
        %v2184 = vadd.f32 %v1984, %v2152
        %v2185 = vadd.f32 %v1985, %v2153
        %v2186 = vadd.f32 %v1986, %v2154
        %v2187 = vadd.f32 %v1987, %v2155
        %v2188 = vadd.f32 %v1988, %v2156
        %v2189 = vadd.f32 %v1989, %v2157
        %v2190 = vadd.f32 %v1990, %v2158
        %v2191 = vadd.f32 %v1991, %v2159
        %v2192 = vadd.f32 %v1992, %v2160
        %v2193 = vadd.f32 %v1993, %v2161
        %v2194 = vadd.f32 %v1994, %v2162
        %v2195 = vadd.f32 %v1995, %v2163
        %v2196 = vadd.f32 %v1996, %v2164
        %v2197 = vadd.f32 %v1997, %v2165
        %v2198 = vadd.f32 %v1998, %v2166
        %v2199 = vadd.f32 %v1999, %v2167
        %v2200 = vunpack.c.l.bf16 %v1603
        %v2201 = vunpack.c.h.bf16 %v1603
        %v2202 = vunpack.c.l.bf16 %v1480
        %v2203 = vunpack.c.h.bf16 %v1480
        %v2204 = vunpack.c.l.bf16 %v1484
        %v2205 = vunpack.c.h.bf16 %v1484
        %v2206 = vunpack.c.l.bf16 %v1488
        %v2207 = vunpack.c.h.bf16 %v1488
        %v2208 = vunpack.c.l.bf16 %v1492
        %v2209 = vunpack.c.h.bf16 %v1492
        %v2210 = vunpack.c.l.bf16 %v1496
        %v2211 = vunpack.c.h.bf16 %v1496
        %v2212 = vunpack.c.l.bf16 %v1500
        %v2213 = vunpack.c.h.bf16 %v1500
        %v2214 = vunpack.c.l.bf16 %v1504
        %v2215 = vunpack.c.h.bf16 %v1504
        %v2216 = vunpack.c.l.bf16 %v1508
        %v2217 = vunpack.c.h.bf16 %v1508
        %v2218 = vunpack.c.l.bf16 %v1512
        %v2219 = vunpack.c.h.bf16 %v1512
        %v2220 = vunpack.c.l.bf16 %v1516
        %v2221 = vunpack.c.h.bf16 %v1516
        %v2222 = vunpack.c.l.bf16 %v1520
        %v2223 = vunpack.c.h.bf16 %v1520
        %v2224 = vunpack.c.l.bf16 %v1524
        %v2225 = vunpack.c.h.bf16 %v1524
        %v2226 = vunpack.c.l.bf16 %v1528
        %v2227 = vunpack.c.h.bf16 %v1528
        %v2228 = vunpack.c.l.bf16 %v1532
        %v2229 = vunpack.c.h.bf16 %v1532
        %v2230 = vunpack.c.l.bf16 %v1536
        %v2231 = vunpack.c.h.bf16 %v1536
        %v2232 = vlaneseq
        %v2233 = vshrl.u32 %v2232, 7
        %v2234 = vsub.s32 1, %v2233
        %v2235 = vrot.slane %v1607, %v2234
        %v2236 = vmul.f32 %v2200, %v2235
        %v2237 = vmul.f32 %v2201, %v2235
        %v2238 = vmul.f32 %v2202, %v2235
        %v2239 = vmul.f32 %v2203, %v2235
        %v2240 = vmul.f32 %v2204, %v2235
        %v2241 = vmul.f32 %v2205, %v2235
        %v2242 = vmul.f32 %v2206, %v2235
        %v2243 = vmul.f32 %v2207, %v2235
        %v2244 = vmul.f32 %v2208, %v2235
        %v2245 = vmul.f32 %v2209, %v2235
        %v2246 = vmul.f32 %v2210, %v2235
        %v2247 = vmul.f32 %v2211, %v2235
        %v2248 = vmul.f32 %v2212, %v2235
        %v2249 = vmul.f32 %v2213, %v2235
        %v2250 = vmul.f32 %v2214, %v2235
        %v2251 = vmul.f32 %v2215, %v2235
        %v2252 = vmul.f32 %v2216, %v2235
        %v2253 = vmul.f32 %v2217, %v2235
        %v2254 = vmul.f32 %v2218, %v2235
        %v2255 = vmul.f32 %v2219, %v2235
        %v2256 = vmul.f32 %v2220, %v2235
        %v2257 = vmul.f32 %v2221, %v2235
        %v2258 = vmul.f32 %v2222, %v2235
        %v2259 = vmul.f32 %v2223, %v2235
        %v2260 = vmul.f32 %v2224, %v2235
        %v2261 = vmul.f32 %v2225, %v2235
        %v2262 = vmul.f32 %v2226, %v2235
        %v2263 = vmul.f32 %v2227, %v2235
        %v2264 = vmul.f32 %v2228, %v2235
        %v2265 = vmul.f32 %v2229, %v2235
        %v2266 = vmul.f32 %v2230, %v2235
        %v2267 = vmul.f32 %v2231, %v2235
        %v2268 = vadd.f32 %v2068, %v2236
        %v2269 = vadd.f32 %v2069, %v2237
        %v2270 = vadd.f32 %v2070, %v2238
        %v2271 = vadd.f32 %v2071, %v2239
        %v2272 = vadd.f32 %v2072, %v2240
        %v2273 = vadd.f32 %v2073, %v2241
        %v2274 = vadd.f32 %v2074, %v2242
        %v2275 = vadd.f32 %v2075, %v2243
        %v2276 = vadd.f32 %v2076, %v2244
        %v2277 = vadd.f32 %v2077, %v2245
        %v2278 = vadd.f32 %v2078, %v2246
        %v2279 = vadd.f32 %v2079, %v2247
        %v2280 = vadd.f32 %v2080, %v2248
        %v2281 = vadd.f32 %v2081, %v2249
        %v2282 = vadd.f32 %v2082, %v2250
        %v2283 = vadd.f32 %v2083, %v2251
        %v2284 = vadd.f32 %v2084, %v2252
        %v2285 = vadd.f32 %v2085, %v2253
        %v2286 = vadd.f32 %v2086, %v2254
        %v2287 = vadd.f32 %v2087, %v2255
        %v2288 = vadd.f32 %v2088, %v2256
        %v2289 = vadd.f32 %v2089, %v2257
        %v2290 = vadd.f32 %v2090, %v2258
        %v2291 = vadd.f32 %v2091, %v2259
        %v2292 = vadd.f32 %v2092, %v2260
        %v2293 = vadd.f32 %v2093, %v2261
        %v2294 = vadd.f32 %v2094, %v2262
        %v2295 = vadd.f32 %v2095, %v2263
        %v2296 = vadd.f32 %v2096, %v2264
        %v2297 = vadd.f32 %v2097, %v2265
        %v2298 = vadd.f32 %v2098, %v2266
        %v2299 = vadd.f32 %v2099, %v2267
        %v2300 = vrot.slane %v471, 4
        %v2301 = vrot.slane %v472, 4
        %v2302 = vrot.slane %v403, 4
        %v2303 = vrot.slane %v404, 4
        %v2304 = vrot.slane %v407, 4
        %v2305 = vrot.slane %v408, 4
        %v2306 = vrot.slane %v411, 4
        %v2307 = vrot.slane %v412, 4
        %v2308 = vrot.slane %v415, 4
        %v2309 = vrot.slane %v416, 4
        %v2310 = vrot.slane %v419, 4
        %v2311 = vrot.slane %v420, 4
        %v2312 = vrot.slane %v423, 4
        %v2313 = vrot.slane %v424, 4
        %v2314 = vrot.slane %v427, 4
        %v2315 = vrot.slane %v428, 4
        %v2316 = vrot.slane %v431, 4
        %v2317 = vrot.slane %v432, 4
        %v2318 = vrot.slane %v435, 4
        %v2319 = vrot.slane %v436, 4
        %v2320 = vrot.slane %v439, 4
        %v2321 = vrot.slane %v440, 4
        %v2322 = vrot.slane %v443, 4
        %v2323 = vrot.slane %v444, 4
        %v2324 = vrot.slane %v447, 4
        %v2325 = vrot.slane %v448, 4
        %v2326 = vrot.slane %v451, 4
        %v2327 = vrot.slane %v452, 4
        %v2328 = vrot.slane %v455, 4
        %v2329 = vrot.slane %v456, 4
        %v2330 = vrot.slane %v459, 4
        %v2331 = vrot.slane %v460, 4
        %v2364 = vunpack.c.l.bf16 %v2300
        %v2365 = vunpack.c.l.bf16 %v2301
        %v2366 = vunpack.c.l.bf16 %v2302
        %v2367 = vunpack.c.l.bf16 %v2303
        %v2368 = vunpack.c.l.bf16 %v2304
        %v2369 = vunpack.c.l.bf16 %v2305
        %v2370 = vunpack.c.l.bf16 %v2306
        %v2371 = vunpack.c.l.bf16 %v2307
        %v2372 = vunpack.c.l.bf16 %v2308
        %v2373 = vunpack.c.l.bf16 %v2309
        %v2374 = vunpack.c.l.bf16 %v2310
        %v2375 = vunpack.c.l.bf16 %v2311
        %v2376 = vunpack.c.l.bf16 %v2312
        %v2377 = vunpack.c.l.bf16 %v2313
        %v2378 = vunpack.c.l.bf16 %v2314
        %v2379 = vunpack.c.l.bf16 %v2315
        %v2380 = vunpack.c.l.bf16 %v2316
        %v2381 = vunpack.c.l.bf16 %v2317
        %v2382 = vunpack.c.l.bf16 %v2318
        %v2383 = vunpack.c.l.bf16 %v2319
        %v2384 = vunpack.c.l.bf16 %v2320
        %v2385 = vunpack.c.l.bf16 %v2321
        %v2386 = vunpack.c.l.bf16 %v2322
        %v2387 = vunpack.c.l.bf16 %v2323
        %v2388 = vunpack.c.l.bf16 %v2324
        %v2389 = vunpack.c.l.bf16 %v2325
        %v2390 = vunpack.c.l.bf16 %v2326
        %v2391 = vunpack.c.l.bf16 %v2327
        %v2392 = vunpack.c.l.bf16 %v2328
        %v2393 = vunpack.c.l.bf16 %v2329
        %v2394 = vunpack.c.l.bf16 %v2330
        %v2395 = vunpack.c.l.bf16 %v2331
        %v2396 = vlaneseq
        %v2397 = vshrl.u32 %v2396, 7
        %v2398 = vsub.s32 2, %v2397
        %v2399 = vrot.slane %v1605, %v2398
        %v2400 = vmul.f32 %v2364, %v2399
        %v2401 = vmul.f32 %v2365, %v2399
        %v2402 = vmul.f32 %v2366, %v2399
        %v2403 = vmul.f32 %v2367, %v2399
        %v2404 = vmul.f32 %v2368, %v2399
        %v2405 = vmul.f32 %v2369, %v2399
        %v2406 = vmul.f32 %v2370, %v2399
        %v2407 = vmul.f32 %v2371, %v2399
        %v2408 = vmul.f32 %v2372, %v2399
        %v2409 = vmul.f32 %v2373, %v2399
        %v2410 = vmul.f32 %v2374, %v2399
        %v2411 = vmul.f32 %v2375, %v2399
        %v2412 = vmul.f32 %v2376, %v2399
        %v2413 = vmul.f32 %v2377, %v2399
        %v2414 = vmul.f32 %v2378, %v2399
        %v2415 = vmul.f32 %v2379, %v2399
        %v2416 = vmul.f32 %v2380, %v2399
        %v2417 = vmul.f32 %v2381, %v2399
        %v2418 = vmul.f32 %v2382, %v2399
        %v2419 = vmul.f32 %v2383, %v2399
        %v2420 = vmul.f32 %v2384, %v2399
        %v2421 = vmul.f32 %v2385, %v2399
        %v2422 = vmul.f32 %v2386, %v2399
        %v2423 = vmul.f32 %v2387, %v2399
        %v2424 = vmul.f32 %v2388, %v2399
        %v2425 = vmul.f32 %v2389, %v2399
        %v2426 = vmul.f32 %v2390, %v2399
        %v2427 = vmul.f32 %v2391, %v2399
        %v2428 = vmul.f32 %v2392, %v2399
        %v2429 = vmul.f32 %v2393, %v2399
        %v2430 = vmul.f32 %v2394, %v2399
        %v2431 = vmul.f32 %v2395, %v2399
        %v2432 = vadd.f32 %v2168, %v2400
        %v2433 = vadd.f32 %v2169, %v2401
        %v2434 = vadd.f32 %v2170, %v2402
        %v2435 = vadd.f32 %v2171, %v2403
        %v2436 = vadd.f32 %v2172, %v2404
        %v2437 = vadd.f32 %v2173, %v2405
        %v2438 = vadd.f32 %v2174, %v2406
        %v2439 = vadd.f32 %v2175, %v2407
        %v2440 = vadd.f32 %v2176, %v2408
        %v2441 = vadd.f32 %v2177, %v2409
        %v2442 = vadd.f32 %v2178, %v2410
        %v2443 = vadd.f32 %v2179, %v2411
        %v2444 = vadd.f32 %v2180, %v2412
        %v2445 = vadd.f32 %v2181, %v2413
        %v2446 = vadd.f32 %v2182, %v2414
        %v2447 = vadd.f32 %v2183, %v2415
        %v2448 = vadd.f32 %v2184, %v2416
        %v2449 = vadd.f32 %v2185, %v2417
        %v2450 = vadd.f32 %v2186, %v2418
        %v2451 = vadd.f32 %v2187, %v2419
        %v2452 = vadd.f32 %v2188, %v2420
        %v2453 = vadd.f32 %v2189, %v2421
        %v2454 = vadd.f32 %v2190, %v2422
        %v2455 = vadd.f32 %v2191, %v2423
        %v2456 = vadd.f32 %v2192, %v2424
        %v2457 = vadd.f32 %v2193, %v2425
        %v2458 = vadd.f32 %v2194, %v2426
        %v2459 = vadd.f32 %v2195, %v2427
        %v2460 = vadd.f32 %v2196, %v2428
        %v2461 = vadd.f32 %v2197, %v2429
        %v2462 = vadd.f32 %v2198, %v2430
        %v2463 = vadd.f32 %v2199, %v2431
        %v2464 = vunpack.c.l.bf16 %v1604
        %v2465 = vunpack.c.h.bf16 %v1604
        %v2466 = vunpack.c.l.bf16 %v1481
        %v2467 = vunpack.c.h.bf16 %v1481
        %v2468 = vunpack.c.l.bf16 %v1485
        %v2469 = vunpack.c.h.bf16 %v1485
        %v2470 = vunpack.c.l.bf16 %v1489
        %v2471 = vunpack.c.h.bf16 %v1489
        %v2472 = vunpack.c.l.bf16 %v1493
        %v2473 = vunpack.c.h.bf16 %v1493
        %v2474 = vunpack.c.l.bf16 %v1497
        %v2475 = vunpack.c.h.bf16 %v1497
        %v2476 = vunpack.c.l.bf16 %v1501
        %v2477 = vunpack.c.h.bf16 %v1501
        %v2478 = vunpack.c.l.bf16 %v1505
        %v2479 = vunpack.c.h.bf16 %v1505
        %v2480 = vunpack.c.l.bf16 %v1509
        %v2481 = vunpack.c.h.bf16 %v1509
        %v2482 = vunpack.c.l.bf16 %v1513
        %v2483 = vunpack.c.h.bf16 %v1513
        %v2484 = vunpack.c.l.bf16 %v1517
        %v2485 = vunpack.c.h.bf16 %v1517
        %v2486 = vunpack.c.l.bf16 %v1521
        %v2487 = vunpack.c.h.bf16 %v1521
        %v2488 = vunpack.c.l.bf16 %v1525
        %v2489 = vunpack.c.h.bf16 %v1525
        %v2490 = vunpack.c.l.bf16 %v1529
        %v2491 = vunpack.c.h.bf16 %v1529
        %v2492 = vunpack.c.l.bf16 %v1533
        %v2493 = vunpack.c.h.bf16 %v1533
        %v2494 = vunpack.c.l.bf16 %v1537
        %v2495 = vunpack.c.h.bf16 %v1537
        %v2496 = vlaneseq
        %v2497 = vshrl.u32 %v2496, 7
        %v2498 = vsub.s32 2, %v2497
        %v2499 = vrot.slane %v1607, %v2498
        %v2500 = vmul.f32 %v2464, %v2499
        %v2501 = vmul.f32 %v2465, %v2499
        %v2502 = vmul.f32 %v2466, %v2499
        %v2503 = vmul.f32 %v2467, %v2499
        %v2504 = vmul.f32 %v2468, %v2499
        %v2505 = vmul.f32 %v2469, %v2499
        %v2506 = vmul.f32 %v2470, %v2499
        %v2507 = vmul.f32 %v2471, %v2499
        %v2508 = vmul.f32 %v2472, %v2499
        %v2509 = vmul.f32 %v2473, %v2499
        %v2510 = vmul.f32 %v2474, %v2499
        %v2511 = vmul.f32 %v2475, %v2499
        %v2512 = vmul.f32 %v2476, %v2499
        %v2513 = vmul.f32 %v2477, %v2499
        %v2514 = vmul.f32 %v2478, %v2499
        %v2515 = vmul.f32 %v2479, %v2499
        %v2516 = vmul.f32 %v2480, %v2499
        %v2517 = vmul.f32 %v2481, %v2499
        %v2518 = vmul.f32 %v2482, %v2499
        %v2519 = vmul.f32 %v2483, %v2499
        %v2520 = vmul.f32 %v2484, %v2499
        %v2521 = vmul.f32 %v2485, %v2499
        %v2522 = vmul.f32 %v2486, %v2499
        %v2523 = vmul.f32 %v2487, %v2499
        %v2524 = vmul.f32 %v2488, %v2499
        %v2525 = vmul.f32 %v2489, %v2499
        %v2526 = vmul.f32 %v2490, %v2499
        %v2527 = vmul.f32 %v2491, %v2499
        %v2528 = vmul.f32 %v2492, %v2499
        %v2529 = vmul.f32 %v2493, %v2499
        %v2530 = vmul.f32 %v2494, %v2499
        %v2531 = vmul.f32 %v2495, %v2499
        %v2532 = vadd.f32 %v2268, %v2500
        %v2533 = vadd.f32 %v2269, %v2501
        %v2534 = vadd.f32 %v2270, %v2502
        %v2535 = vadd.f32 %v2271, %v2503
        %v2536 = vadd.f32 %v2272, %v2504
        %v2537 = vadd.f32 %v2273, %v2505
        %v2538 = vadd.f32 %v2274, %v2506
        %v2539 = vadd.f32 %v2275, %v2507
        %v2540 = vadd.f32 %v2276, %v2508
        %v2541 = vadd.f32 %v2277, %v2509
        %v2542 = vadd.f32 %v2278, %v2510
        %v2543 = vadd.f32 %v2279, %v2511
        %v2544 = vadd.f32 %v2280, %v2512
        %v2545 = vadd.f32 %v2281, %v2513
        %v2546 = vadd.f32 %v2282, %v2514
        %v2547 = vadd.f32 %v2283, %v2515
        %v2548 = vadd.f32 %v2284, %v2516
        %v2549 = vadd.f32 %v2285, %v2517
        %v2550 = vadd.f32 %v2286, %v2518
        %v2551 = vadd.f32 %v2287, %v2519
        %v2552 = vadd.f32 %v2288, %v2520
        %v2553 = vadd.f32 %v2289, %v2521
        %v2554 = vadd.f32 %v2290, %v2522
        %v2555 = vadd.f32 %v2291, %v2523
        %v2556 = vadd.f32 %v2292, %v2524
        %v2557 = vadd.f32 %v2293, %v2525
        %v2558 = vadd.f32 %v2294, %v2526
        %v2559 = vadd.f32 %v2295, %v2527
        %v2560 = vadd.f32 %v2296, %v2528
        %v2561 = vadd.f32 %v2297, %v2529
        %v2562 = vadd.f32 %v2298, %v2530
        %v2563 = vadd.f32 %v2299, %v2531
        %v2565 = vshrl.u32 %v710, 16
        %v2567 = vrot.slane %v2565, 7
        %v2568 = vshll.u32 %v710, 16
        %v2570 = vor.u32 %v2567, %v2568
        %v2572 = vshrl.u32 %v714, 16
        %v2574 = vrot.slane %v2572, 7
        %v2575 = vshll.u32 %v714, 16
        %v2577 = vor.u32 %v2574, %v2575
        %v2579 = vshrl.u32 %v718, 16
        %v2581 = vrot.slane %v2579, 7
        %v2582 = vshll.u32 %v718, 16
        %v2584 = vor.u32 %v2581, %v2582
        %v2586 = vshrl.u32 %v722, 16
        %v2588 = vrot.slane %v2586, 7
        %v2589 = vshll.u32 %v722, 16
        %v2591 = vor.u32 %v2588, %v2589
        %v2593 = vshrl.u32 %v726, 16
        %v2595 = vrot.slane %v2593, 7
        %v2596 = vshll.u32 %v726, 16
        %v2598 = vor.u32 %v2595, %v2596
        %v2600 = vshrl.u32 %v730, 16
        %v2602 = vrot.slane %v2600, 7
        %v2603 = vshll.u32 %v730, 16
        %v2605 = vor.u32 %v2602, %v2603
        %v2607 = vshrl.u32 %v734, 16
        %v2609 = vrot.slane %v2607, 7
        %v2610 = vshll.u32 %v734, 16
        %v2612 = vor.u32 %v2609, %v2610
        %v2614 = vshrl.u32 %v738, 16
        %v2616 = vrot.slane %v2614, 7
        %v2617 = vshll.u32 %v738, 16
        %v2619 = vor.u32 %v2616, %v2617
        %v2621 = vshrl.u32 %v742, 16
        %v2623 = vrot.slane %v2621, 7
        %v2624 = vshll.u32 %v742, 16
        %v2626 = vor.u32 %v2623, %v2624
        %v2628 = vshrl.u32 %v746, 16
        %v2630 = vrot.slane %v2628, 7
        %v2631 = vshll.u32 %v746, 16
        %v2633 = vor.u32 %v2630, %v2631
        %v2635 = vshrl.u32 %v750, 16
        %v2637 = vrot.slane %v2635, 7
        %v2638 = vshll.u32 %v750, 16
        %v2640 = vor.u32 %v2637, %v2638
        %v2642 = vshrl.u32 %v754, 16
        %v2644 = vrot.slane %v2642, 7
        %v2645 = vshll.u32 %v754, 16
        %v2647 = vor.u32 %v2644, %v2645
        %v2649 = vshrl.u32 %v758, 16
        %v2651 = vrot.slane %v2649, 7
        %v2652 = vshll.u32 %v758, 16
        %v2654 = vor.u32 %v2651, %v2652
        %v2656 = vshrl.u32 %v762, 16
        %v2658 = vrot.slane %v2656, 7
        %v2659 = vshll.u32 %v762, 16
        %v2661 = vor.u32 %v2658, %v2659
        %v2663 = vshrl.u32 %v766, 16
        %v2665 = vrot.slane %v2663, 7
        %v2666 = vshll.u32 %v766, 16
        %v2668 = vor.u32 %v2665, %v2666
        %v2670 = vshrl.u32 %v770, 16
        %v2672 = vrot.slane %v2670, 7
        %v2673 = vshll.u32 %v770, 16
        %v2675 = vor.u32 %v2672, %v2673
        %v2692 = vsel %vm1739, 0, %v2570
        %v2693 = vsel %vm1739, 0, %v2577
        %v2694 = vsel %vm1739, 0, %v2584
        %v2695 = vsel %vm1739, 0, %v2591
        %v2696 = vsel %vm1739, 0, %v2598
        %v2697 = vsel %vm1739, 0, %v2605
        %v2698 = vsel %vm1739, 0, %v2612
        %v2699 = vsel %vm1739, 0, %v2619
        %v2700 = vsel %vm1739, 0, %v2626
        %v2701 = vsel %vm1739, 0, %v2633
        %v2702 = vsel %vm1739, 0, %v2640
        %v2703 = vsel %vm1739, 0, %v2647
        %v2704 = vsel %vm1739, 0, %v2654
        %v2705 = vsel %vm1739, 0, %v2661
        %v2706 = vsel %vm1739, 0, %v2668
        %v2707 = vsel %vm1739, 0, %v2675
        %v2709 = vshrl.u32 %v1479, 16
        %v2711 = vrot.slane %v2709, 7
        %v2712 = vshll.u32 %v1479, 16
        %v2714 = vor.u32 %v2711, %v2712
        %v2716 = vshrl.u32 %v1483, 16
        %v2718 = vrot.slane %v2716, 7
        %v2719 = vshll.u32 %v1483, 16
        %v2721 = vor.u32 %v2718, %v2719
        %v2723 = vshrl.u32 %v1487, 16
        %v2725 = vrot.slane %v2723, 7
        %v2726 = vshll.u32 %v1487, 16
        %v2728 = vor.u32 %v2725, %v2726
        %v2730 = vshrl.u32 %v1491, 16
        %v2732 = vrot.slane %v2730, 7
        %v2733 = vshll.u32 %v1491, 16
        %v2735 = vor.u32 %v2732, %v2733
        %v2737 = vshrl.u32 %v1495, 16
        %v2739 = vrot.slane %v2737, 7
        %v2740 = vshll.u32 %v1495, 16
        %v2742 = vor.u32 %v2739, %v2740
        %v2744 = vshrl.u32 %v1499, 16
        %v2746 = vrot.slane %v2744, 7
        %v2747 = vshll.u32 %v1499, 16
        %v2749 = vor.u32 %v2746, %v2747
        %v2751 = vshrl.u32 %v1503, 16
        %v2753 = vrot.slane %v2751, 7
        %v2754 = vshll.u32 %v1503, 16
        %v2756 = vor.u32 %v2753, %v2754
        %v2758 = vshrl.u32 %v1507, 16
        %v2760 = vrot.slane %v2758, 7
        %v2761 = vshll.u32 %v1507, 16
        %v2763 = vor.u32 %v2760, %v2761
        %v2765 = vshrl.u32 %v1511, 16
        %v2767 = vrot.slane %v2765, 7
        %v2768 = vshll.u32 %v1511, 16
        %v2770 = vor.u32 %v2767, %v2768
        %v2772 = vshrl.u32 %v1515, 16
        %v2774 = vrot.slane %v2772, 7
        %v2775 = vshll.u32 %v1515, 16
        %v2777 = vor.u32 %v2774, %v2775
        %v2779 = vshrl.u32 %v1519, 16
        %v2781 = vrot.slane %v2779, 7
        %v2782 = vshll.u32 %v1519, 16
        %v2784 = vor.u32 %v2781, %v2782
        %v2786 = vshrl.u32 %v1523, 16
        %v2788 = vrot.slane %v2786, 7
        %v2789 = vshll.u32 %v1523, 16
        %v2791 = vor.u32 %v2788, %v2789
        %v2793 = vshrl.u32 %v1527, 16
        %v2795 = vrot.slane %v2793, 7
        %v2796 = vshll.u32 %v1527, 16
        %v2798 = vor.u32 %v2795, %v2796
        %v2800 = vshrl.u32 %v1531, 16
        %v2802 = vrot.slane %v2800, 7
        %v2803 = vshll.u32 %v1531, 16
        %v2805 = vor.u32 %v2802, %v2803
        %v2807 = vshrl.u32 %v1535, 16
        %v2809 = vrot.slane %v2807, 7
        %v2810 = vshll.u32 %v1535, 16
        %v2812 = vor.u32 %v2809, %v2810
        %v2814 = vshrl.u32 %v1539, 16
        %v2816 = vrot.slane %v2814, 7
        %v2817 = vshll.u32 %v1539, 16
        %v2819 = vor.u32 %v2816, %v2817
        %v2836 = vsel %vm1739, 0, %v2714
        %v2837 = vsel %vm1739, 0, %v2721
        %v2838 = vsel %vm1739, 0, %v2728
        %v2839 = vsel %vm1739, 0, %v2735
        %v2840 = vsel %vm1739, 0, %v2742
        %v2841 = vsel %vm1739, 0, %v2749
        %v2842 = vsel %vm1739, 0, %v2756
        %v2843 = vsel %vm1739, 0, %v2763
        %v2844 = vsel %vm1739, 0, %v2770
        %v2845 = vsel %vm1739, 0, %v2777
        %v2846 = vsel %vm1739, 0, %v2784
        %v2847 = vsel %vm1739, 0, %v2791
        %v2848 = vsel %vm1739, 0, %v2798
        %v2849 = vsel %vm1739, 0, %v2805
        %v2850 = vsel %vm1739, 0, %v2812
        %v2851 = vsel %vm1739, 0, %v2819
        %v2852 = vunpack.c.l.bf16 %v2692
        %v2853 = vunpack.c.h.bf16 %v2692
        %v2854 = vunpack.c.l.bf16 %v2693
        %v2855 = vunpack.c.h.bf16 %v2693
        %v2856 = vunpack.c.l.bf16 %v2694
        %v2857 = vunpack.c.h.bf16 %v2694
        %v2858 = vunpack.c.l.bf16 %v2695
        %v2859 = vunpack.c.h.bf16 %v2695
        %v2860 = vunpack.c.l.bf16 %v2696
        %v2861 = vunpack.c.h.bf16 %v2696
        %v2862 = vunpack.c.l.bf16 %v2697
        %v2863 = vunpack.c.h.bf16 %v2697
        %v2864 = vunpack.c.l.bf16 %v2698
        %v2865 = vunpack.c.h.bf16 %v2698
        %v2866 = vunpack.c.l.bf16 %v2699
        %v2867 = vunpack.c.h.bf16 %v2699
        %v2868 = vunpack.c.l.bf16 %v2700
        %v2869 = vunpack.c.h.bf16 %v2700
        %v2870 = vunpack.c.l.bf16 %v2701
        %v2871 = vunpack.c.h.bf16 %v2701
        %v2872 = vunpack.c.l.bf16 %v2702
        %v2873 = vunpack.c.h.bf16 %v2702
        %v2874 = vunpack.c.l.bf16 %v2703
        %v2875 = vunpack.c.h.bf16 %v2703
        %v2876 = vunpack.c.l.bf16 %v2704
        %v2877 = vunpack.c.h.bf16 %v2704
        %v2878 = vunpack.c.l.bf16 %v2705
        %v2879 = vunpack.c.h.bf16 %v2705
        %v2880 = vunpack.c.l.bf16 %v2706
        %v2881 = vunpack.c.h.bf16 %v2706
        %v2882 = vunpack.c.l.bf16 %v2707
        %v2883 = vunpack.c.h.bf16 %v2707
        %v2884 = vlaneseq
        %v2885 = vshrl.u32 %v2884, 7
        %v2886 = vsub.s32 3, %v2885
        %v2887 = vrot.slane %v1605, %v2886
        %v2888 = vmul.f32 %v2852, %v2887
        %v2889 = vmul.f32 %v2853, %v2887
        %v2890 = vmul.f32 %v2854, %v2887
        %v2891 = vmul.f32 %v2855, %v2887
        %v2892 = vmul.f32 %v2856, %v2887
        %v2893 = vmul.f32 %v2857, %v2887
        %v2894 = vmul.f32 %v2858, %v2887
        %v2895 = vmul.f32 %v2859, %v2887
        %v2896 = vmul.f32 %v2860, %v2887
        %v2897 = vmul.f32 %v2861, %v2887
        %v2898 = vmul.f32 %v2862, %v2887
        %v2899 = vmul.f32 %v2863, %v2887
        %v2900 = vmul.f32 %v2864, %v2887
        %v2901 = vmul.f32 %v2865, %v2887
        %v2902 = vmul.f32 %v2866, %v2887
        %v2903 = vmul.f32 %v2867, %v2887
        %v2904 = vmul.f32 %v2868, %v2887
        %v2905 = vmul.f32 %v2869, %v2887
        %v2906 = vmul.f32 %v2870, %v2887
        %v2907 = vmul.f32 %v2871, %v2887
        %v2908 = vmul.f32 %v2872, %v2887
        %v2909 = vmul.f32 %v2873, %v2887
        %v2910 = vmul.f32 %v2874, %v2887
        %v2911 = vmul.f32 %v2875, %v2887
        %v2912 = vmul.f32 %v2876, %v2887
        %v2913 = vmul.f32 %v2877, %v2887
        %v2914 = vmul.f32 %v2878, %v2887
        %v2915 = vmul.f32 %v2879, %v2887
        %v2916 = vmul.f32 %v2880, %v2887
        %v2917 = vmul.f32 %v2881, %v2887
        %v2918 = vmul.f32 %v2882, %v2887
        %v2919 = vmul.f32 %v2883, %v2887
        %v2920 = vadd.f32 %v2432, %v2888
        %v2921 = vadd.f32 %v2433, %v2889
        %v2922 = vadd.f32 %v2434, %v2890
        %v2923 = vadd.f32 %v2435, %v2891
        %v2924 = vadd.f32 %v2436, %v2892
        %v2925 = vadd.f32 %v2437, %v2893
        %v2926 = vadd.f32 %v2438, %v2894
        %v2927 = vadd.f32 %v2439, %v2895
        %v2928 = vadd.f32 %v2440, %v2896
        %v2929 = vadd.f32 %v2441, %v2897
        %v2930 = vadd.f32 %v2442, %v2898
        %v2931 = vadd.f32 %v2443, %v2899
        %v2932 = vadd.f32 %v2444, %v2900
        %v2933 = vadd.f32 %v2445, %v2901
        %v2934 = vadd.f32 %v2446, %v2902
        %v2935 = vadd.f32 %v2447, %v2903
        %v2936 = vadd.f32 %v2448, %v2904
        %v2937 = vadd.f32 %v2449, %v2905
        %v2938 = vadd.f32 %v2450, %v2906
        %v2939 = vadd.f32 %v2451, %v2907
        %v2940 = vadd.f32 %v2452, %v2908
        %v2941 = vadd.f32 %v2453, %v2909
        %v2942 = vadd.f32 %v2454, %v2910
        %v2943 = vadd.f32 %v2455, %v2911
        %v2944 = vadd.f32 %v2456, %v2912
        %v2945 = vadd.f32 %v2457, %v2913
        %v2946 = vadd.f32 %v2458, %v2914
        %v2947 = vadd.f32 %v2459, %v2915
        %v2948 = vadd.f32 %v2460, %v2916
        %v2949 = vadd.f32 %v2461, %v2917
        %v2950 = vadd.f32 %v2462, %v2918
        %v2951 = vadd.f32 %v2463, %v2919
        %v2952 = vunpack.c.l.bf16 %v2836
        %v2953 = vunpack.c.h.bf16 %v2836
        %v2954 = vunpack.c.l.bf16 %v2837
        %v2955 = vunpack.c.h.bf16 %v2837
        %v2956 = vunpack.c.l.bf16 %v2838
        %v2957 = vunpack.c.h.bf16 %v2838
        %v2958 = vunpack.c.l.bf16 %v2839
        %v2959 = vunpack.c.h.bf16 %v2839
        %v2960 = vunpack.c.l.bf16 %v2840
        %v2961 = vunpack.c.h.bf16 %v2840
        %v2962 = vunpack.c.l.bf16 %v2841
        %v2963 = vunpack.c.h.bf16 %v2841
        %v2964 = vunpack.c.l.bf16 %v2842
        %v2965 = vunpack.c.h.bf16 %v2842
        %v2966 = vunpack.c.l.bf16 %v2843
        %v2967 = vunpack.c.h.bf16 %v2843
        %v2968 = vunpack.c.l.bf16 %v2844
        %v2969 = vunpack.c.h.bf16 %v2844
        %v2970 = vunpack.c.l.bf16 %v2845
        %v2971 = vunpack.c.h.bf16 %v2845
        %v2972 = vunpack.c.l.bf16 %v2846
        %v2973 = vunpack.c.h.bf16 %v2846
        %v2974 = vunpack.c.l.bf16 %v2847
        %v2975 = vunpack.c.h.bf16 %v2847
        %v2976 = vunpack.c.l.bf16 %v2848
        %v2977 = vunpack.c.h.bf16 %v2848
        %v2978 = vunpack.c.l.bf16 %v2849
        %v2979 = vunpack.c.h.bf16 %v2849
        %v2980 = vunpack.c.l.bf16 %v2850
        %v2981 = vunpack.c.h.bf16 %v2850
        %v2982 = vunpack.c.l.bf16 %v2851
        %v2983 = vunpack.c.h.bf16 %v2851
        %v2984 = vlaneseq
        %v2985 = vshrl.u32 %v2984, 7
        %v2986 = vsub.s32 3, %v2985
        %v2987 = vrot.slane %v1607, %v2986
        %v2988 = vmul.f32 %v2952, %v2987
        %v2989 = vmul.f32 %v2953, %v2987
        %v2990 = vmul.f32 %v2954, %v2987
        %v2991 = vmul.f32 %v2955, %v2987
        %v2992 = vmul.f32 %v2956, %v2987
        %v2993 = vmul.f32 %v2957, %v2987
        %v2994 = vmul.f32 %v2958, %v2987
        %v2995 = vmul.f32 %v2959, %v2987
        %v2996 = vmul.f32 %v2960, %v2987
        %v2997 = vmul.f32 %v2961, %v2987
        %v2998 = vmul.f32 %v2962, %v2987
        %v2999 = vmul.f32 %v2963, %v2987
        %v3000 = vmul.f32 %v2964, %v2987
        %v3001 = vmul.f32 %v2965, %v2987
        %v3002 = vmul.f32 %v2966, %v2987
        %v3003 = vmul.f32 %v2967, %v2987
        %v3004 = vmul.f32 %v2968, %v2987
        %v3005 = vmul.f32 %v2969, %v2987
        %v3006 = vmul.f32 %v2970, %v2987
        %v3007 = vmul.f32 %v2971, %v2987
        %v3008 = vmul.f32 %v2972, %v2987
        %v3009 = vmul.f32 %v2973, %v2987
        %v3010 = vmul.f32 %v2974, %v2987
        %v3011 = vmul.f32 %v2975, %v2987
        %v3012 = vmul.f32 %v2976, %v2987
        %v3013 = vmul.f32 %v2977, %v2987
        %v3014 = vmul.f32 %v2978, %v2987
        %v3015 = vmul.f32 %v2979, %v2987
        %v3016 = vmul.f32 %v2980, %v2987
        %v3017 = vmul.f32 %v2981, %v2987
        %v3018 = vmul.f32 %v2982, %v2987
        %v3019 = vmul.f32 %v2983, %v2987
        %v3020 = vadd.f32 %v2532, %v2988
        %v3021 = vadd.f32 %v2533, %v2989
        %v3022 = vadd.f32 %v2534, %v2990
        %v3023 = vadd.f32 %v2535, %v2991
        %v3024 = vadd.f32 %v2536, %v2992
        %v3025 = vadd.f32 %v2537, %v2993
        %v3026 = vadd.f32 %v2538, %v2994
        %v3027 = vadd.f32 %v2539, %v2995
        %v3028 = vadd.f32 %v2540, %v2996
        %v3029 = vadd.f32 %v2541, %v2997
        %v3030 = vadd.f32 %v2542, %v2998
        %v3031 = vadd.f32 %v2543, %v2999
        %v3032 = vadd.f32 %v2544, %v3000
        %v3033 = vadd.f32 %v2545, %v3001
        %v3034 = vadd.f32 %v2546, %v3002
        %v3035 = vadd.f32 %v2547, %v3003
        %v3036 = vadd.f32 %v2548, %v3004
        %v3037 = vadd.f32 %v2549, %v3005
        %v3038 = vadd.f32 %v2550, %v3006
        %v3039 = vadd.f32 %v2551, %v3007
        %v3040 = vadd.f32 %v2552, %v3008
        %v3041 = vadd.f32 %v2553, %v3009
        %v3042 = vadd.f32 %v2554, %v3010
        %v3043 = vadd.f32 %v2555, %v3011
        %v3044 = vadd.f32 %v2556, %v3012
        %v3045 = vadd.f32 %v2557, %v3013
        %v3046 = vadd.f32 %v2558, %v3014
        %v3047 = vadd.f32 %v2559, %v3015
        %v3048 = vadd.f32 %v2560, %v3016
        %v3049 = vadd.f32 %v2561, %v3017
        %v3050 = vadd.f32 %v2562, %v3018
        %v3051 = vadd.f32 %v2563, %v3019
        %v3052 = vunpack.c.l.bf16 %v401
        %v3053 = vunpack.c.l.bf16 %v402
        %v3054 = vunpack.c.l.bf16 %v405
        %v3055 = vunpack.c.l.bf16 %v406
        %v3056 = vunpack.c.l.bf16 %v409
        %v3057 = vunpack.c.l.bf16 %v410
        %v3058 = vunpack.c.l.bf16 %v413
        %v3059 = vunpack.c.l.bf16 %v414
        %v3060 = vunpack.c.l.bf16 %v417
        %v3061 = vunpack.c.l.bf16 %v418
        %v3062 = vunpack.c.l.bf16 %v421
        %v3063 = vunpack.c.l.bf16 %v422
        %v3064 = vunpack.c.l.bf16 %v425
        %v3065 = vunpack.c.l.bf16 %v426
        %v3066 = vunpack.c.l.bf16 %v429
        %v3067 = vunpack.c.l.bf16 %v430
        %v3068 = vunpack.c.l.bf16 %v433
        %v3069 = vunpack.c.l.bf16 %v434
        %v3070 = vunpack.c.l.bf16 %v437
        %v3071 = vunpack.c.l.bf16 %v438
        %v3072 = vunpack.c.l.bf16 %v441
        %v3073 = vunpack.c.l.bf16 %v442
        %v3074 = vunpack.c.l.bf16 %v445
        %v3075 = vunpack.c.l.bf16 %v446
        %v3076 = vunpack.c.l.bf16 %v449
        %v3077 = vunpack.c.l.bf16 %v450
        %v3078 = vunpack.c.l.bf16 %v453
        %v3079 = vunpack.c.l.bf16 %v454
        %v3080 = vunpack.c.l.bf16 %v457
        %v3081 = vunpack.c.l.bf16 %v458
        %v3082 = vunpack.c.l.bf16 %v461
        %v3083 = vunpack.c.l.bf16 %v462
        %v3084 = vlaneseq
        %v3085 = vshrl.u32 %v3084, 7
        %v3086 = vsub.s32 4, %v3085
        %v3087 = vrot.slane %v1605, %v3086
        %v3088 = vmul.f32 %v3052, %v3087
        %v3089 = vmul.f32 %v3053, %v3087
        %v3090 = vmul.f32 %v3054, %v3087
        %v3091 = vmul.f32 %v3055, %v3087
        %v3092 = vmul.f32 %v3056, %v3087
        %v3093 = vmul.f32 %v3057, %v3087
        %v3094 = vmul.f32 %v3058, %v3087
        %v3095 = vmul.f32 %v3059, %v3087
        %v3096 = vmul.f32 %v3060, %v3087
        %v3097 = vmul.f32 %v3061, %v3087
        %v3098 = vmul.f32 %v3062, %v3087
        %v3099 = vmul.f32 %v3063, %v3087
        %v3100 = vmul.f32 %v3064, %v3087
        %v3101 = vmul.f32 %v3065, %v3087
        %v3102 = vmul.f32 %v3066, %v3087
        %v3103 = vmul.f32 %v3067, %v3087
        %v3104 = vmul.f32 %v3068, %v3087
        %v3105 = vmul.f32 %v3069, %v3087
        %v3106 = vmul.f32 %v3070, %v3087
        %v3107 = vmul.f32 %v3071, %v3087
        %v3108 = vmul.f32 %v3072, %v3087
        %v3109 = vmul.f32 %v3073, %v3087
        %v3110 = vmul.f32 %v3074, %v3087
        %v3111 = vmul.f32 %v3075, %v3087
        %v3112 = vmul.f32 %v3076, %v3087
        %v3113 = vmul.f32 %v3077, %v3087
        %v3114 = vmul.f32 %v3078, %v3087
        %v3115 = vmul.f32 %v3079, %v3087
        %v3116 = vmul.f32 %v3080, %v3087
        %v3117 = vmul.f32 %v3081, %v3087
        %v3118 = vmul.f32 %v3082, %v3087
        %v3119 = vmul.f32 %v3083, %v3087
        %v3120 = vadd.f32 %v2920, %v3088
        %v3121 = vadd.f32 %v2921, %v3089
        %v3122 = vadd.f32 %v2922, %v3090
        %v3123 = vadd.f32 %v2923, %v3091
        %v3124 = vadd.f32 %v2924, %v3092
        %v3125 = vadd.f32 %v2925, %v3093
        %v3126 = vadd.f32 %v2926, %v3094
        %v3127 = vadd.f32 %v2927, %v3095
        %v3128 = vadd.f32 %v2928, %v3096
        %v3129 = vadd.f32 %v2929, %v3097
        %v3130 = vadd.f32 %v2930, %v3098
        %v3131 = vadd.f32 %v2931, %v3099
        %v3132 = vadd.f32 %v2932, %v3100
        %v3133 = vadd.f32 %v2933, %v3101
        %v3134 = vadd.f32 %v2934, %v3102
        %v3135 = vadd.f32 %v2935, %v3103
        %v3136 = vadd.f32 %v2936, %v3104
        %v3137 = vadd.f32 %v2937, %v3105
        %v3138 = vadd.f32 %v2938, %v3106
        %v3139 = vadd.f32 %v2939, %v3107
        %v3140 = vadd.f32 %v2940, %v3108
        %v3141 = vadd.f32 %v2941, %v3109
        %v3142 = vadd.f32 %v2942, %v3110
        %v3143 = vadd.f32 %v2943, %v3111
        %v3144 = vadd.f32 %v2944, %v3112
        %v3145 = vadd.f32 %v2945, %v3113
        %v3146 = vadd.f32 %v2946, %v3114
        %v3147 = vadd.f32 %v2947, %v3115
        %v3148 = vadd.f32 %v2948, %v3116
        %v3149 = vadd.f32 %v2949, %v3117
        %v3150 = vadd.f32 %v2950, %v3118
        %v3151 = vadd.f32 %v2951, %v3119
        %v3152 = vunpack.c.l.bf16 %v1478
        %v3153 = vunpack.c.h.bf16 %v1478
        %v3154 = vunpack.c.l.bf16 %v1482
        %v3155 = vunpack.c.h.bf16 %v1482
        %v3156 = vunpack.c.l.bf16 %v1486
        %v3157 = vunpack.c.h.bf16 %v1486
        %v3158 = vunpack.c.l.bf16 %v1490
        %v3159 = vunpack.c.h.bf16 %v1490
        %v3160 = vunpack.c.l.bf16 %v1494
        %v3161 = vunpack.c.h.bf16 %v1494
        %v3162 = vunpack.c.l.bf16 %v1498
        %v3163 = vunpack.c.h.bf16 %v1498
        %v3164 = vunpack.c.l.bf16 %v1502
        %v3165 = vunpack.c.h.bf16 %v1502
        %v3166 = vunpack.c.l.bf16 %v1506
        %v3167 = vunpack.c.h.bf16 %v1506
        %v3168 = vunpack.c.l.bf16 %v1510
        %v3169 = vunpack.c.h.bf16 %v1510
        %v3170 = vunpack.c.l.bf16 %v1514
        %v3171 = vunpack.c.h.bf16 %v1514
        %v3172 = vunpack.c.l.bf16 %v1518
        %v3173 = vunpack.c.h.bf16 %v1518
        %v3174 = vunpack.c.l.bf16 %v1522
        %v3175 = vunpack.c.h.bf16 %v1522
        %v3176 = vunpack.c.l.bf16 %v1526
        %v3177 = vunpack.c.h.bf16 %v1526
        %v3178 = vunpack.c.l.bf16 %v1530
        %v3179 = vunpack.c.h.bf16 %v1530
        %v3180 = vunpack.c.l.bf16 %v1534
        %v3181 = vunpack.c.h.bf16 %v1534
        %v3182 = vunpack.c.l.bf16 %v1538
        %v3183 = vunpack.c.h.bf16 %v1538
        %v3184 = vlaneseq
        %v3185 = vshrl.u32 %v3184, 7
        %v3186 = vsub.s32 4, %v3185
        %v3187 = vrot.slane %v1607, %v3186
        %v3188 = vmul.f32 %v3152, %v3187
        %v3189 = vmul.f32 %v3153, %v3187
        %v3190 = vmul.f32 %v3154, %v3187
        %v3191 = vmul.f32 %v3155, %v3187
        %v3192 = vmul.f32 %v3156, %v3187
        %v3193 = vmul.f32 %v3157, %v3187
        %v3194 = vmul.f32 %v3158, %v3187
        %v3195 = vmul.f32 %v3159, %v3187
        %v3196 = vmul.f32 %v3160, %v3187
        %v3197 = vmul.f32 %v3161, %v3187
        %v3198 = vmul.f32 %v3162, %v3187
        %v3199 = vmul.f32 %v3163, %v3187
        %v3200 = vmul.f32 %v3164, %v3187
        %v3201 = vmul.f32 %v3165, %v3187
        %v3202 = vmul.f32 %v3166, %v3187
        %v3203 = vmul.f32 %v3167, %v3187
        %v3204 = vmul.f32 %v3168, %v3187
        %v3205 = vmul.f32 %v3169, %v3187
        %v3206 = vmul.f32 %v3170, %v3187
        %v3207 = vmul.f32 %v3171, %v3187
        %v3208 = vmul.f32 %v3172, %v3187
        %v3209 = vmul.f32 %v3173, %v3187
        %v3210 = vmul.f32 %v3174, %v3187
        %v3211 = vmul.f32 %v3175, %v3187
        %v3212 = vmul.f32 %v3176, %v3187
        %v3213 = vmul.f32 %v3177, %v3187
        %v3214 = vmul.f32 %v3178, %v3187
        %v3215 = vmul.f32 %v3179, %v3187
        %v3216 = vmul.f32 %v3180, %v3187
        %v3217 = vmul.f32 %v3181, %v3187
        %v3218 = vmul.f32 %v3182, %v3187
        %v3219 = vmul.f32 %v3183, %v3187
        %v3220 = vadd.f32 %v3020, %v3188
        %v3221 = vadd.f32 %v3021, %v3189
        %v3222 = vadd.f32 %v3022, %v3190
        %v3223 = vadd.f32 %v3023, %v3191
        %v3224 = vadd.f32 %v3024, %v3192
        %v3225 = vadd.f32 %v3025, %v3193
        %v3226 = vadd.f32 %v3026, %v3194
        %v3227 = vadd.f32 %v3027, %v3195
        %v3228 = vadd.f32 %v3028, %v3196
        %v3229 = vadd.f32 %v3029, %v3197
        %v3230 = vadd.f32 %v3030, %v3198
        %v3231 = vadd.f32 %v3031, %v3199
        %v3232 = vadd.f32 %v3032, %v3200
        %v3233 = vadd.f32 %v3033, %v3201
        %v3234 = vadd.f32 %v3034, %v3202
        %v3235 = vadd.f32 %v3035, %v3203
        %v3236 = vadd.f32 %v3036, %v3204
        %v3237 = vadd.f32 %v3037, %v3205
        %v3238 = vadd.f32 %v3038, %v3206
        %v3239 = vadd.f32 %v3039, %v3207
        %v3240 = vadd.f32 %v3040, %v3208
        %v3241 = vadd.f32 %v3041, %v3209
        %v3242 = vadd.f32 %v3042, %v3210
        %v3243 = vadd.f32 %v3043, %v3211
        %v3244 = vadd.f32 %v3044, %v3212
        %v3245 = vadd.f32 %v3045, %v3213
        %v3246 = vadd.f32 %v3046, %v3214
        %v3247 = vadd.f32 %v3047, %v3215
        %v3248 = vadd.f32 %v3048, %v3216
        %v3249 = vadd.f32 %v3049, %v3217
        %v3250 = vadd.f32 %v3050, %v3218
        %v3251 = vadd.f32 %v3051, %v3219
        %v3252 = vrot.slane %v401, 4
        %v3253 = vrot.slane %v402, 4
        %v3254 = vrot.slane %v405, 4
        %v3255 = vrot.slane %v406, 4
        %v3256 = vrot.slane %v409, 4
        %v3257 = vrot.slane %v410, 4
        %v3258 = vrot.slane %v413, 4
        %v3259 = vrot.slane %v414, 4
        %v3260 = vrot.slane %v417, 4
        %v3261 = vrot.slane %v418, 4
        %v3262 = vrot.slane %v421, 4
        %v3263 = vrot.slane %v422, 4
        %v3264 = vrot.slane %v425, 4
        %v3265 = vrot.slane %v426, 4
        %v3266 = vrot.slane %v429, 4
        %v3267 = vrot.slane %v430, 4
        %v3268 = vrot.slane %v433, 4
        %v3269 = vrot.slane %v434, 4
        %v3270 = vrot.slane %v437, 4
        %v3271 = vrot.slane %v438, 4
        %v3272 = vrot.slane %v441, 4
        %v3273 = vrot.slane %v442, 4
        %v3274 = vrot.slane %v445, 4
        %v3275 = vrot.slane %v446, 4
        %v3276 = vrot.slane %v449, 4
        %v3277 = vrot.slane %v450, 4
        %v3278 = vrot.slane %v453, 4
        %v3279 = vrot.slane %v454, 4
        %v3280 = vrot.slane %v457, 4
        %v3281 = vrot.slane %v458, 4
        %v3282 = vrot.slane %v461, 4
        %v3283 = vrot.slane %v462, 4
        %v3316 = vunpack.c.l.bf16 %v3252
        %v3317 = vunpack.c.l.bf16 %v3253
        %v3318 = vunpack.c.l.bf16 %v3254
        %v3319 = vunpack.c.l.bf16 %v3255
        %v3320 = vunpack.c.l.bf16 %v3256
        %v3321 = vunpack.c.l.bf16 %v3257
        %v3322 = vunpack.c.l.bf16 %v3258
        %v3323 = vunpack.c.l.bf16 %v3259
        %v3324 = vunpack.c.l.bf16 %v3260
        %v3325 = vunpack.c.l.bf16 %v3261
        %v3326 = vunpack.c.l.bf16 %v3262
        %v3327 = vunpack.c.l.bf16 %v3263
        %v3328 = vunpack.c.l.bf16 %v3264
        %v3329 = vunpack.c.l.bf16 %v3265
        %v3330 = vunpack.c.l.bf16 %v3266
        %v3331 = vunpack.c.l.bf16 %v3267
        %v3332 = vunpack.c.l.bf16 %v3268
        %v3333 = vunpack.c.l.bf16 %v3269
        %v3334 = vunpack.c.l.bf16 %v3270
        %v3335 = vunpack.c.l.bf16 %v3271
        %v3336 = vunpack.c.l.bf16 %v3272
        %v3337 = vunpack.c.l.bf16 %v3273
        %v3338 = vunpack.c.l.bf16 %v3274
        %v3339 = vunpack.c.l.bf16 %v3275
        %v3340 = vunpack.c.l.bf16 %v3276
        %v3341 = vunpack.c.l.bf16 %v3277
        %v3342 = vunpack.c.l.bf16 %v3278
        %v3343 = vunpack.c.l.bf16 %v3279
        %v3344 = vunpack.c.l.bf16 %v3280
        %v3345 = vunpack.c.l.bf16 %v3281
        %v3346 = vunpack.c.l.bf16 %v3282
        %v3347 = vunpack.c.l.bf16 %v3283
        %v3348 = vlaneseq
        %v3349 = vshrl.u32 %v3348, 7
        %v3350 = vsub.s32 5, %v3349
        %v3351 = vrot.slane %v1605, %v3350
        %v3352 = vmul.f32 %v3316, %v3351
        %v3353 = vmul.f32 %v3317, %v3351
        %v3354 = vmul.f32 %v3318, %v3351
        %v3355 = vmul.f32 %v3319, %v3351
        %v3356 = vmul.f32 %v3320, %v3351
        %v3357 = vmul.f32 %v3321, %v3351
        %v3358 = vmul.f32 %v3322, %v3351
        %v3359 = vmul.f32 %v3323, %v3351
        %v3360 = vmul.f32 %v3324, %v3351
        %v3361 = vmul.f32 %v3325, %v3351
        %v3362 = vmul.f32 %v3326, %v3351
        %v3363 = vmul.f32 %v3327, %v3351
        %v3364 = vmul.f32 %v3328, %v3351
        %v3365 = vmul.f32 %v3329, %v3351
        %v3366 = vmul.f32 %v3330, %v3351
        %v3367 = vmul.f32 %v3331, %v3351
        %v3368 = vmul.f32 %v3332, %v3351
        %v3369 = vmul.f32 %v3333, %v3351
        %v3370 = vmul.f32 %v3334, %v3351
        %v3371 = vmul.f32 %v3335, %v3351
        %v3372 = vmul.f32 %v3336, %v3351
        %v3373 = vmul.f32 %v3337, %v3351
        %v3374 = vmul.f32 %v3338, %v3351
        %v3375 = vmul.f32 %v3339, %v3351
        %v3376 = vmul.f32 %v3340, %v3351
        %v3377 = vmul.f32 %v3341, %v3351
        %v3378 = vmul.f32 %v3342, %v3351
        %v3379 = vmul.f32 %v3343, %v3351
        %v3380 = vmul.f32 %v3344, %v3351
        %v3381 = vmul.f32 %v3345, %v3351
        %v3382 = vmul.f32 %v3346, %v3351
        %v3383 = vmul.f32 %v3347, %v3351
        %v3384 = vadd.f32 %v3120, %v3352
        %v3385 = vadd.f32 %v3121, %v3353
        %v3386 = vadd.f32 %v3122, %v3354
        %v3387 = vadd.f32 %v3123, %v3355
        %v3388 = vadd.f32 %v3124, %v3356
        %v3389 = vadd.f32 %v3125, %v3357
        %v3390 = vadd.f32 %v3126, %v3358
        %v3391 = vadd.f32 %v3127, %v3359
        %v3392 = vadd.f32 %v3128, %v3360
        %v3393 = vadd.f32 %v3129, %v3361
        %v3394 = vadd.f32 %v3130, %v3362
        %v3395 = vadd.f32 %v3131, %v3363
        %v3396 = vadd.f32 %v3132, %v3364
        %v3397 = vadd.f32 %v3133, %v3365
        %v3398 = vadd.f32 %v3134, %v3366
        %v3399 = vadd.f32 %v3135, %v3367
        %v3400 = vadd.f32 %v3136, %v3368
        %v3401 = vadd.f32 %v3137, %v3369
        %v3402 = vadd.f32 %v3138, %v3370
        %v3403 = vadd.f32 %v3139, %v3371
        %v3404 = vadd.f32 %v3140, %v3372
        %v3405 = vadd.f32 %v3141, %v3373
        %v3406 = vadd.f32 %v3142, %v3374
        %v3407 = vadd.f32 %v3143, %v3375
        %v3408 = vadd.f32 %v3144, %v3376
        %v3409 = vadd.f32 %v3145, %v3377
        %v3410 = vadd.f32 %v3146, %v3378
        %v3411 = vadd.f32 %v3147, %v3379
        %v3412 = vadd.f32 %v3148, %v3380
        %v3413 = vadd.f32 %v3149, %v3381
        %v3414 = vadd.f32 %v3150, %v3382
        %v3415 = vadd.f32 %v3151, %v3383
        %v3416 = vunpack.c.l.bf16 %v1479
        %v3417 = vunpack.c.h.bf16 %v1479
        %v3418 = vunpack.c.l.bf16 %v1483
        %v3419 = vunpack.c.h.bf16 %v1483
        %v3420 = vunpack.c.l.bf16 %v1487
        %v3421 = vunpack.c.h.bf16 %v1487
        %v3422 = vunpack.c.l.bf16 %v1491
        %v3423 = vunpack.c.h.bf16 %v1491
        %v3424 = vunpack.c.l.bf16 %v1495
        %v3425 = vunpack.c.h.bf16 %v1495
        %v3426 = vunpack.c.l.bf16 %v1499
        %v3427 = vunpack.c.h.bf16 %v1499
        %v3428 = vunpack.c.l.bf16 %v1503
        %v3429 = vunpack.c.h.bf16 %v1503
        %v3430 = vunpack.c.l.bf16 %v1507
        %v3431 = vunpack.c.h.bf16 %v1507
        %v3432 = vunpack.c.l.bf16 %v1511
        %v3433 = vunpack.c.h.bf16 %v1511
        %v3434 = vunpack.c.l.bf16 %v1515
        %v3435 = vunpack.c.h.bf16 %v1515
        %v3436 = vunpack.c.l.bf16 %v1519
        %v3437 = vunpack.c.h.bf16 %v1519
        %v3438 = vunpack.c.l.bf16 %v1523
        %v3439 = vunpack.c.h.bf16 %v1523
        %v3440 = vunpack.c.l.bf16 %v1527
        %v3441 = vunpack.c.h.bf16 %v1527
        %v3442 = vunpack.c.l.bf16 %v1531
        %v3443 = vunpack.c.h.bf16 %v1531
        %v3444 = vunpack.c.l.bf16 %v1535
        %v3445 = vunpack.c.h.bf16 %v1535
        %v3446 = vunpack.c.l.bf16 %v1539
        %v3447 = vunpack.c.h.bf16 %v1539
        %v3448 = vlaneseq
        %v3449 = vshrl.u32 %v3448, 7
        %v3450 = vsub.s32 5, %v3449
        %v3451 = vrot.slane %v1607, %v3450
        %v3452 = vmul.f32 %v3416, %v3451
        %v3453 = vmul.f32 %v3417, %v3451
        %v3454 = vmul.f32 %v3418, %v3451
        %v3455 = vmul.f32 %v3419, %v3451
        %v3456 = vmul.f32 %v3420, %v3451
        %v3457 = vmul.f32 %v3421, %v3451
        %v3458 = vmul.f32 %v3422, %v3451
        %v3459 = vmul.f32 %v3423, %v3451
        %v3460 = vmul.f32 %v3424, %v3451
        %v3461 = vmul.f32 %v3425, %v3451
        %v3462 = vmul.f32 %v3426, %v3451
        %v3463 = vmul.f32 %v3427, %v3451
        %v3464 = vmul.f32 %v3428, %v3451
        %v3465 = vmul.f32 %v3429, %v3451
        %v3466 = vmul.f32 %v3430, %v3451
        %v3467 = vmul.f32 %v3431, %v3451
        %v3468 = vmul.f32 %v3432, %v3451
        %v3469 = vmul.f32 %v3433, %v3451
        %v3470 = vmul.f32 %v3434, %v3451
        %v3471 = vmul.f32 %v3435, %v3451
        %v3472 = vmul.f32 %v3436, %v3451
        %v3473 = vmul.f32 %v3437, %v3451
        %v3474 = vmul.f32 %v3438, %v3451
        %v3475 = vmul.f32 %v3439, %v3451
        %v3476 = vmul.f32 %v3440, %v3451
        %v3477 = vmul.f32 %v3441, %v3451
        %v3478 = vmul.f32 %v3442, %v3451
        %v3479 = vmul.f32 %v3443, %v3451
        %v3480 = vmul.f32 %v3444, %v3451
        %v3481 = vmul.f32 %v3445, %v3451
        %v3482 = vmul.f32 %v3446, %v3451
        %v3483 = vmul.f32 %v3447, %v3451
        %v3484 = vadd.f32 %v3220, %v3452
        %v3485 = vadd.f32 %v3221, %v3453
        %v3486 = vadd.f32 %v3222, %v3454
        %v3487 = vadd.f32 %v3223, %v3455
        %v3488 = vadd.f32 %v3224, %v3456
        %v3489 = vadd.f32 %v3225, %v3457
        %v3490 = vadd.f32 %v3226, %v3458
        %v3491 = vadd.f32 %v3227, %v3459
        %v3492 = vadd.f32 %v3228, %v3460
        %v3493 = vadd.f32 %v3229, %v3461
        %v3494 = vadd.f32 %v3230, %v3462
        %v3495 = vadd.f32 %v3231, %v3463
        %v3496 = vadd.f32 %v3232, %v3464
        %v3497 = vadd.f32 %v3233, %v3465
        %v3498 = vadd.f32 %v3234, %v3466
        %v3499 = vadd.f32 %v3235, %v3467
        %v3500 = vadd.f32 %v3236, %v3468
        %v3501 = vadd.f32 %v3237, %v3469
        %v3502 = vadd.f32 %v3238, %v3470
        %v3503 = vadd.f32 %v3239, %v3471
        %v3504 = vadd.f32 %v3240, %v3472
        %v3505 = vadd.f32 %v3241, %v3473
        %v3506 = vadd.f32 %v3242, %v3474
        %v3507 = vadd.f32 %v3243, %v3475
        %v3508 = vadd.f32 %v3244, %v3476
        %v3509 = vadd.f32 %v3245, %v3477
        %v3510 = vadd.f32 %v3246, %v3478
        %v3511 = vadd.f32 %v3247, %v3479
        %v3512 = vadd.f32 %v3248, %v3480
        %v3513 = vadd.f32 %v3249, %v3481
        %v3514 = vadd.f32 %v3250, %v3482
        %v3515 = vadd.f32 %v3251, %v3483
        %v3517 = vshrl.u32 %v772, 16
        %v3519 = vrot.slane %v3517, 7
        %v3520 = vshll.u32 %v772, 16
        %v3522 = vor.u32 %v3519, %v3520
        %v3524 = vsel %vm1739, 0, %v3522
        %v3526 = vshrl.u32 %v1541, 16
        %v3528 = vrot.slane %v3526, 7
        %v3529 = vshll.u32 %v1541, 16
        %v3531 = vor.u32 %v3528, %v3529
        %v3533 = vsel %vm1739, 0, %v3531
        %v3534 = vunpack.c.l.bf16 %v3524
        %v3535 = vunpack.c.h.bf16 %v3524
        %v3536 = vlaneseq
        %v3537 = vshrl.u32 %v3536, 7
        %v3538 = vsub.s32 6, %v3537
        %v3539 = vrot.slane %v1605, %v3538
        %v3540 = vmul.f32 %v1902, %v3539
        %v3541 = vmul.f32 %v1903, %v3539
        %v3542 = vmul.f32 %v1904, %v3539
        %v3543 = vmul.f32 %v1905, %v3539
        %v3544 = vmul.f32 %v1906, %v3539
        %v3545 = vmul.f32 %v1907, %v3539
        %v3546 = vmul.f32 %v1908, %v3539
        %v3547 = vmul.f32 %v1909, %v3539
        %v3548 = vmul.f32 %v1910, %v3539
        %v3549 = vmul.f32 %v1911, %v3539
        %v3550 = vmul.f32 %v1912, %v3539
        %v3551 = vmul.f32 %v1913, %v3539
        %v3552 = vmul.f32 %v1914, %v3539
        %v3553 = vmul.f32 %v1915, %v3539
        %v3554 = vmul.f32 %v1916, %v3539
        %v3555 = vmul.f32 %v1917, %v3539
        %v3556 = vmul.f32 %v1918, %v3539
        %v3557 = vmul.f32 %v1919, %v3539
        %v3558 = vmul.f32 %v1920, %v3539
        %v3559 = vmul.f32 %v1921, %v3539
        %v3560 = vmul.f32 %v1922, %v3539
        %v3561 = vmul.f32 %v1923, %v3539
        %v3562 = vmul.f32 %v1924, %v3539
        %v3563 = vmul.f32 %v1925, %v3539
        %v3564 = vmul.f32 %v1926, %v3539
        %v3565 = vmul.f32 %v1927, %v3539
        %v3566 = vmul.f32 %v1928, %v3539
        %v3567 = vmul.f32 %v1929, %v3539
        %v3568 = vmul.f32 %v1930, %v3539
        %v3569 = vmul.f32 %v1931, %v3539
        %v3570 = vmul.f32 %v3534, %v3539
        %v3571 = vmul.f32 %v3535, %v3539
        %v3572 = vadd.f32 %v3384, %v3540
        %v3573 = vadd.f32 %v3385, %v3541
        %v3574 = vadd.f32 %v3386, %v3542
        %v3575 = vadd.f32 %v3387, %v3543
        %v3576 = vadd.f32 %v3388, %v3544
        %v3577 = vadd.f32 %v3389, %v3545
        %v3578 = vadd.f32 %v3390, %v3546
        %v3579 = vadd.f32 %v3391, %v3547
        %v3580 = vadd.f32 %v3392, %v3548
        %v3581 = vadd.f32 %v3393, %v3549
        %v3582 = vadd.f32 %v3394, %v3550
        %v3583 = vadd.f32 %v3395, %v3551
        %v3584 = vadd.f32 %v3396, %v3552
        %v3585 = vadd.f32 %v3397, %v3553
        %v3586 = vadd.f32 %v3398, %v3554
        %v3587 = vadd.f32 %v3399, %v3555
        %v3588 = vadd.f32 %v3400, %v3556
        %v3589 = vadd.f32 %v3401, %v3557
        %v3590 = vadd.f32 %v3402, %v3558
        %v3591 = vadd.f32 %v3403, %v3559
        %v3592 = vadd.f32 %v3404, %v3560
        %v3593 = vadd.f32 %v3405, %v3561
        %v3594 = vadd.f32 %v3406, %v3562
        %v3595 = vadd.f32 %v3407, %v3563
        %v3596 = vadd.f32 %v3408, %v3564
        %v3597 = vadd.f32 %v3409, %v3565
        %v3598 = vadd.f32 %v3410, %v3566
        %v3599 = vadd.f32 %v3411, %v3567
        %v3600 = vadd.f32 %v3412, %v3568
        %v3601 = vadd.f32 %v3413, %v3569
        %v3602 = vadd.f32 %v3414, %v3570
        %v3603 = vadd.f32 %v3415, %v3571
        %v3604 = vunpack.c.l.bf16 %v3533
        %v3605 = vunpack.c.h.bf16 %v3533
        %v3606 = vlaneseq
        %v3607 = vshrl.u32 %v3606, 7
        %v3608 = vsub.s32 6, %v3607
        %v3609 = vrot.slane %v1607, %v3608
        %v3610 = vmul.f32 %v2002, %v3609
        %v3611 = vmul.f32 %v2003, %v3609
        %v3612 = vmul.f32 %v2004, %v3609
        %v3613 = vmul.f32 %v2005, %v3609
        %v3614 = vmul.f32 %v2006, %v3609
        %v3615 = vmul.f32 %v2007, %v3609
        %v3616 = vmul.f32 %v2008, %v3609
        %v3617 = vmul.f32 %v2009, %v3609
        %v3618 = vmul.f32 %v2010, %v3609
        %v3619 = vmul.f32 %v2011, %v3609
        %v3620 = vmul.f32 %v2012, %v3609
        %v3621 = vmul.f32 %v2013, %v3609
        %v3622 = vmul.f32 %v2014, %v3609
        %v3623 = vmul.f32 %v2015, %v3609
        %v3624 = vmul.f32 %v2016, %v3609
        %v3625 = vmul.f32 %v2017, %v3609
        %v3626 = vmul.f32 %v2018, %v3609
        %v3627 = vmul.f32 %v2019, %v3609
        %v3628 = vmul.f32 %v2020, %v3609
        %v3629 = vmul.f32 %v2021, %v3609
        %v3630 = vmul.f32 %v2022, %v3609
        %v3631 = vmul.f32 %v2023, %v3609
        %v3632 = vmul.f32 %v2024, %v3609
        %v3633 = vmul.f32 %v2025, %v3609
        %v3634 = vmul.f32 %v2026, %v3609
        %v3635 = vmul.f32 %v2027, %v3609
        %v3636 = vmul.f32 %v2028, %v3609
        %v3637 = vmul.f32 %v2029, %v3609
        %v3638 = vmul.f32 %v2030, %v3609
        %v3639 = vmul.f32 %v2031, %v3609
        %v3640 = vmul.f32 %v3604, %v3609
        %v3641 = vmul.f32 %v3605, %v3609
        %v3642 = vadd.f32 %v3484, %v3610
        %v3643 = vadd.f32 %v3485, %v3611
        %v3644 = vadd.f32 %v3486, %v3612
        %v3645 = vadd.f32 %v3487, %v3613
        %v3646 = vadd.f32 %v3488, %v3614
        %v3647 = vadd.f32 %v3489, %v3615
        %v3648 = vadd.f32 %v3490, %v3616
        %v3649 = vadd.f32 %v3491, %v3617
        %v3650 = vadd.f32 %v3492, %v3618
        %v3651 = vadd.f32 %v3493, %v3619
        %v3652 = vadd.f32 %v3494, %v3620
        %v3653 = vadd.f32 %v3495, %v3621
        %v3654 = vadd.f32 %v3496, %v3622
        %v3655 = vadd.f32 %v3497, %v3623
        %v3656 = vadd.f32 %v3498, %v3624
        %v3657 = vadd.f32 %v3499, %v3625
        %v3658 = vadd.f32 %v3500, %v3626
        %v3659 = vadd.f32 %v3501, %v3627
        %v3660 = vadd.f32 %v3502, %v3628
        %v3661 = vadd.f32 %v3503, %v3629
        %v3662 = vadd.f32 %v3504, %v3630
        %v3663 = vadd.f32 %v3505, %v3631
        %v3664 = vadd.f32 %v3506, %v3632
        %v3665 = vadd.f32 %v3507, %v3633
        %v3666 = vadd.f32 %v3508, %v3634
        %v3667 = vadd.f32 %v3509, %v3635
        %v3668 = vadd.f32 %v3510, %v3636
        %v3669 = vadd.f32 %v3511, %v3637
        %v3670 = vadd.f32 %v3512, %v3638
        %v3671 = vadd.f32 %v3513, %v3639
        %v3672 = vadd.f32 %v3514, %v3640
        %v3673 = vadd.f32 %v3515, %v3641
        %v3674 = vunpack.c.l.bf16 %v463
        %v3675 = vunpack.c.l.bf16 %v464
        %v3676 = vlaneseq
        %v3677 = vshrl.u32 %v3676, 7
        %v3678 = vsub.s32 7, %v3677
        %v3679 = vrot.slane %v1605, %v3678
        %v3680 = vmul.f32 %v2102, %v3679
        %v3681 = vmul.f32 %v2103, %v3679
        %v3682 = vmul.f32 %v2104, %v3679
        %v3683 = vmul.f32 %v2105, %v3679
        %v3684 = vmul.f32 %v2106, %v3679
        %v3685 = vmul.f32 %v2107, %v3679
        %v3686 = vmul.f32 %v2108, %v3679
        %v3687 = vmul.f32 %v2109, %v3679
        %v3688 = vmul.f32 %v2110, %v3679
        %v3689 = vmul.f32 %v2111, %v3679
        %v3690 = vmul.f32 %v2112, %v3679
        %v3691 = vmul.f32 %v2113, %v3679
        %v3692 = vmul.f32 %v2114, %v3679
        %v3693 = vmul.f32 %v2115, %v3679
        %v3694 = vmul.f32 %v2116, %v3679
        %v3695 = vmul.f32 %v2117, %v3679
        %v3696 = vmul.f32 %v2118, %v3679
        %v3697 = vmul.f32 %v2119, %v3679
        %v3698 = vmul.f32 %v2120, %v3679
        %v3699 = vmul.f32 %v2121, %v3679
        %v3700 = vmul.f32 %v2122, %v3679
        %v3701 = vmul.f32 %v2123, %v3679
        %v3702 = vmul.f32 %v2124, %v3679
        %v3703 = vmul.f32 %v2125, %v3679
        %v3704 = vmul.f32 %v2126, %v3679
        %v3705 = vmul.f32 %v2127, %v3679
        %v3706 = vmul.f32 %v2128, %v3679
        %v3707 = vmul.f32 %v2129, %v3679
        %v3708 = vmul.f32 %v2130, %v3679
        %v3709 = vmul.f32 %v2131, %v3679
        %v3710 = vmul.f32 %v3674, %v3679
        %v3711 = vmul.f32 %v3675, %v3679
        %v3712 = vadd.f32 %v3572, %v3680
        %v3713 = vadd.f32 %v3573, %v3681
        %v3714 = vadd.f32 %v3574, %v3682
        %v3715 = vadd.f32 %v3575, %v3683
        %v3716 = vadd.f32 %v3576, %v3684
        %v3717 = vadd.f32 %v3577, %v3685
        %v3718 = vadd.f32 %v3578, %v3686
        %v3719 = vadd.f32 %v3579, %v3687
        %v3720 = vadd.f32 %v3580, %v3688
        %v3721 = vadd.f32 %v3581, %v3689
        %v3722 = vadd.f32 %v3582, %v3690
        %v3723 = vadd.f32 %v3583, %v3691
        %v3724 = vadd.f32 %v3584, %v3692
        %v3725 = vadd.f32 %v3585, %v3693
        %v3726 = vadd.f32 %v3586, %v3694
        %v3727 = vadd.f32 %v3587, %v3695
        %v3728 = vadd.f32 %v3588, %v3696
        %v3729 = vadd.f32 %v3589, %v3697
        %v3730 = vadd.f32 %v3590, %v3698
        %v3731 = vadd.f32 %v3591, %v3699
        %v3732 = vadd.f32 %v3592, %v3700
        %v3733 = vadd.f32 %v3593, %v3701
        %v3734 = vadd.f32 %v3594, %v3702
        %v3735 = vadd.f32 %v3595, %v3703
        %v3736 = vadd.f32 %v3596, %v3704
        %v3737 = vadd.f32 %v3597, %v3705
        %v3738 = vadd.f32 %v3598, %v3706
        %v3739 = vadd.f32 %v3599, %v3707
        %v3740 = vadd.f32 %v3600, %v3708
        %v3741 = vadd.f32 %v3601, %v3709
        %v3742 = vadd.f32 %v3602, %v3710
        %v3743 = vadd.f32 %v3603, %v3711
        %v3744 = vunpack.c.l.bf16 %v1540
        %v3745 = vunpack.c.h.bf16 %v1540
        %v3746 = vlaneseq
        %v3747 = vshrl.u32 %v3746, 7
        %v3748 = vsub.s32 7, %v3747
        %v3749 = vrot.slane %v1607, %v3748
        %v3750 = vmul.f32 %v2202, %v3749
        %v3751 = vmul.f32 %v2203, %v3749
        %v3752 = vmul.f32 %v2204, %v3749
        %v3753 = vmul.f32 %v2205, %v3749
        %v3754 = vmul.f32 %v2206, %v3749
        %v3755 = vmul.f32 %v2207, %v3749
        %v3756 = vmul.f32 %v2208, %v3749
        %v3757 = vmul.f32 %v2209, %v3749
        %v3758 = vmul.f32 %v2210, %v3749
        %v3759 = vmul.f32 %v2211, %v3749
        %v3760 = vmul.f32 %v2212, %v3749
        %v3761 = vmul.f32 %v2213, %v3749
        %v3762 = vmul.f32 %v2214, %v3749
        %v3763 = vmul.f32 %v2215, %v3749
        %v3764 = vmul.f32 %v2216, %v3749
        %v3765 = vmul.f32 %v2217, %v3749
        %v3766 = vmul.f32 %v2218, %v3749
        %v3767 = vmul.f32 %v2219, %v3749
        %v3768 = vmul.f32 %v2220, %v3749
        %v3769 = vmul.f32 %v2221, %v3749
        %v3770 = vmul.f32 %v2222, %v3749
        %v3771 = vmul.f32 %v2223, %v3749
        %v3772 = vmul.f32 %v2224, %v3749
        %v3773 = vmul.f32 %v2225, %v3749
        %v3774 = vmul.f32 %v2226, %v3749
        %v3775 = vmul.f32 %v2227, %v3749
        %v3776 = vmul.f32 %v2228, %v3749
        %v3777 = vmul.f32 %v2229, %v3749
        %v3778 = vmul.f32 %v2230, %v3749
        %v3779 = vmul.f32 %v2231, %v3749
        %v3780 = vmul.f32 %v3744, %v3749
        %v3781 = vmul.f32 %v3745, %v3749
        %v3782 = vadd.f32 %v3642, %v3750
        %v3783 = vadd.f32 %v3643, %v3751
        %v3784 = vadd.f32 %v3644, %v3752
        %v3785 = vadd.f32 %v3645, %v3753
        %v3786 = vadd.f32 %v3646, %v3754
        %v3787 = vadd.f32 %v3647, %v3755
        %v3788 = vadd.f32 %v3648, %v3756
        %v3789 = vadd.f32 %v3649, %v3757
        %v3790 = vadd.f32 %v3650, %v3758
        %v3791 = vadd.f32 %v3651, %v3759
        %v3792 = vadd.f32 %v3652, %v3760
        %v3793 = vadd.f32 %v3653, %v3761
        %v3794 = vadd.f32 %v3654, %v3762
        %v3795 = vadd.f32 %v3655, %v3763
        %v3796 = vadd.f32 %v3656, %v3764
        %v3797 = vadd.f32 %v3657, %v3765
        %v3798 = vadd.f32 %v3658, %v3766
        %v3799 = vadd.f32 %v3659, %v3767
        %v3800 = vadd.f32 %v3660, %v3768
        %v3801 = vadd.f32 %v3661, %v3769
        %v3802 = vadd.f32 %v3662, %v3770
        %v3803 = vadd.f32 %v3663, %v3771
        %v3804 = vadd.f32 %v3664, %v3772
        %v3805 = vadd.f32 %v3665, %v3773
        %v3806 = vadd.f32 %v3666, %v3774
        %v3807 = vadd.f32 %v3667, %v3775
        %v3808 = vadd.f32 %v3668, %v3776
        %v3809 = vadd.f32 %v3669, %v3777
        %v3810 = vadd.f32 %v3670, %v3778
        %v3811 = vadd.f32 %v3671, %v3779
        %v3812 = vadd.f32 %v3672, %v3780
        %v3813 = vadd.f32 %v3673, %v3781
        %v3814 = vrot.slane %v463, 4
        %v3815 = vrot.slane %v464, 4
        %v3818 = vunpack.c.l.bf16 %v3814
        %v3819 = vunpack.c.l.bf16 %v3815
        %v3820 = vlaneseq
        %v3821 = vshrl.u32 %v3820, 7
        %v3822 = vsub.s32 0, %v3821
        %v3823 = vrot.slane %v1606, %v3822
        %v3824 = vmul.f32 %v2366, %v3823
        %v3825 = vmul.f32 %v2367, %v3823
        %v3826 = vmul.f32 %v2368, %v3823
        %v3827 = vmul.f32 %v2369, %v3823
        %v3828 = vmul.f32 %v2370, %v3823
        %v3829 = vmul.f32 %v2371, %v3823
        %v3830 = vmul.f32 %v2372, %v3823
        %v3831 = vmul.f32 %v2373, %v3823
        %v3832 = vmul.f32 %v2374, %v3823
        %v3833 = vmul.f32 %v2375, %v3823
        %v3834 = vmul.f32 %v2376, %v3823
        %v3835 = vmul.f32 %v2377, %v3823
        %v3836 = vmul.f32 %v2378, %v3823
        %v3837 = vmul.f32 %v2379, %v3823
        %v3838 = vmul.f32 %v2380, %v3823
        %v3839 = vmul.f32 %v2381, %v3823
        %v3840 = vmul.f32 %v2382, %v3823
        %v3841 = vmul.f32 %v2383, %v3823
        %v3842 = vmul.f32 %v2384, %v3823
        %v3843 = vmul.f32 %v2385, %v3823
        %v3844 = vmul.f32 %v2386, %v3823
        %v3845 = vmul.f32 %v2387, %v3823
        %v3846 = vmul.f32 %v2388, %v3823
        %v3847 = vmul.f32 %v2389, %v3823
        %v3848 = vmul.f32 %v2390, %v3823
        %v3849 = vmul.f32 %v2391, %v3823
        %v3850 = vmul.f32 %v2392, %v3823
        %v3851 = vmul.f32 %v2393, %v3823
        %v3852 = vmul.f32 %v2394, %v3823
        %v3853 = vmul.f32 %v2395, %v3823
        %v3854 = vmul.f32 %v3818, %v3823
        %v3855 = vmul.f32 %v3819, %v3823
        %v3856 = vadd.f32 %v3712, %v3824
        %v3857 = vadd.f32 %v3713, %v3825
        %v3858 = vadd.f32 %v3714, %v3826
        %v3859 = vadd.f32 %v3715, %v3827
        %v3860 = vadd.f32 %v3716, %v3828
        %v3861 = vadd.f32 %v3717, %v3829
        %v3862 = vadd.f32 %v3718, %v3830
        %v3863 = vadd.f32 %v3719, %v3831
        %v3864 = vadd.f32 %v3720, %v3832
        %v3865 = vadd.f32 %v3721, %v3833
        %v3866 = vadd.f32 %v3722, %v3834
        %v3867 = vadd.f32 %v3723, %v3835
        %v3868 = vadd.f32 %v3724, %v3836
        %v3869 = vadd.f32 %v3725, %v3837
        %v3870 = vadd.f32 %v3726, %v3838
        %v3871 = vadd.f32 %v3727, %v3839
        %v3872 = vadd.f32 %v3728, %v3840
        %v3873 = vadd.f32 %v3729, %v3841
        %v3874 = vadd.f32 %v3730, %v3842
        %v3875 = vadd.f32 %v3731, %v3843
        %v3876 = vadd.f32 %v3732, %v3844
        %v3877 = vadd.f32 %v3733, %v3845
        %v3878 = vadd.f32 %v3734, %v3846
        %v3879 = vadd.f32 %v3735, %v3847
        %v3880 = vadd.f32 %v3736, %v3848
        %v3881 = vadd.f32 %v3737, %v3849
        %v3882 = vadd.f32 %v3738, %v3850
        %v3883 = vadd.f32 %v3739, %v3851
        %v3884 = vadd.f32 %v3740, %v3852
        %v3885 = vadd.f32 %v3741, %v3853
        %v3886 = vadd.f32 %v3742, %v3854
        %v3887 = vadd.f32 %v3743, %v3855
        %v3888 = vunpack.c.l.bf16 %v1541
        %v3889 = vunpack.c.h.bf16 %v1541
        %v3890 = vlaneseq
        %v3891 = vshrl.u32 %v3890, 7
        %v3892 = vsub.s32 0, %v3891
        %v3893 = vrot.slane %v1608, %v3892
        %v3894 = vmul.f32 %v2466, %v3893
        %v3895 = vmul.f32 %v2467, %v3893
        %v3896 = vmul.f32 %v2468, %v3893
        %v3897 = vmul.f32 %v2469, %v3893
        %v3898 = vmul.f32 %v2470, %v3893
        %v3899 = vmul.f32 %v2471, %v3893
        %v3900 = vmul.f32 %v2472, %v3893
        %v3901 = vmul.f32 %v2473, %v3893
        %v3902 = vmul.f32 %v2474, %v3893
        %v3903 = vmul.f32 %v2475, %v3893
        %v3904 = vmul.f32 %v2476, %v3893
        %v3905 = vmul.f32 %v2477, %v3893
        %v3906 = vmul.f32 %v2478, %v3893
        %v3907 = vmul.f32 %v2479, %v3893
        %v3908 = vmul.f32 %v2480, %v3893
        %v3909 = vmul.f32 %v2481, %v3893
        %v3910 = vmul.f32 %v2482, %v3893
        %v3911 = vmul.f32 %v2483, %v3893
        %v3912 = vmul.f32 %v2484, %v3893
        %v3913 = vmul.f32 %v2485, %v3893
        %v3914 = vmul.f32 %v2486, %v3893
        %v3915 = vmul.f32 %v2487, %v3893
        %v3916 = vmul.f32 %v2488, %v3893
        %v3917 = vmul.f32 %v2489, %v3893
        %v3918 = vmul.f32 %v2490, %v3893
        %v3919 = vmul.f32 %v2491, %v3893
        %v3920 = vmul.f32 %v2492, %v3893
        %v3921 = vmul.f32 %v2493, %v3893
        %v3922 = vmul.f32 %v2494, %v3893
        %v3923 = vmul.f32 %v2495, %v3893
        %v3924 = vmul.f32 %v3888, %v3893
        %v3925 = vmul.f32 %v3889, %v3893
        %v3926 = vadd.f32 %v3782, %v3894
        %v3927 = vadd.f32 %v3783, %v3895
        %v3928 = vadd.f32 %v3784, %v3896
        %v3929 = vadd.f32 %v3785, %v3897
        %v3930 = vadd.f32 %v3786, %v3898
        %v3931 = vadd.f32 %v3787, %v3899
        %v3932 = vadd.f32 %v3788, %v3900
        %v3933 = vadd.f32 %v3789, %v3901
        %v3934 = vadd.f32 %v3790, %v3902
        %v3935 = vadd.f32 %v3791, %v3903
        %v3936 = vadd.f32 %v3792, %v3904
        %v3937 = vadd.f32 %v3793, %v3905
        %v3938 = vadd.f32 %v3794, %v3906
        %v3939 = vadd.f32 %v3795, %v3907
        %v3940 = vadd.f32 %v3796, %v3908
        %v3941 = vadd.f32 %v3797, %v3909
        %v3942 = vadd.f32 %v3798, %v3910
        %v3943 = vadd.f32 %v3799, %v3911
        %v3944 = vadd.f32 %v3800, %v3912
        %v3945 = vadd.f32 %v3801, %v3913
        %v3946 = vadd.f32 %v3802, %v3914
        %v3947 = vadd.f32 %v3803, %v3915
        %v3948 = vadd.f32 %v3804, %v3916
        %v3949 = vadd.f32 %v3805, %v3917
        %v3950 = vadd.f32 %v3806, %v3918
        %v3951 = vadd.f32 %v3807, %v3919
        %v3952 = vadd.f32 %v3808, %v3920
        %v3953 = vadd.f32 %v3809, %v3921
        %v3954 = vadd.f32 %v3810, %v3922
        %v3955 = vadd.f32 %v3811, %v3923
        %v3956 = vadd.f32 %v3812, %v3924
        %v3957 = vadd.f32 %v3813, %v3925
        %v3958 = vpack.c.bf16 %v3857, %v3856
        %v3959 = vpack.c.bf16 %v3859, %v3858
        %v3960 = vpack.c.bf16 %v3861, %v3860
        %v3961 = vpack.c.bf16 %v3863, %v3862
        %v3962 = vpack.c.bf16 %v3865, %v3864
        %v3963 = vpack.c.bf16 %v3867, %v3866
        %v3964 = vpack.c.bf16 %v3869, %v3868
        %v3965 = vpack.c.bf16 %v3871, %v3870
        %v3966 = vpack.c.bf16 %v3873, %v3872
        %v3967 = vpack.c.bf16 %v3875, %v3874
        %v3968 = vpack.c.bf16 %v3877, %v3876
        %v3969 = vpack.c.bf16 %v3879, %v3878
        %v3970 = vpack.c.bf16 %v3881, %v3880
        %v3971 = vpack.c.bf16 %v3883, %v3882
        %v3972 = vpack.c.bf16 %v3885, %v3884
        %v3973 = vpack.c.bf16 %v3887, %v3886
        %v3974 = vpack.c.bf16 %v3927, %v3926
        %v3975 = vpack.c.bf16 %v3929, %v3928
        %v3976 = vpack.c.bf16 %v3931, %v3930
        %v3977 = vpack.c.bf16 %v3933, %v3932
        %v3978 = vpack.c.bf16 %v3935, %v3934
        %v3979 = vpack.c.bf16 %v3937, %v3936
        %v3980 = vpack.c.bf16 %v3939, %v3938
        %v3981 = vpack.c.bf16 %v3941, %v3940
        %v3982 = vpack.c.bf16 %v3943, %v3942
        %v3983 = vpack.c.bf16 %v3945, %v3944
        %v3984 = vpack.c.bf16 %v3947, %v3946
        %v3985 = vpack.c.bf16 %v3949, %v3948
        %v3986 = vpack.c.bf16 %v3951, %v3950
        %v3987 = vpack.c.bf16 %v3953, %v3952
        %v3988 = vpack.c.bf16 %v3955, %v3954
        %v3989 = vpack.c.bf16 %v3957, %v3956
        %v3990 = vld [vmem:[%s6] sm:$0xff]
        %v3991 = vld [vmem:[%s6 + $0x8] sm:$0xff]
        %v3992 = vld [vmem:[%s6 + $0x10] sm:$0xff]
        %v3993 = vld [vmem:[%s6 + $0x18] sm:$0xff]
        %v3994 = vld [vmem:[%s6 + $0x20] sm:$0xff]
        %v3995 = vld [vmem:[%s6 + $0x28] sm:$0xff]
        %v3996 = vld [vmem:[%s6 + $0x30] sm:$0xff]
        %v3997 = vld [vmem:[%s6 + $0x38] sm:$0xff]
        %v3998 = vld [vmem:[%s6 + $0x40] sm:$0xff]
        %v3999 = vld [vmem:[%s6 + $0x48] sm:$0xff]
        %v4000 = vld [vmem:[%s6 + $0x50] sm:$0xff]
        %v4001 = vld [vmem:[%s6 + $0x58] sm:$0xff]
        %v4002 = vld [vmem:[%s6 + $0x60] sm:$0xff]
        %v4003 = vld [vmem:[%s6 + $0x68] sm:$0xff]
        %v4004 = vld [vmem:[%s6 + $0x70] sm:$0xff]
        %v4005 = vld [vmem:[%s6 + $0x78] sm:$0xff]
        %v4006 = vld [vmem:[%s6 + $0x80] sm:$0xff]
        %v4007 = vld [vmem:[%s6 + $0x88] sm:$0xff]
        %v4008 = vld [vmem:[%s6 + $0x90] sm:$0xff]
        %v4009 = vld [vmem:[%s6 + $0x98] sm:$0xff]
        %v4010 = vld [vmem:[%s6 + $0xa0] sm:$0xff]
        %v4011 = vld [vmem:[%s6 + $0xa8] sm:$0xff]
        %v4012 = vld [vmem:[%s6 + $0xb0] sm:$0xff]
        %v4013 = vld [vmem:[%s6 + $0xb8] sm:$0xff]
        %v4014 = vld [vmem:[%s6 + $0xc0] sm:$0xff]
        %v4015 = vld [vmem:[%s6 + $0xc8] sm:$0xff]
        %v4016 = vld [vmem:[%s6 + $0xd0] sm:$0xff]
        %v4017 = vld [vmem:[%s6 + $0xd8] sm:$0xff]
        %v4018 = vld [vmem:[%s6 + $0xe0] sm:$0xff]
        %v4019 = vld [vmem:[%s6 + $0xe8] sm:$0xff]
        %v4020 = vld [vmem:[%s6 + $0xf0] sm:$0xff]
        %v4021 = vld [vmem:[%s6 + $0xf8] sm:$0xff]
        %v4022 = vld [vmem:[%s7] sm:$0x3]
        %v4024 = vlaneseq
        %v4025 = vshrl.u32 %v4024, 7
        %v4026 = vsub.s32 0, %v4025
        %v4027 = vrot.slane %v4022, %v4026
        %v4028 = vlaneseq
        %v4029 = vshrl.u32 %v4028, 7
        %v4030 = vsub.s32 1, %v4029
        %v4031 = vrot.slane %v4022, %v4030
        %v4066 = vunpack.c.l.b16 %v3990
        %v4067 = vunpack.c.h.b16 %v3990
        %v4068 = vunpack.c.l.b16 %v3991
        %v4069 = vunpack.c.h.b16 %v3991
        %v4070 = vunpack.c.l.b16 %v3992
        %v4071 = vunpack.c.h.b16 %v3992
        %v4072 = vunpack.c.l.b16 %v3993
        %v4073 = vunpack.c.h.b16 %v3993
        %v4074 = vunpack.c.l.b16 %v3994
        %v4075 = vunpack.c.h.b16 %v3994
        %v4076 = vunpack.c.l.b16 %v3995
        %v4077 = vunpack.c.h.b16 %v3995
        %v4078 = vunpack.c.l.b16 %v3996
        %v4079 = vunpack.c.h.b16 %v3996
        %v4080 = vunpack.c.l.b16 %v3997
        %v4081 = vunpack.c.h.b16 %v3997
        %v4082 = vunpack.c.l.b16 %v3998
        %v4083 = vunpack.c.h.b16 %v3998
        %v4084 = vunpack.c.l.b16 %v3999
        %v4085 = vunpack.c.h.b16 %v3999
        %v4086 = vunpack.c.l.b16 %v4000
        %v4087 = vunpack.c.h.b16 %v4000
        %v4088 = vunpack.c.l.b16 %v4001
        %v4089 = vunpack.c.h.b16 %v4001
        %v4090 = vunpack.c.l.b16 %v4002
        %v4091 = vunpack.c.h.b16 %v4002
        %v4092 = vunpack.c.l.b16 %v4003
        %v4093 = vunpack.c.h.b16 %v4003
        %v4094 = vunpack.c.l.b16 %v4004
        %v4095 = vunpack.c.h.b16 %v4004
        %v4096 = vunpack.c.l.b16 %v4005
        %v4097 = vunpack.c.h.b16 %v4005
        %v4098 = vunpack.c.l.b16 %v4006
        %v4099 = vunpack.c.h.b16 %v4006
        %v4100 = vunpack.c.l.b16 %v4007
        %v4101 = vunpack.c.h.b16 %v4007
        %v4102 = vunpack.c.l.b16 %v4008
        %v4103 = vunpack.c.h.b16 %v4008
        %v4104 = vunpack.c.l.b16 %v4009
        %v4105 = vunpack.c.h.b16 %v4009
        %v4106 = vunpack.c.l.b16 %v4010
        %v4107 = vunpack.c.h.b16 %v4010
        %v4108 = vunpack.c.l.b16 %v4011
        %v4109 = vunpack.c.h.b16 %v4011
        %v4110 = vunpack.c.l.b16 %v4012
        %v4111 = vunpack.c.h.b16 %v4012
        %v4112 = vunpack.c.l.b16 %v4013
        %v4113 = vunpack.c.h.b16 %v4013
        %v4114 = vunpack.c.l.b16 %v4014
        %v4115 = vunpack.c.h.b16 %v4014
        %v4116 = vunpack.c.l.b16 %v4015
        %v4117 = vunpack.c.h.b16 %v4015
        %v4118 = vunpack.c.l.b16 %v4016
        %v4119 = vunpack.c.h.b16 %v4016
        %v4120 = vunpack.c.l.b16 %v4017
        %v4121 = vunpack.c.h.b16 %v4017
        %v4122 = vunpack.c.l.b16 %v4018
        %v4123 = vunpack.c.h.b16 %v4018
        %v4124 = vunpack.c.l.b16 %v4019
        %v4125 = vunpack.c.h.b16 %v4019
        %v4126 = vunpack.c.l.b16 %v4020
        %v4127 = vunpack.c.h.b16 %v4020
        %v4128 = vunpack.c.l.b16 %v4021
        %v4129 = vunpack.c.h.b16 %v4021
        %v4130 = vpack.c.b16 %v4068, %v4066
        %v4131 = vpack.c.b16 %v4069, %v4067
        %v4132 = vpack.c.b16 %v4072, %v4070
        %v4133 = vpack.c.b16 %v4073, %v4071
        %v4134 = vpack.c.b16 %v4076, %v4074
        %v4135 = vpack.c.b16 %v4077, %v4075
        %v4136 = vpack.c.b16 %v4080, %v4078
        %v4137 = vpack.c.b16 %v4081, %v4079
        %v4138 = vpack.c.b16 %v4084, %v4082
        %v4139 = vpack.c.b16 %v4085, %v4083
        %v4140 = vpack.c.b16 %v4088, %v4086
        %v4141 = vpack.c.b16 %v4089, %v4087
        %v4142 = vpack.c.b16 %v4092, %v4090
        %v4143 = vpack.c.b16 %v4093, %v4091
        %v4144 = vpack.c.b16 %v4096, %v4094
        %v4145 = vpack.c.b16 %v4097, %v4095
        %v4146 = vpack.c.b16 %v4100, %v4098
        %v4147 = vpack.c.b16 %v4101, %v4099
        %v4148 = vpack.c.b16 %v4104, %v4102
        %v4149 = vpack.c.b16 %v4105, %v4103
        %v4150 = vpack.c.b16 %v4108, %v4106
        %v4151 = vpack.c.b16 %v4109, %v4107
        %v4152 = vpack.c.b16 %v4112, %v4110
        %v4153 = vpack.c.b16 %v4113, %v4111
        %v4154 = vpack.c.b16 %v4116, %v4114
        %v4155 = vpack.c.b16 %v4117, %v4115
        %v4156 = vpack.c.b16 %v4120, %v4118
        %v4157 = vpack.c.b16 %v4121, %v4119
        %v4158 = vpack.c.b16 %v4124, %v4122
        %v4159 = vpack.c.b16 %v4125, %v4123
        %v4160 = vpack.c.b16 %v4128, %v4126
        %v4161 = vpack.c.b16 %v4129, %v4127
        %4194 = vmatprep.subr.bf16.mxu0 %v4131
        %4195 = vmatpush1.bf16.msra.mxu0 %v4130
        %4196 = vmatprep.subr.bf16.mxu0 %v4133
        %4197 = vmatpush1.bf16.msra.mxu0 %v4132
        %4198 = vmatprep.subr.bf16.mxu0 %v4135
        %4199 = vmatpush1.bf16.msra.mxu0 %v4134
        %4200 = vmatprep.subr.bf16.mxu0 %v4137
        %4201 = vmatpush1.bf16.msra.mxu0 %v4136
        %4202 = vmatprep.subr.bf16.mxu0 %v4139
        %4203 = vmatpush1.bf16.msra.mxu0 %v4138
        %4204 = vmatprep.subr.bf16.mxu0 %v4141
        %4205 = vmatpush1.bf16.msra.mxu0 %v4140
        %4206 = vmatprep.subr.bf16.mxu0 %v4143
        %4207 = vmatpush1.bf16.msra.mxu0 %v4142
        %4208 = vmatprep.subr.bf16.mxu0 %v4145
        %4209 = vmatpush1.bf16.msra.mxu0 %v4144
        %4210 = vmatprep.subr.bf16.mxu0 %v4147
        %4211 = vmatpush1.bf16.msra.mxu0 %v4146
        %4212 = vmatprep.subr.bf16.mxu0 %v4149
        %4213 = vmatpush1.bf16.msra.mxu0 %v4148
        %4214 = vmatprep.subr.bf16.mxu0 %v4151
        %4215 = vmatpush1.bf16.msra.mxu0 %v4150
        %4216 = vmatprep.subr.bf16.mxu0 %v4153
        %4217 = vmatpush1.bf16.msra.mxu0 %v4152
        %4218 = vmatprep.subr.bf16.mxu0 %v4155
        %4219 = vmatpush1.bf16.msra.mxu0 %v4154
        %4220 = vmatprep.subr.bf16.mxu0 %v4157
        %4221 = vmatpush1.bf16.msra.mxu0 %v4156
        %4222 = vmatprep.subr.bf16.mxu0 %v4159
        %4223 = vmatpush1.bf16.msra.mxu0 %v4158
        %4224 = vmatprep.subr.bf16.mxu0 %v4161
        %4225 = vmatpush1.bf16.msra.mxu0 %v4160
        %4226 = vmatprep.mubr.bf16.mxu0 %v3974
        %4227 = vmatmul.mubr.bf16.gmra.mrb[0].mxu0 %v3958
        %v4228 = vpop.f32.mrb[0].mxu0
        %v4229 = vadd.f32 %v4027, %v4228
        %v4230 = vpop.f32.mrb[0].mxu0
        %v4231 = vadd.f32 %v4031, %v4230
        %v4232 = vpop.f32.mrb[0].mxu0
        %v4233 = vadd.f32 %v4027, %v4232
        %v4234 = vpop.f32.mrb[0].mxu0
        %v4235 = vadd.f32 %v4031, %v4234
        %4236 = vmatprep.mubr.bf16.mxu0 %v3975
        %4237 = vmatmul.mubr.bf16.gmra.mrb[0].mxu0 %v3959
        %v4238 = vpop.f32.mrb[0].mxu0
        %v4239 = vadd.f32 %v4027, %v4238
        %v4240 = vpop.f32.mrb[0].mxu0
        %v4241 = vadd.f32 %v4031, %v4240
        %v4242 = vpop.f32.mrb[0].mxu0
        %v4243 = vadd.f32 %v4027, %v4242
        %v4244 = vpop.f32.mrb[0].mxu0
        %v4245 = vadd.f32 %v4031, %v4244
        %4246 = vmatprep.mubr.bf16.mxu0 %v3976
        %4247 = vmatmul.mubr.bf16.gmra.mrb[0].mxu0 %v3960
        %v4248 = vpop.f32.mrb[0].mxu0
        %v4249 = vadd.f32 %v4027, %v4248
        %v4250 = vpop.f32.mrb[0].mxu0
        %v4251 = vadd.f32 %v4031, %v4250
        %v4252 = vpop.f32.mrb[0].mxu0
        %v4253 = vadd.f32 %v4027, %v4252
        %v4254 = vpop.f32.mrb[0].mxu0
        %v4255 = vadd.f32 %v4031, %v4254
        %4256 = vmatprep.mubr.bf16.mxu0 %v3977
        %4257 = vmatmul.mubr.bf16.gmra.mrb[0].mxu0 %v3961
        %v4258 = vpop.f32.mrb[0].mxu0
        %v4259 = vadd.f32 %v4027, %v4258
        %v4260 = vpop.f32.mrb[0].mxu0
        %v4261 = vadd.f32 %v4031, %v4260
        %v4262 = vpop.f32.mrb[0].mxu0
        %v4263 = vadd.f32 %v4027, %v4262
        %v4264 = vpop.f32.mrb[0].mxu0
        %v4265 = vadd.f32 %v4031, %v4264
        %4266 = vmatprep.mubr.bf16.mxu0 %v3978
        %4267 = vmatmul.mubr.bf16.gmra.mrb[0].mxu0 %v3962
        %v4268 = vpop.f32.mrb[0].mxu0
        %v4269 = vadd.f32 %v4027, %v4268
        %v4270 = vpop.f32.mrb[0].mxu0
        %v4271 = vadd.f32 %v4031, %v4270
        %v4272 = vpop.f32.mrb[0].mxu0
        %v4273 = vadd.f32 %v4027, %v4272
        %v4274 = vpop.f32.mrb[0].mxu0
        %v4275 = vadd.f32 %v4031, %v4274
        %4276 = vmatprep.mubr.bf16.mxu0 %v3979
        %4277 = vmatmul.mubr.bf16.gmra.mrb[0].mxu0 %v3963
        %v4278 = vpop.f32.mrb[0].mxu0
        %v4279 = vadd.f32 %v4027, %v4278
        %v4280 = vpop.f32.mrb[0].mxu0
        %v4281 = vadd.f32 %v4031, %v4280
        %v4282 = vpop.f32.mrb[0].mxu0
        %v4283 = vadd.f32 %v4027, %v4282
        %v4284 = vpop.f32.mrb[0].mxu0
        %v4285 = vadd.f32 %v4031, %v4284
        %4286 = vmatprep.mubr.bf16.mxu0 %v3980
        %4287 = vmatmul.mubr.bf16.gmra.mrb[0].mxu0 %v3964
        %v4288 = vpop.f32.mrb[0].mxu0
        %v4289 = vadd.f32 %v4027, %v4288
        %v4290 = vpop.f32.mrb[0].mxu0
        %v4291 = vadd.f32 %v4031, %v4290
        %v4292 = vpop.f32.mrb[0].mxu0
        %v4293 = vadd.f32 %v4027, %v4292
        %v4294 = vpop.f32.mrb[0].mxu0
        %v4295 = vadd.f32 %v4031, %v4294
        %4296 = vmatprep.mubr.bf16.mxu0 %v3981
        %4297 = vmatmul.mubr.bf16.gmra.mrb[0].mxu0 %v3965
        %v4298 = vpop.f32.mrb[0].mxu0
        %v4299 = vadd.f32 %v4027, %v4298
        %v4300 = vpop.f32.mrb[0].mxu0
        %v4301 = vadd.f32 %v4031, %v4300
        %v4302 = vpop.f32.mrb[0].mxu0
        %v4303 = vadd.f32 %v4027, %v4302
        %v4304 = vpop.f32.mrb[0].mxu0
        %v4305 = vadd.f32 %v4031, %v4304
        %4306 = vmatprep.mubr.bf16.mxu0 %v3982
        %4307 = vmatmul.mubr.bf16.gmra.mrb[0].mxu0 %v3966
        %v4308 = vpop.f32.mrb[0].mxu0
        %v4309 = vadd.f32 %v4027, %v4308
        %v4310 = vpop.f32.mrb[0].mxu0
        %v4311 = vadd.f32 %v4031, %v4310
        %v4312 = vpop.f32.mrb[0].mxu0
        %v4313 = vadd.f32 %v4027, %v4312
        %v4314 = vpop.f32.mrb[0].mxu0
        %v4315 = vadd.f32 %v4031, %v4314
        %4316 = vmatprep.mubr.bf16.mxu0 %v3983
        %4317 = vmatmul.mubr.bf16.gmra.mrb[0].mxu0 %v3967
        %v4318 = vpop.f32.mrb[0].mxu0
        %v4319 = vadd.f32 %v4027, %v4318
        %v4320 = vpop.f32.mrb[0].mxu0
        %v4321 = vadd.f32 %v4031, %v4320
        %v4322 = vpop.f32.mrb[0].mxu0
        %v4323 = vadd.f32 %v4027, %v4322
        %v4324 = vpop.f32.mrb[0].mxu0
        %v4325 = vadd.f32 %v4031, %v4324
        %4326 = vmatprep.mubr.bf16.mxu0 %v3984
        %4327 = vmatmul.mubr.bf16.gmra.mrb[0].mxu0 %v3968
        %v4328 = vpop.f32.mrb[0].mxu0
        %v4329 = vadd.f32 %v4027, %v4328
        %v4330 = vpop.f32.mrb[0].mxu0
        %v4331 = vadd.f32 %v4031, %v4330
        %v4332 = vpop.f32.mrb[0].mxu0
        %v4333 = vadd.f32 %v4027, %v4332
        %v4334 = vpop.f32.mrb[0].mxu0
        %v4335 = vadd.f32 %v4031, %v4334
        %4336 = vmatprep.mubr.bf16.mxu0 %v3985
        %4337 = vmatmul.mubr.bf16.gmra.mrb[0].mxu0 %v3969
        %v4338 = vpop.f32.mrb[0].mxu0
        %v4339 = vadd.f32 %v4027, %v4338
        %v4340 = vpop.f32.mrb[0].mxu0
        %v4341 = vadd.f32 %v4031, %v4340
        %v4342 = vpop.f32.mrb[0].mxu0
        %v4343 = vadd.f32 %v4027, %v4342
        %v4344 = vpop.f32.mrb[0].mxu0
        %v4345 = vadd.f32 %v4031, %v4344
        %4346 = vmatprep.mubr.bf16.mxu0 %v3986
        %4347 = vmatmul.mubr.bf16.gmra.mrb[0].mxu0 %v3970
        %v4348 = vpop.f32.mrb[0].mxu0
        %v4349 = vadd.f32 %v4027, %v4348
        %v4350 = vpop.f32.mrb[0].mxu0
        %v4351 = vadd.f32 %v4031, %v4350
        %v4352 = vpop.f32.mrb[0].mxu0
        %v4353 = vadd.f32 %v4027, %v4352
        %v4354 = vpop.f32.mrb[0].mxu0
        %v4355 = vadd.f32 %v4031, %v4354
        %4356 = vmatprep.mubr.bf16.mxu0 %v3987
        %4357 = vmatmul.mubr.bf16.gmra.mrb[0].mxu0 %v3971
        %v4358 = vpop.f32.mrb[0].mxu0
        %v4359 = vadd.f32 %v4027, %v4358
        %v4360 = vpop.f32.mrb[0].mxu0
        %v4361 = vadd.f32 %v4031, %v4360
        %v4362 = vpop.f32.mrb[0].mxu0
        %v4363 = vadd.f32 %v4027, %v4362
        %v4364 = vpop.f32.mrb[0].mxu0
        %v4365 = vadd.f32 %v4031, %v4364
        %4366 = vmatprep.mubr.bf16.mxu0 %v3988
        %4367 = vmatmul.mubr.bf16.gmra.mrb[0].mxu0 %v3972
        %v4368 = vpop.f32.mrb[0].mxu0
        %v4369 = vadd.f32 %v4027, %v4368
        %v4370 = vpop.f32.mrb[0].mxu0
        %v4371 = vadd.f32 %v4031, %v4370
        %v4372 = vpop.f32.mrb[0].mxu0
        %v4373 = vadd.f32 %v4027, %v4372
        %v4374 = vpop.f32.mrb[0].mxu0
        %v4375 = vadd.f32 %v4031, %v4374
        %4376 = vmatprep.mubr.bf16.mxu0 %v3989
        %4377 = vmatmul.mubr.bf16.gmra.mrb[0].mxu0 %v3973
        %v4378 = vpop.f32.mrb[0].mxu0
        %v4379 = vadd.f32 %v4027, %v4378
        %v4380 = vpop.f32.mrb[0].mxu0
        %v4381 = vadd.f32 %v4031, %v4380
        %v4382 = vpop.f32.mrb[0].mxu0
        %v4383 = vadd.f32 %v4027, %v4382
        %v4384 = vpop.f32.mrb[0].mxu0
        %v4385 = vadd.f32 %v4031, %v4384
        %4386 = vdwg.mxu0
        %v4387 = vmax.f32 %v4229, 0.0
        %v4388 = vmax.f32 %v4231, 0.0
        %v4389 = vmax.f32 %v4233, 0.0
        %v4390 = vmax.f32 %v4235, 0.0
        %v4391 = vmax.f32 %v4239, 0.0
        %v4392 = vmax.f32 %v4241, 0.0
        %v4393 = vmax.f32 %v4243, 0.0
        %v4394 = vmax.f32 %v4245, 0.0
        %v4395 = vmax.f32 %v4249, 0.0
        %v4396 = vmax.f32 %v4251, 0.0
        %v4397 = vmax.f32 %v4253, 0.0
        %v4398 = vmax.f32 %v4255, 0.0
        %v4399 = vmax.f32 %v4259, 0.0
        %v4400 = vmax.f32 %v4261, 0.0
        %v4401 = vmax.f32 %v4263, 0.0
        %v4402 = vmax.f32 %v4265, 0.0
        %v4403 = vmax.f32 %v4269, 0.0
        %v4404 = vmax.f32 %v4271, 0.0
        %v4405 = vmax.f32 %v4273, 0.0
        %v4406 = vmax.f32 %v4275, 0.0
        %v4407 = vmax.f32 %v4279, 0.0
        %v4408 = vmax.f32 %v4281, 0.0
        %v4409 = vmax.f32 %v4283, 0.0
        %v4410 = vmax.f32 %v4285, 0.0
        %v4411 = vmax.f32 %v4289, 0.0
        %v4412 = vmax.f32 %v4291, 0.0
        %v4413 = vmax.f32 %v4293, 0.0
        %v4414 = vmax.f32 %v4295, 0.0
        %v4415 = vmax.f32 %v4299, 0.0
        %v4416 = vmax.f32 %v4301, 0.0
        %v4417 = vmax.f32 %v4303, 0.0
        %v4418 = vmax.f32 %v4305, 0.0
        %v4419 = vmax.f32 %v4309, 0.0
        %v4420 = vmax.f32 %v4311, 0.0
        %v4421 = vmax.f32 %v4313, 0.0
        %v4422 = vmax.f32 %v4315, 0.0
        %v4423 = vmax.f32 %v4319, 0.0
        %v4424 = vmax.f32 %v4321, 0.0
        %v4425 = vmax.f32 %v4323, 0.0
        %v4426 = vmax.f32 %v4325, 0.0
        %v4427 = vmax.f32 %v4329, 0.0
        %v4428 = vmax.f32 %v4331, 0.0
        %v4429 = vmax.f32 %v4333, 0.0
        %v4430 = vmax.f32 %v4335, 0.0
        %v4431 = vmax.f32 %v4339, 0.0
        %v4432 = vmax.f32 %v4341, 0.0
        %v4433 = vmax.f32 %v4343, 0.0
        %v4434 = vmax.f32 %v4345, 0.0
        %v4435 = vmax.f32 %v4349, 0.0
        %v4436 = vmax.f32 %v4351, 0.0
        %v4437 = vmax.f32 %v4353, 0.0
        %v4438 = vmax.f32 %v4355, 0.0
        %v4439 = vmax.f32 %v4359, 0.0
        %v4440 = vmax.f32 %v4361, 0.0
        %v4441 = vmax.f32 %v4363, 0.0
        %v4442 = vmax.f32 %v4365, 0.0
        %v4443 = vmax.f32 %v4369, 0.0
        %v4444 = vmax.f32 %v4371, 0.0
        %v4445 = vmax.f32 %v4373, 0.0
        %v4446 = vmax.f32 %v4375, 0.0
        %v4447 = vmax.f32 %v4379, 0.0
        %v4448 = vmax.f32 %v4381, 0.0
        %v4449 = vmax.f32 %v4383, 0.0
        %v4450 = vmax.f32 %v4385, 0.0
        %4451 = vst [vmem:[%s370] sm:$0xff] %v4387
        %4452 = vst [vmem:[%s370 + $0x8] sm:$0xff] %v4388
        %4453 = vst [vmem:[%s370 + $0x10] sm:$0xff] %v4389
        %4454 = vst [vmem:[%s370 + $0x18] sm:$0xff] %v4390
        %4455 = vst [vmem:[%s370 + $0x20] sm:$0xff] %v4391
        %4456 = vst [vmem:[%s370 + $0x28] sm:$0xff] %v4392
        %4457 = vst [vmem:[%s370 + $0x30] sm:$0xff] %v4393
        %4458 = vst [vmem:[%s370 + $0x38] sm:$0xff] %v4394
        %4459 = vst [vmem:[%s370 + $0x40] sm:$0xff] %v4395
        %4460 = vst [vmem:[%s370 + $0x48] sm:$0xff] %v4396
        %4461 = vst [vmem:[%s370 + $0x50] sm:$0xff] %v4397
        %4462 = vst [vmem:[%s370 + $0x58] sm:$0xff] %v4398
        %4463 = vst [vmem:[%s370 + $0x60] sm:$0xff] %v4399
        %4464 = vst [vmem:[%s370 + $0x68] sm:$0xff] %v4400
        %4465 = vst [vmem:[%s370 + $0x70] sm:$0xff] %v4401
        %4466 = vst [vmem:[%s370 + $0x78] sm:$0xff] %v4402
        %4467 = vst [vmem:[%s370 + $0x80] sm:$0xff] %v4403
        %4468 = vst [vmem:[%s370 + $0x88] sm:$0xff] %v4404
        %4469 = vst [vmem:[%s370 + $0x90] sm:$0xff] %v4405
        %4470 = vst [vmem:[%s370 + $0x98] sm:$0xff] %v4406
        %4471 = vst [vmem:[%s370 + $0xa0] sm:$0xff] %v4407
        %4472 = vst [vmem:[%s370 + $0xa8] sm:$0xff] %v4408
        %4473 = vst [vmem:[%s370 + $0xb0] sm:$0xff] %v4409
        %4474 = vst [vmem:[%s370 + $0xb8] sm:$0xff] %v4410
        %4475 = vst [vmem:[%s370 + $0xc0] sm:$0xff] %v4411
        %4476 = vst [vmem:[%s370 + $0xc8] sm:$0xff] %v4412
        %4477 = vst [vmem:[%s370 + $0xd0] sm:$0xff] %v4413
        %4478 = vst [vmem:[%s370 + $0xd8] sm:$0xff] %v4414
        %4479 = vst [vmem:[%s370 + $0xe0] sm:$0xff] %v4415
        %4480 = vst [vmem:[%s370 + $0xe8] sm:$0xff] %v4416
        %4481 = vst [vmem:[%s370 + $0xf0] sm:$0xff] %v4417
        %4482 = vst [vmem:[%s370 + $0xf8] sm:$0xff] %v4418
        %4483 = vst [vmem:[%s370 + $0x100] sm:$0xff] %v4419
        %4484 = vst [vmem:[%s370 + $0x108] sm:$0xff] %v4420
        %4485 = vst [vmem:[%s370 + $0x110] sm:$0xff] %v4421
        %4486 = vst [vmem:[%s370 + $0x118] sm:$0xff] %v4422
        %4487 = vst [vmem:[%s370 + $0x120] sm:$0xff] %v4423
        %4488 = vst [vmem:[%s370 + $0x128] sm:$0xff] %v4424
        %4489 = vst [vmem:[%s370 + $0x130] sm:$0xff] %v4425
        %4490 = vst [vmem:[%s370 + $0x138] sm:$0xff] %v4426
        %4491 = vst [vmem:[%s370 + $0x140] sm:$0xff] %v4427
        %4492 = vst [vmem:[%s370 + $0x148] sm:$0xff] %v4428
        %4493 = vst [vmem:[%s370 + $0x150] sm:$0xff] %v4429
        %4494 = vst [vmem:[%s370 + $0x158] sm:$0xff] %v4430
        %4495 = vst [vmem:[%s370 + $0x160] sm:$0xff] %v4431
        %4496 = vst [vmem:[%s370 + $0x168] sm:$0xff] %v4432
        %4497 = vst [vmem:[%s370 + $0x170] sm:$0xff] %v4433
        %4498 = vst [vmem:[%s370 + $0x178] sm:$0xff] %v4434
        %4499 = vst [vmem:[%s370 + $0x180] sm:$0xff] %v4435
        %4500 = vst [vmem:[%s370 + $0x188] sm:$0xff] %v4436
        %4501 = vst [vmem:[%s370 + $0x190] sm:$0xff] %v4437
        %4502 = vst [vmem:[%s370 + $0x198] sm:$0xff] %v4438
        %4503 = vst [vmem:[%s370 + $0x1a0] sm:$0xff] %v4439
        %4504 = vst [vmem:[%s370 + $0x1a8] sm:$0xff] %v4440
        %4505 = vst [vmem:[%s370 + $0x1b0] sm:$0xff] %v4441
        %4506 = vst [vmem:[%s370 + $0x1b8] sm:$0xff] %v4442
        %4507 = vst [vmem:[%s370 + $0x1c0] sm:$0xff] %v4443
        %4508 = vst [vmem:[%s370 + $0x1c8] sm:$0xff] %v4444
        %4509 = vst [vmem:[%s370 + $0x1d0] sm:$0xff] %v4445
        %4510 = vst [vmem:[%s370 + $0x1d8] sm:$0xff] %v4446
        %4511 = vst [vmem:[%s370 + $0x1e0] sm:$0xff] %v4447
        %4512 = vst [vmem:[%s370 + $0x1e8] sm:$0xff] %v4448
        %4513 = vst [vmem:[%s370 + $0x1f0] sm:$0xff] %v4449
        %4514 = vst [vmem:[%s370 + $0x1f8] sm:$0xff] %v4450
        %s4515 = sand.u32 %s234, 1
        %s4516 = scalar_lea.sflag [#allocation3], %s4515
        %s4517 = sand.u32 %s234, 1
        %s4518 = smul.addr %s4517, 512
        %s4519 = scalar_lea.vmem [#allocation2], %s4518
        // Predicated region
        $region53: #{shufflenet_v2_downsample_unit.1} parent=51 // pred_check
          %p4520 = pneg %p244
        $region54: #{shufflenet_v2_downsample_unit.1} parent=51 // pred_check_branch
          %4522 = sbr.rel (%p4520) target = $region56
        $region55: #{shufflenet_v2_downsample_unit.1} parent=51 // pred_region
          %s4523 = smul.u32 16, %s27
          %s4525 = ssub.s32 8192, 8192
          %4526 = vsyncadd %s4516, %s4525
          %s4527 = smul.addr %s4523, 4
          %s4528 = smul.addr %s26, 64
          %s4529 = sadd.s32 %s4527, %s4528
          %s4530 = smul.addr %s4529, 128
          %s4531 = scalar_lea.hbm %s8, %s4530
          %s4532 = sshll.u32 %s4519, 4
          %s4533 = int_to_ptr.vmem [resolvable:$true] %s4532
          %4538 = dma.vmem_to_hbm [thread:$0]  %s4533, 8192, %s4531, %s4516, 256, 256, 16
        $region56: #{shufflenet_v2_downsample_unit.1} parent=51 // pred_fallthru
          _
      $region52: #{shufflenet_v2_downsample_unit.1} parent=5 // pred_fallthru
        _
      %p4539 = scmp.le.s32.totalorder 2, %s17
      // Predicated region
      $region57: #{shufflenet_v2_downsample_unit.1} parent=5 // pred_check
        %p4540 = pneg %p4539
      $region58: #{shufflenet_v2_downsample_unit.1} parent=5 // pred_check_branch
        %4542 = sbr.rel (%p4540) target = $region60
      $region59: #{shufflenet_v2_downsample_unit.1} parent=5 // pred_region
        %s4543 = ssub.s32 %s17, 2
        // Predicated region
        $region61: #{shufflenet_v2_downsample_unit.1} parent=59 // pred_check
          %p4544 = pneg %p250
        $region62: #{shufflenet_v2_downsample_unit.1} parent=59 // pred_check_branch
          %4546 = sbr.rel (%p4544) target = $region64
        $region63: #{shufflenet_v2_downsample_unit.1} parent=59 // pred_region
          %s4547 = sand.u32 %s235, 1
          %s4548 = scalar_lea.sflag [#allocation3], %s4547
          %s4549 = sand.u32 %s235, 1
          %s4550 = smul.addr %s4549, 512
          %s4551 = scalar_lea.vmem [#allocation2], %s4550
          %4552 = dma.done %s4548, 8192
        $region64: #{shufflenet_v2_downsample_unit.1} parent=59 // pred_fallthru
          _
      $region60: #{shufflenet_v2_downsample_unit.1} parent=5 // pred_fallthru
        _
    $region6: #{shufflenet_v2_downsample_unit.1} parent=1 // loop_footer
      %s21 = sadd.s32 1, %s17
    $region7: #{shufflenet_v2_downsample_unit.1} parent=1 // loop_footer_branch
      %16 = sbr.rel target = $region3
    $region8: #{shufflenet_v2_downsample_unit.1} parent=1 // loop_exit
      _
    %4553 = vsyncpa [#allocation3], 1
    %s4554 = scalar_lea.sflag [#allocation3], 1
    %4555 = vsyncpa %s4554, 1

</llo_original>
